<compile_context>
chip_gen: v6e
topology: v6e:2x2x1
jax: 0.10.0
libtpu: 0.0.40
codegen_flags: <defaults>
</compile_context>

<pallas_src>
import jax
import jax.numpy as jnp
from jax.experimental import pallas as pl
from jax.experimental.pallas import tpu as pltpu


# ----------------------------- Pallas kernels --------------------------------

def _softmax_head(h, cd, wo_ref, bo_ref, out_ref):
    # Output head: Linear -> softmax (EXACT normalization).  Padded vocab
    # columns carry a -1e30 bias so exp() underflows to 0 and they do not
    # dilute the distribution.
    # TODO(synk): for production vocab (V ~ 32k) tile Vp over a second
    # "arbitrary" grid axis with an online-softmax accumulator instead of
    # keeping the whole [D, Vp] head resident in VMEM.
    logits = (jnp.dot(h.astype(cd), wo_ref[...],
                      preferred_element_type=jnp.float32) + bo_ref[...])
    m = jnp.max(logits, axis=1, keepdims=True)
    e = jnp.exp(logits - m)
    out_ref[...] = e / jnp.sum(e, axis=1, keepdims=True)


def enquirer_kernel_split(g_ref, x_ref, len_ref,
                          wx3_ref, wh3_ref, bgi3_ref, bhn_ref,
                          wo_ref, bo_ref, out_ref):
    """GRU + softmax head with per-gate [D, D] weight stacks (D < 128 path)."""
    B, K, D = g_ref.shape
    T = x_ref.shape[1]
    cd = wx3_ref.dtype                                    # matmul compute dtype

    # g_to_g_hat: mean over the K speaker embeddings -> h0 (kept in f32).
    g_hat = jnp.mean(g_ref[...], axis=1)                  # [B, D]
    lengths = len_ref[...]                                # [B, 1] int32

    # Hoisted input projection: one batched matmul per gate, outside the
    # recurrence.  (r, z) biases from bx and bh are pre-folded into bgi3; the
    # n gate keeps bh_n separate (it sits inside r * (h @ Wh_n + bh_n)).
    x2d = x_ref[...].reshape(B * T, D)                    # [B*T, D]
    gi_r = (jnp.dot(x2d, wx3_ref[0], preferred_element_type=jnp.float32)
            + bgi3_ref[0]).reshape(B, T, D)
    gi_z = (jnp.dot(x2d, wx3_ref[1], preferred_element_type=jnp.float32)
            + bgi3_ref[1]).reshape(B, T, D)
    gi_n = (jnp.dot(x2d, wx3_ref[2], preferred_element_type=jnp.float32)
            + bgi3_ref[2]).reshape(B, T, D)

    whr, whz, whn = wh3_ref[0], wh3_ref[1], wh3_ref[2]    # [D, D] each
    bhn = bhn_ref[...]                                    # [1, D] f32

    # GRU recurrence (PyTorch gate order r, z, n), h0 = g_hat.  Fully unrolled
    # (T small & static).  Padded steps (t >= length) keep the previous hidden
    # -> pack_padded_sequence final-hidden semantics.
    # TODO(synk): for large T / tile_b, stage gi_* in VMEM scratch and drive
    # the recurrence with lax.fori_loop to bound live ranges.
    h = g_hat
    for t in range(T):
        hc = h.astype(cd)
        h_r = jnp.dot(hc, whr, preferred_element_type=jnp.float32)
        h_z = jnp.dot(hc, whz, preferred_element_type=jnp.float32)
        h_n = jnp.dot(hc, whn, preferred_element_type=jnp.float32) + bhn
        r = jax.nn.sigmoid(gi_r[:, t, :] + h_r)
        z = jax.nn.sigmoid(gi_z[:, t, :] + h_z)
        n = jnp.tanh(gi_n[:, t, :] + r * h_n)
        h_new = (1.0 - z) * n + z * h
        h = jnp.where(lengths > t, h_new, h)              # static t, int cmp

    _softmax_head(h, cd, wo_ref, bo_ref, out_ref)


def enquirer_kernel_merged(g_ref, x_ref, len_ref,
                           wx_ref, wh_ref, bgi_ref, bhn_ref,
                           wo_ref, bo_ref, out_ref):
    """GRU + softmax head with fused [D, 3D] gate weights (requires D % 128
    == 0 so the r/z/n slices stay 128-lane aligned)."""
    B, K, D = g_ref.shape
    T = x_ref.shape[1]
    cd = wx_ref.dtype

    g_hat = jnp.mean(g_ref[...], axis=1)                  # [B, D] f32
    lengths = len_ref[...]                                # [B, 1] int32

    # One hoisted [B*T, D] x [D, 3D] projection for all three gates.
    x2d = x_ref[...].reshape(B * T, D)
    gi = (jnp.dot(x2d, wx_ref[...], preferred_element_type=jnp.float32)
          + bgi_ref[...]).reshape(B, T, 3 * D)

    wh = wh_ref[...]                                      # [D, 3D]
    bhn = bhn_ref[...]                                    # [1, D]

    # Single dot per serial step (3x fewer MXU issue sequences than per-gate).
    # TODO(synk): micro-opt — hold Wh in the MXU staging registers across the
    # T serial steps via pltpu.matmul_push_rhs / matmul_acc_lhs / matmul_pop.
    h = g_hat
    for t in range(T):
        gh = jnp.dot(h.astype(cd), wh, preferred_element_type=jnp.float32)
        gi_t = gi[:, t, :]
        r = jax.nn.sigmoid(gi_t[:, :D] + gh[:, :D])
        z = jax.nn.sigmoid(gi_t[:, D:2 * D] + gh[:, D:2 * D])
        n = jnp.tanh(gi_t[:, 2 * D:] + r * (gh[:, 2 * D:] + bhn))
        h_new = (1.0 - z) * n + z * h
        h = jnp.where(lengths > t, h_new, h)

    _softmax_head(h, cd, wo_ref, bo_ref, out_ref)


# ------------------------------ glue / wrapper -------------------------------

def pack_states(g, x, lengths):
    """states = [flat g | flat x | length] per row (mimics the torch packing)."""
    B = g.shape[0]
    return jnp.concatenate(
        [g.reshape(B, -1), x.reshape(B, -1),
         lengths.astype(jnp.float32).reshape(B, 1)], axis=1)


def unpack_states(states, K, T, D):
    gsz, xsz = K * D, T * D
    g = states[:, :gsz].reshape(-1, K, D)
    x = states[:, gsz:gsz + xsz].reshape(-1, T, D)
    lengths = states[:, gsz + xsz:]          # [B, 1] float32
    return g, x, lengths


def make_params(key, D, V):
    ks = jax.random.split(key, 6)
    s = 0.1
    return dict(
        wx=jax.random.normal(ks[0], (D, 3 * D), jnp.float32) * s,
        wh=jax.random.normal(ks[1], (D, 3 * D), jnp.float32) * s,
        bx=jax.random.normal(ks[2], (1, 3 * D), jnp.float32) * s,
        bh=jax.random.normal(ks[3], (1, 3 * D), jnp.float32) * s,
        wo=jax.random.normal(ks[4], (D, V), jnp.float32) * s,
        bo=jax.random.normal(ks[5], (1, V), jnp.float32) * s,
    )


def _round_up(n, m):
    return ((n + m - 1) // m) * m


def _pick_vmem_limit():
    """Generation-aware scoped-VMEM cap: ~3/4 of physical, <= 100 MiB."""
    try:
        cap = int(pltpu.get_tpu_info().vmem_capacity_bytes)
    except Exception:
        return 48 * 1024 * 1024     # safe on v5e/v6e (128 MiB) and v7x (64 MiB/TC)
    return min(100 * 1024 * 1024, cap * 3 // 4)


def actor_forward(states, params, *, K, T, D, V,
                  tile_b=None, compute_dtype=jnp.float32):
    g, x, lengths = unpack_states(states, K, T, D)
    B = g.shape[0]
    lengths_i = lengths.astype(jnp.int32)                        # [B, 1]

    # Batch tile: feed the MXU with up to 256 rows per block (128 is a better
    # default on v5e); never pad a small batch beyond a multiple of 8.
    if tile_b is None:
        tile_b = min(256, max(8, _round_up(B, 8)))
    # TODO(synk): on v7x (2 TensorCores) halve tile_b when it yields a single
    # grid block so the "parallel" batch axis splits across both cores.
    n_blocks = pl.cdiv(B, tile_b)
    B_pad = n_blocks * tile_b

    cd = compute_dtype
    x = x.astype(cd)                        # bf16 halves x DMA; matmuls acc in f32

    # Pad the batch; pad rows have length 0 (their hidden stays at h0 and they
    # are sliced off at the end).
    if B_pad != B:
        pad = B_pad - B
        g = jnp.concatenate([g, jnp.zeros((pad, K, D), g.dtype)], axis=0)
        x = jnp.concatenate([x, jnp.zeros((pad, T, D), x.dtype)], axis=0)
        lengths_i = jnp.concatenate(
            [lengths_i, jnp.zeros((pad, 1), jnp.int32)], axis=0)

    wx, wh, bx, bh = params["wx"], params["wh"], params["bx"], params["bh"]

    # Lane-dense output head: pad vocab to a multiple of 128; padded columns
    # get a -1e30 bias so they vanish under softmax.
    Vp = _round_up(V, 128)
    wo = jnp.zeros((D, Vp), jnp.float32).at[:, :V].set(params["wo"]).astype(cd)
    bo = jnp.full((1, Vp), -1e30, jnp.float32).at[:, :V].set(params["bo"])

    const2 = lambda i: (0, 0)
    const3 = lambda i: (0, 0, 0)
    # TODO(synk): on v7x, add pipeline_mode=pl.Buffered(1) to these constant-
    # index weight specs to halve their resident VMEM footprint.

    if D % 128 == 0:
        # Fused [D, 3D] gate weights (gate order r, z, n); fold the (r, z)
        # biases (bx + bh always sum) into the hoisted input projection.
        kernel = enquirer_kernel_merged
        bgi = jnp.concatenate([bx[:, :2 * D] + bh[:, :2 * D], bx[:, 2 * D:]],
                              axis=1)                            # [1, 3D] f32
        w_in = (wx.astype(cd), wh.astype(cd), bgi, bh[:, 2 * D:])
        w_specs = [
            pl.BlockSpec((D, 3 * D), const2),                    # wx (resident)
            pl.BlockSpec((D, 3 * D), const2),                    # wh (resident)
            pl.BlockSpec((1, 3 * D), const2),                    # bgi
            pl.BlockSpec((1, D), const2),                        # bhn
        ]
    else:
        # Per-gate [3, D, D] stacks keep each gate lane-dense when D < 128.
        kernel = enquirer_kernel_split
        wx3 = jnp.stack([wx[:, :D], wx[:, D:2 * D], wx[:, 2 * D:]], 0).astype(cd)
        wh3 = jnp.stack([wh[:, :D], wh[:, D:2 * D], wh[:, 2 * D:]], 0).astype(cd)
        bgi3 = jnp.stack([bx[:, :D] + bh[:, :D],
                          bx[:, D:2 * D] + bh[:, D:2 * D],
                          bx[:, 2 * D:]], 0)                     # [3, 1, D] f32
        w_in = (wx3, wh3, bgi3, bh[:, 2 * D:])
        w_specs = [
            pl.BlockSpec((3, D, D), const3),                     # wx3 (resident)
            pl.BlockSpec((3, D, D), const3),                     # wh3 (resident)
            pl.BlockSpec((3, 1, D), const3),                     # bgi3
            pl.BlockSpec((1, D), const2),                        # bhn
        ]

    probs_pad = pl.pallas_call(
        kernel,
        out_shape=jax.ShapeDtypeStruct((B_pad, Vp), jnp.float32),
        grid=(n_blocks,),
        in_specs=[
            pl.BlockSpec((tile_b, K, D), lambda i: (i, 0, 0)),   # g (f32)
            pl.BlockSpec((tile_b, T, D), lambda i: (i, 0, 0)),   # x (batch-major)
            pl.BlockSpec((tile_b, 1), lambda i: (i, 0)),         # lengths (int32)
            *w_specs,
            pl.BlockSpec((D, Vp), const2),                       # wo (padded)
            pl.BlockSpec((1, Vp), const2),                       # bo (padded)
        ],
        out_specs=pl.BlockSpec((tile_b, Vp), lambda i: (i, 0)),
        compiler_params=pltpu.CompilerParams(
            dimension_semantics=("parallel",),
            vmem_limit_bytes=_pick_vmem_limit()),
    )(g, x, lengths_i, *w_in, wo, bo)

    # Padded batch rows (length 0) and padded vocab columns are sliced off
    # immediately; never reduce over probs_pad upstream of this slice.
    return probs_pad[:B, :V]


# ---------------------------- pure-JAX reference ------------------------------

def actor_forward_ref(states, params, *, K, T, D, V):
    g, x, lengths = unpack_states(states, K, T, D)
    g_hat = jnp.mean(g, axis=1)
    h = g_hat
    for t in range(T):
        x_t = x[:, t, :]
        gi = x_t @ params["wx"] + params["bx"]
        gh = h @ params["wh"] + params["bh"]
        r = jax.nn.sigmoid(gi[:, :D] + gh[:, :D])
        z = jax.nn.sigmoid(gi[:, D:2 * D] + gh[:, D:2 * D])
        n = jnp.tanh(gi[:, 2 * D:] + r * gh[:, 2 * D:])
        h_new = (1.0 - z) * n + z * h
        h = jnp.where(lengths > float(t), h_new, h)
    logits = h @ params["wo"] + params["bo"]
    m = jnp.max(logits, axis=1, keepdims=True)
    e = jnp.exp(logits - m)
    return e / jnp.sum(e, axis=1, keepdims=True)


# ----------------------------------- main -------------------------------------

if __name__ == "__main__":
    key = jax.random.PRNGKey(0)
    k_g, k_x, k_p, k_g2, k_x2, k_p2 = jax.random.split(key, 6)

    # ---- Config 1: toy shapes (D < 128 -> split-gate path), f32 compute ----
    B, K, T, D, V = 2, 4, 8, 32, 64   # batch, speakers, seq, emb/hidden, vocab
    g = jax.random.normal(k_g, (B, K, D), jnp.float32)
    x = jax.random.normal(k_x, (B, T, D), jnp.float32)
    lengths = jnp.array([5, 8], dtype=jnp.int32)
    states = pack_states(g, x, lengths)                   # [B, K*D + T*D + 1]
    params = make_params(k_p, D, V)

    probs = actor_forward(states, params, K=K, T=T, D=D, V=V,
                          compute_dtype=jnp.float32)
    probs = jax.block_until_ready(probs)
    ref = actor_forward_ref(states, params, K=K, T=T, D=D, V=V)
    assert probs.shape == (B, V)
    assert jnp.allclose(jnp.sum(probs, axis=1), 1.0, atol=1e-4)   # exact softmax
    assert jnp.allclose(probs, ref, rtol=1e-3, atol=1e-4)

    # ---- Config 2: MXU-aligned D (merged-gate path), bf16 matmul operands ----
    B2, K2, T2, D2, V2 = 4, 4, 6, 128, 200
    g2 = jax.random.normal(k_g2, (B2, K2, D2), jnp.float32)
    x2 = jax.random.normal(k_x2, (B2, T2, D2), jnp.float32)
    lengths2 = jnp.array([3, 6, 1, 5], dtype=jnp.int32)
    states2 = pack_states(g2, x2, lengths2)
    params2 = make_params(k_p2, D2, V2)

    probs2 = actor_forward(states2, params2, K=K2, T=T2, D=D2, V=V2,
                           compute_dtype=jnp.bfloat16)
    probs2 = jax.block_until_ready(probs2)
    ref2 = actor_forward_ref(states2, params2, K=K2, T=T2, D=D2, V=V2)
    assert probs2.shape == (B2, V2)
    assert jnp.allclose(jnp.sum(probs2, axis=1), 1.0, atol=1e-4)  # f32 normalize
    # bf16 matmul operands vs f32 reference: absolute tolerance on probabilities
    assert jnp.allclose(probs2, ref2, rtol=0.0, atol=1e-2)

    # TODO(synk): Actor.act / get_probs_entropy (multinomial sampling, argmax
    # with past-action masking, gather, entropy) are host-side policy utilities
    # and are not part of forward().
    print("KERNEL_OK")
</pallas_src>

<mosaic_0001>
module attributes {stable_mosaic.version = 11 : i64} {
  func.func @enquirer_kernel_split(%arg0: i32, %arg1: memref<8x4x32xf32, #tpu.memory_space<vmem>>, %arg2: memref<8x8x32xf32, #tpu.memory_space<vmem>>, %arg3: memref<8x1xi32, #tpu.memory_space<vmem>>, %arg4: memref<3x32x32xf32, #tpu.memory_space<vmem>>, %arg5: memref<3x32x32xf32, #tpu.memory_space<vmem>>, %arg6: memref<3x1x32xf32, #tpu.memory_space<vmem>>, %arg7: memref<1x32xf32, #tpu.memory_space<vmem>>, %arg8: memref<32x128xf32, #tpu.memory_space<vmem>>, %arg9: memref<1x128xf32, #tpu.memory_space<vmem>>, %arg10: memref<8x128xf32, #tpu.memory_space<vmem>>) attributes {dimension_semantics = [#tpu.dimension_semantics<parallel>], iteration_bounds = array<i64: 1>, scalar_prefetch = 0 : i64, scratch_operands = 0 : i64, tpu.core_type = #tpu.core_type<tc>, window_params = [{transform_indices = @transform_0, window_bounds = array<i64: 8, 4, 32>}, {transform_indices = @transform_1, window_bounds = array<i64: 8, 8, 32>}, {transform_indices = @transform_2, window_bounds = array<i64: 8, 1>}, {pipeline_mode = #tpu.pipeline_mode<synchronous>, transform_indices = @transform_3, window_bounds = array<i64: 3, 32, 32>}, {pipeline_mode = #tpu.pipeline_mode<synchronous>, transform_indices = @transform_4, window_bounds = array<i64: 3, 32, 32>}, {pipeline_mode = #tpu.pipeline_mode<synchronous>, transform_indices = @transform_5, window_bounds = array<i64: 3, 1, 32>}, {pipeline_mode = #tpu.pipeline_mode<synchronous>, transform_indices = @transform_6, window_bounds = array<i64: 1, 32>}, {pipeline_mode = #tpu.pipeline_mode<synchronous>, transform_indices = @transform_7, window_bounds = array<i64: 32, 128>}, {pipeline_mode = #tpu.pipeline_mode<synchronous>, transform_indices = @transform_8, window_bounds = array<i64: 1, 128>}, {transform_indices = @transform_9, window_bounds = array<i64: 8, 128>}]} {
    %c0 = arith.constant 0 : index
    %c0_0 = arith.constant 0 : index
    %c0_1 = arith.constant 0 : index
    %0 = vector.load %arg1[%c0, %c0_0, %c0_1] : memref<8x4x32xf32, #tpu.memory_space<vmem>>, vector<8x4x32xf32>
    %cst = arith.constant dense<0.000000e+00> : vector<8x32xf32>
    %1 = vector.multi_reduction <add>, %0, %cst [1] : vector<8x4x32xf32> to vector<8x32xf32>
    %cst_2 = arith.constant 4.000000e+00 : f32
    %2 = vector.broadcast %cst_2 : f32 to vector<8x32xf32>
    %3 = arith.divf %1, %2 : vector<8x32xf32>
    %c0_3 = arith.constant 0 : index
    %c0_4 = arith.constant 0 : index
    %4 = vector.load %arg3[%c0_3, %c0_4] : memref<8x1xi32, #tpu.memory_space<vmem>>, vector<8x1xi32>
    %c0_5 = arith.constant 0 : index
    %c0_6 = arith.constant 0 : index
    %c0_7 = arith.constant 0 : index
    %5 = vector.load %arg2[%c0_5, %c0_6, %c0_7] : memref<8x8x32xf32, #tpu.memory_space<vmem>>, vector<8x8x32xf32>
    %6 = vector.shape_cast %5 : vector<8x8x32xf32> to vector<64x32xf32>
    %c0_8 = arith.constant 0 : index
    %c0_9 = arith.constant 0 : index
    %c0_10 = arith.constant 0 : index
    %7 = vector.load %arg4[%c0_8, %c0_9, %c0_10] : memref<3x32x32xf32, #tpu.memory_space<vmem>>, vector<1x32x32xf32>
    %8 = vector.shape_cast %7 : vector<1x32x32xf32> to vector<32x32xf32>
    %cst_11 = arith.constant dense<0.000000e+00> : vector<64x32xf32>
    %9 = tpu.matmul %6, %8, %cst_11 {dimension_numbers = #tpu.dot_dimension_numbers<[1], [0], [0], [1], [0, 0, 1, 1], [], []>} : vector<64x32xf32>, vector<32x32xf32>, vector<64x32xf32> -> vector<64x32xf32>
    %c0_12 = arith.constant 0 : index
    %c0_13 = arith.constant 0 : index
    %c0_14 = arith.constant 0 : index
    %10 = vector.load %arg6[%c0_12, %c0_13, %c0_14] : memref<3x1x32xf32, #tpu.memory_space<vmem>>, vector<1x1x32xf32>
    %11 = vector.shape_cast %10 : vector<1x1x32xf32> to vector<1x32xf32>
    %12 = vector.broadcast %11 : vector<1x32xf32> to vector<64x32xf32>
    %13 = arith.addf %9, %12 : vector<64x32xf32>
    %14 = vector.shape_cast %13 : vector<64x32xf32> to vector<8x8x32xf32>
    %c1 = arith.constant 1 : index
    %c0_15 = arith.constant 0 : index
    %c0_16 = arith.constant 0 : index
    %15 = vector.load %arg4[%c1, %c0_15, %c0_16] : memref<3x32x32xf32, #tpu.memory_space<vmem>>, vector<1x32x32xf32>
    %16 = vector.shape_cast %15 : vector<1x32x32xf32> to vector<32x32xf32>
    %cst_17 = arith.constant dense<0.000000e+00> : vector<64x32xf32>
    %17 = tpu.matmul %6, %16, %cst_17 {dimension_numbers = #tpu.dot_dimension_numbers<[1], [0], [0], [1], [0, 0, 1, 1], [], []>} : vector<64x32xf32>, vector<32x32xf32>, vector<64x32xf32> -> vector<64x32xf32>
    %c1_18 = arith.constant 1 : index
    %c0_19 = arith.constant 0 : index
    %c0_20 = arith.constant 0 : index
    %18 = vector.load %arg6[%c1_18, %c0_19, %c0_20] : memref<3x1x32xf32, #tpu.memory_space<vmem>>, vector<1x1x32xf32>
    %19 = vector.shape_cast %18 : vector<1x1x32xf32> to vector<1x32xf32>
    %20 = vector.broadcast %19 : vector<1x32xf32> to vector<64x32xf32>
    %21 = arith.addf %17, %20 : vector<64x32xf32>
    %22 = vector.shape_cast %21 : vector<64x32xf32> to vector<8x8x32xf32>
    %c2 = arith.constant 2 : index
    %c0_21 = arith.constant 0 : index
    %c0_22 = arith.constant 0 : index
    %23 = vector.load %arg4[%c2, %c0_21, %c0_22] : memref<3x32x32xf32, #tpu.memory_space<vmem>>, vector<1x32x32xf32>
    %24 = vector.shape_cast %23 : vector<1x32x32xf32> to vector<32x32xf32>
    %cst_23 = arith.constant dense<0.000000e+00> : vector<64x32xf32>
    %25 = tpu.matmul %6, %24, %cst_23 {dimension_numbers = #tpu.dot_dimension_numbers<[1], [0], [0], [1], [0, 0, 1, 1], [], []>} : vector<64x32xf32>, vector<32x32xf32>, vector<64x32xf32> -> vector<64x32xf32>
    %c2_24 = arith.constant 2 : index
    %c0_25 = arith.constant 0 : index
    %c0_26 = arith.constant 0 : index
    %26 = vector.load %arg6[%c2_24, %c0_25, %c0_26] : memref<3x1x32xf32, #tpu.memory_space<vmem>>, vector<1x1x32xf32>
    %27 = vector.shape_cast %26 : vector<1x1x32xf32> to vector<1x32xf32>
    %28 = vector.broadcast %27 : vector<1x32xf32> to vector<64x32xf32>
    %29 = arith.addf %25, %28 : vector<64x32xf32>
    %30 = vector.shape_cast %29 : vector<64x32xf32> to vector<8x8x32xf32>
    %c0_27 = arith.constant 0 : index
    %c0_28 = arith.constant 0 : index
    %c0_29 = arith.constant 0 : index
    %31 = vector.load %arg5[%c0_27, %c0_28, %c0_29] : memref<3x32x32xf32, #tpu.memory_space<vmem>>, vector<1x32x32xf32>
    %32 = vector.shape_cast %31 : vector<1x32x32xf32> to vector<32x32xf32>
    %c1_30 = arith.constant 1 : index
    %c0_31 = arith.constant 0 : index
    %c0_32 = arith.constant 0 : index
    %33 = vector.load %arg5[%c1_30, %c0_31, %c0_32] : memref<3x32x32xf32, #tpu.memory_space<vmem>>, vector<1x32x32xf32>
    %34 = vector.shape_cast %33 : vector<1x32x32xf32> to vector<32x32xf32>
    %c2_33 = arith.constant 2 : index
    %c0_34 = arith.constant 0 : index
    %c0_35 = arith.constant 0 : index
    %35 = vector.load %arg5[%c2_33, %c0_34, %c0_35] : memref<3x32x32xf32, #tpu.memory_space<vmem>>, vector<1x32x32xf32>
    %36 = vector.shape_cast %35 : vector<1x32x32xf32> to vector<32x32xf32>
    %c0_36 = arith.constant 0 : index
    %c0_37 = arith.constant 0 : index
    %37 = vector.load %arg7[%c0_36, %c0_37] : memref<1x32xf32, #tpu.memory_space<vmem>>, vector<1x32xf32>
    %cst_38 = arith.constant dense<0.000000e+00> : vector<8x32xf32>
    %38 = tpu.matmul %3, %32, %cst_38 {dimension_numbers = #tpu.dot_dimension_numbers<[1], [0], [0], [1], [0, 0, 1, 1], [], []>} : vector<8x32xf32>, vector<32x32xf32>, vector<8x32xf32> -> vector<8x32xf32>
    %cst_39 = arith.constant dense<0.000000e+00> : vector<8x32xf32>
    %39 = tpu.matmul %3, %34, %cst_39 {dimension_numbers = #tpu.dot_dimension_numbers<[1], [0], [0], [1], [0, 0, 1, 1], [], []>} : vector<8x32xf32>, vector<32x32xf32>, vector<8x32xf32> -> vector<8x32xf32>
    %cst_40 = arith.constant dense<0.000000e+00> : vector<8x32xf32>
    %40 = tpu.matmul %3, %36, %cst_40 {dimension_numbers = #tpu.dot_dimension_numbers<[1], [0], [0], [1], [0, 0, 1, 1], [], []>} : vector<8x32xf32>, vector<32x32xf32>, vector<8x32xf32> -> vector<8x32xf32>
    %41 = vector.broadcast %37 : vector<1x32xf32> to vector<8x32xf32>
    %42 = arith.addf %40, %41 : vector<8x32xf32>
    %43 = vector.extract_strided_slice %14 {offsets = [0, 0, 0], sizes = [8, 1, 32], strides = [1, 1, 1]} : vector<8x8x32xf32> to vector<8x1x32xf32>
    %44 = vector.shape_cast %43 : vector<8x1x32xf32> to vector<8x32xf32>
    %45 = arith.addf %44, %38 : vector<8x32xf32>
    %46 = arith.negf %45 : vector<8x32xf32>
    %47 = math.exp %46 : vector<8x32xf32>
    %cst_41 = arith.constant 1.000000e+00 : f32
    %48 = vector.broadcast %cst_41 : f32 to vector<8x32xf32>
    %49 = arith.addf %48, %47 : vector<8x32xf32>
    %50 = arith.divf %48, %49 : vector<8x32xf32>
    %51 = vector.extract_strided_slice %22 {offsets = [0, 0, 0], sizes = [8, 1, 32], strides = [1, 1, 1]} : vector<8x8x32xf32> to vector<8x1x32xf32>
    %52 = vector.shape_cast %51 : vector<8x1x32xf32> to vector<8x32xf32>
    %53 = arith.addf %52, %39 : vector<8x32xf32>
    %54 = arith.negf %53 : vector<8x32xf32>
    %55 = math.exp %54 : vector<8x32xf32>
    %cst_42 = arith.constant 1.000000e+00 : f32
    %56 = vector.broadcast %cst_42 : f32 to vector<8x32xf32>
    %57 = arith.addf %56, %55 : vector<8x32xf32>
    %58 = arith.divf %56, %57 : vector<8x32xf32>
    %59 = vector.extract_strided_slice %30 {offsets = [0, 0, 0], sizes = [8, 1, 32], strides = [1, 1, 1]} : vector<8x8x32xf32> to vector<8x1x32xf32>
    %60 = vector.shape_cast %59 : vector<8x1x32xf32> to vector<8x32xf32>
    %61 = arith.mulf %50, %42 : vector<8x32xf32>
    %62 = arith.addf %60, %61 : vector<8x32xf32>
    %63 = math.tanh %62 : vector<8x32xf32>
    %cst_43 = arith.constant 1.000000e+00 : f32
    %64 = vector.broadcast %cst_43 : f32 to vector<8x32xf32>
    %65 = arith.subf %64, %58 : vector<8x32xf32>
    %66 = arith.mulf %65, %63 : vector<8x32xf32>
    %67 = arith.mulf %58, %3 : vector<8x32xf32>
    %68 = arith.addf %66, %67 : vector<8x32xf32>
    %c0_i32 = arith.constant 0 : i32
    %69 = vector.broadcast %c0_i32 : i32 to vector<8x1xi32>
    %70 = arith.cmpi sgt, %4, %69 : vector<8x1xi32>
    %71 = vector.shape_cast %70 : vector<8x1xi1> to vector<8x1xi1>
    %72 = vector.broadcast %71 : vector<8x1xi1> to vector<8x32xi1>
    %73 = arith.select %72, %68, %3 : vector<8x32xi1>, vector<8x32xf32>
    %cst_44 = arith.constant dense<0.000000e+00> : vector<8x32xf32>
    %74 = tpu.matmul %73, %32, %cst_44 {dimension_numbers = #tpu.dot_dimension_numbers<[1], [0], [0], [1], [0, 0, 1, 1], [], []>} : vector<8x32xf32>, vector<32x32xf32>, vector<8x32xf32> -> vector<8x32xf32>
    %cst_45 = arith.constant dense<0.000000e+00> : vector<8x32xf32>
    %75 = tpu.matmul %73, %34, %cst_45 {dimension_numbers = #tpu.dot_dimension_numbers<[1], [0], [0], [1], [0, 0, 1, 1], [], []>} : vector<8x32xf32>, vector<32x32xf32>, vector<8x32xf32> -> vector<8x32xf32>
    %cst_46 = arith.constant dense<0.000000e+00> : vector<8x32xf32>
    %76 = tpu.matmul %73, %36, %cst_46 {dimension_numbers = #tpu.dot_dimension_numbers<[1], [0], [0], [1], [0, 0, 1, 1], [], []>} : vector<8x32xf32>, vector<32x32xf32>, vector<8x32xf32> -> vector<8x32xf32>
    %77 = vector.broadcast %37 : vector<1x32xf32> to vector<8x32xf32>
    %78 = arith.addf %76, %77 : vector<8x32xf32>
    %79 = vector.extract_strided_slice %14 {offsets = [0, 1, 0], sizes = [8, 1, 32], strides = [1, 1, 1]} : vector<8x8x32xf32> to vector<8x1x32xf32>
    %80 = vector.shape_cast %79 : vector<8x1x32xf32> to vector<8x32xf32>
    %81 = arith.addf %80, %74 : vector<8x32xf32>
    %82 = arith.negf %81 : vector<8x32xf32>
    %83 = math.exp %82 : vector<8x32xf32>
    %cst_47 = arith.constant 1.000000e+00 : f32
    %84 = vector.broadcast %cst_47 : f32 to vector<8x32xf32>
    %85 = arith.addf %84, %83 : vector<8x32xf32>
    %86 = arith.divf %84, %85 : vector<8x32xf32>
    %87 = vector.extract_strided_slice %22 {offsets = [0, 1, 0], sizes = [8, 1, 32], strides = [1, 1, 1]} : vector<8x8x32xf32> to vector<8x1x32xf32>
    %88 = vector.shape_cast %87 : vector<8x1x32xf32> to vector<8x32xf32>
    %89 = arith.addf %88, %75 : vector<8x32xf32>
    %90 = arith.negf %89 : vector<8x32xf32>
    %91 = math.exp %90 : vector<8x32xf32>
    %cst_48 = arith.constant 1.000000e+00 : f32
    %92 = vector.broadcast %cst_48 : f32 to vector<8x32xf32>
    %93 = arith.addf %92, %91 : vector<8x32xf32>
    %94 = arith.divf %92, %93 : vector<8x32xf32>
    %95 = vector.extract_strided_slice %30 {offsets = [0, 1, 0], sizes = [8, 1, 32], strides = [1, 1, 1]} : vector<8x8x32xf32> to vector<8x1x32xf32>
    %96 = vector.shape_cast %95 : vector<8x1x32xf32> to vector<8x32xf32>
    %97 = arith.mulf %86, %78 : vector<8x32xf32>
    %98 = arith.addf %96, %97 : vector<8x32xf32>
    %99 = math.tanh %98 : vector<8x32xf32>
    %cst_49 = arith.constant 1.000000e+00 : f32
    %100 = vector.broadcast %cst_49 : f32 to vector<8x32xf32>
    %101 = arith.subf %100, %94 : vector<8x32xf32>
    %102 = arith.mulf %101, %99 : vector<8x32xf32>
    %103 = arith.mulf %94, %73 : vector<8x32xf32>
    %104 = arith.addf %102, %103 : vector<8x32xf32>
    %c1_i32 = arith.constant 1 : i32
    %105 = vector.broadcast %c1_i32 : i32 to vector<8x1xi32>
    %106 = arith.cmpi sgt, %4, %105 : vector<8x1xi32>
    %107 = vector.shape_cast %106 : vector<8x1xi1> to vector<8x1xi1>
    %108 = vector.broadcast %107 : vector<8x1xi1> to vector<8x32xi1>
    %109 = arith.select %108, %104, %73 : vector<8x32xi1>, vector<8x32xf32>
    %cst_50 = arith.constant dense<0.000000e+00> : vector<8x32xf32>
    %110 = tpu.matmul %109, %32, %cst_50 {dimension_numbers = #tpu.dot_dimension_numbers<[1], [0], [0], [1], [0, 0, 1, 1], [], []>} : vector<8x32xf32>, vector<32x32xf32>, vector<8x32xf32> -> vector<8x32xf32>
    %cst_51 = arith.constant dense<0.000000e+00> : vector<8x32xf32>
    %111 = tpu.matmul %109, %34, %cst_51 {dimension_numbers = #tpu.dot_dimension_numbers<[1], [0], [0], [1], [0, 0, 1, 1], [], []>} : vector<8x32xf32>, vector<32x32xf32>, vector<8x32xf32> -> vector<8x32xf32>
    %cst_52 = arith.constant dense<0.000000e+00> : vector<8x32xf32>
    %112 = tpu.matmul %109, %36, %cst_52 {dimension_numbers = #tpu.dot_dimension_numbers<[1], [0], [0], [1], [0, 0, 1, 1], [], []>} : vector<8x32xf32>, vector<32x32xf32>, vector<8x32xf32> -> vector<8x32xf32>
    %113 = vector.broadcast %37 : vector<1x32xf32> to vector<8x32xf32>
    %114 = arith.addf %112, %113 : vector<8x32xf32>
    %115 = vector.extract_strided_slice %14 {offsets = [0, 2, 0], sizes = [8, 1, 32], strides = [1, 1, 1]} : vector<8x8x32xf32> to vector<8x1x32xf32>
    %116 = vector.shape_cast %115 : vector<8x1x32xf32> to vector<8x32xf32>
    %117 = arith.addf %116, %110 : vector<8x32xf32>
    %118 = arith.negf %117 : vector<8x32xf32>
    %119 = math.exp %118 : vector<8x32xf32>
    %cst_53 = arith.constant 1.000000e+00 : f32
    %120 = vector.broadcast %cst_53 : f32 to vector<8x32xf32>
    %121 = arith.addf %120, %119 : vector<8x32xf32>
    %122 = arith.divf %120, %121 : vector<8x32xf32>
    %123 = vector.extract_strided_slice %22 {offsets = [0, 2, 0], sizes = [8, 1, 32], strides = [1, 1, 1]} : vector<8x8x32xf32> to vector<8x1x32xf32>
    %124 = vector.shape_cast %123 : vector<8x1x32xf32> to vector<8x32xf32>
    %125 = arith.addf %124, %111 : vector<8x32xf32>
    %126 = arith.negf %125 : vector<8x32xf32>
    %127 = math.exp %126 : vector<8x32xf32>
    %cst_54 = arith.constant 1.000000e+00 : f32
    %128 = vector.broadcast %cst_54 : f32 to vector<8x32xf32>
    %129 = arith.addf %128, %127 : vector<8x32xf32>
    %130 = arith.divf %128, %129 : vector<8x32xf32>
    %131 = vector.extract_strided_slice %30 {offsets = [0, 2, 0], sizes = [8, 1, 32], strides = [1, 1, 1]} : vector<8x8x32xf32> to vector<8x1x32xf32>
    %132 = vector.shape_cast %131 : vector<8x1x32xf32> to vector<8x32xf32>
    %133 = arith.mulf %122, %114 : vector<8x32xf32>
    %134 = arith.addf %132, %133 : vector<8x32xf32>
    %135 = math.tanh %134 : vector<8x32xf32>
    %cst_55 = arith.constant 1.000000e+00 : f32
    %136 = vector.broadcast %cst_55 : f32 to vector<8x32xf32>
    %137 = arith.subf %136, %130 : vector<8x32xf32>
    %138 = arith.mulf %137, %135 : vector<8x32xf32>
    %139 = arith.mulf %130, %109 : vector<8x32xf32>
    %140 = arith.addf %138, %139 : vector<8x32xf32>
    %c2_i32 = arith.constant 2 : i32
    %141 = vector.broadcast %c2_i32 : i32 to vector<8x1xi32>
    %142 = arith.cmpi sgt, %4, %141 : vector<8x1xi32>
    %143 = vector.shape_cast %142 : vector<8x1xi1> to vector<8x1xi1>
    %144 = vector.broadcast %143 : vector<8x1xi1> to vector<8x32xi1>
    %145 = arith.select %144, %140, %109 : vector<8x32xi1>, vector<8x32xf32>
    %cst_56 = arith.constant dense<0.000000e+00> : vector<8x32xf32>
    %146 = tpu.matmul %145, %32, %cst_56 {dimension_numbers = #tpu.dot_dimension_numbers<[1], [0], [0], [1], [0, 0, 1, 1], [], []>} : vector<8x32xf32>, vector<32x32xf32>, vector<8x32xf32> -> vector<8x32xf32>
    %cst_57 = arith.constant dense<0.000000e+00> : vector<8x32xf32>
    %147 = tpu.matmul %145, %34, %cst_57 {dimension_numbers = #tpu.dot_dimension_numbers<[1], [0], [0], [1], [0, 0, 1, 1], [], []>} : vector<8x32xf32>, vector<32x32xf32>, vector<8x32xf32> -> vector<8x32xf32>
    %cst_58 = arith.constant dense<0.000000e+00> : vector<8x32xf32>
    %148 = tpu.matmul %145, %36, %cst_58 {dimension_numbers = #tpu.dot_dimension_numbers<[1], [0], [0], [1], [0, 0, 1, 1], [], []>} : vector<8x32xf32>, vector<32x32xf32>, vector<8x32xf32> -> vector<8x32xf32>
    %149 = vector.broadcast %37 : vector<1x32xf32> to vector<8x32xf32>
    %150 = arith.addf %148, %149 : vector<8x32xf32>
    %151 = vector.extract_strided_slice %14 {offsets = [0, 3, 0], sizes = [8, 1, 32], strides = [1, 1, 1]} : vector<8x8x32xf32> to vector<8x1x32xf32>
    %152 = vector.shape_cast %151 : vector<8x1x32xf32> to vector<8x32xf32>
    %153 = arith.addf %152, %146 : vector<8x32xf32>
    %154 = arith.negf %153 : vector<8x32xf32>
    %155 = math.exp %154 : vector<8x32xf32>
    %cst_59 = arith.constant 1.000000e+00 : f32
    %156 = vector.broadcast %cst_59 : f32 to vector<8x32xf32>
    %157 = arith.addf %156, %155 : vector<8x32xf32>
    %158 = arith.divf %156, %157 : vector<8x32xf32>
    %159 = vector.extract_strided_slice %22 {offsets = [0, 3, 0], sizes = [8, 1, 32], strides = [1, 1, 1]} : vector<8x8x32xf32> to vector<8x1x32xf32>
    %160 = vector.shape_cast %159 : vector<8x1x32xf32> to vector<8x32xf32>
    %161 = arith.addf %160, %147 : vector<8x32xf32>
    %162 = arith.negf %161 : vector<8x32xf32>
    %163 = math.exp %162 : vector<8x32xf32>
    %cst_60 = arith.constant 1.000000e+00 : f32
    %164 = vector.broadcast %cst_60 : f32 to vector<8x32xf32>
    %165 = arith.addf %164, %163 : vector<8x32xf32>
    %166 = arith.divf %164, %165 : vector<8x32xf32>
    %167 = vector.extract_strided_slice %30 {offsets = [0, 3, 0], sizes = [8, 1, 32], strides = [1, 1, 1]} : vector<8x8x32xf32> to vector<8x1x32xf32>
    %168 = vector.shape_cast %167 : vector<8x1x32xf32> to vector<8x32xf32>
    %169 = arith.mulf %158, %150 : vector<8x32xf32>
    %170 = arith.addf %168, %169 : vector<8x32xf32>
    %171 = math.tanh %170 : vector<8x32xf32>
    %cst_61 = arith.constant 1.000000e+00 : f32
    %172 = vector.broadcast %cst_61 : f32 to vector<8x32xf32>
    %173 = arith.subf %172, %166 : vector<8x32xf32>
    %174 = arith.mulf %173, %171 : vector<8x32xf32>
    %175 = arith.mulf %166, %145 : vector<8x32xf32>
    %176 = arith.addf %174, %175 : vector<8x32xf32>
    %c3_i32 = arith.constant 3 : i32
    %177 = vector.broadcast %c3_i32 : i32 to vector<8x1xi32>
    %178 = arith.cmpi sgt, %4, %177 : vector<8x1xi32>
    %179 = vector.shape_cast %178 : vector<8x1xi1> to vector<8x1xi1>
    %180 = vector.broadcast %179 : vector<8x1xi1> to vector<8x32xi1>
    %181 = arith.select %180, %176, %145 : vector<8x32xi1>, vector<8x32xf32>
    %cst_62 = arith.constant dense<0.000000e+00> : vector<8x32xf32>
    %182 = tpu.matmul %181, %32, %cst_62 {dimension_numbers = #tpu.dot_dimension_numbers<[1], [0], [0], [1], [0, 0, 1, 1], [], []>} : vector<8x32xf32>, vector<32x32xf32>, vector<8x32xf32> -> vector<8x32xf32>
    %cst_63 = arith.constant dense<0.000000e+00> : vector<8x32xf32>
    %183 = tpu.matmul %181, %34, %cst_63 {dimension_numbers = #tpu.dot_dimension_numbers<[1], [0], [0], [1], [0, 0, 1, 1], [], []>} : vector<8x32xf32>, vector<32x32xf32>, vector<8x32xf32> -> vector<8x32xf32>
    %cst_64 = arith.constant dense<0.000000e+00> : vector<8x32xf32>
    %184 = tpu.matmul %181, %36, %cst_64 {dimension_numbers = #tpu.dot_dimension_numbers<[1], [0], [0], [1], [0, 0, 1, 1], [], []>} : vector<8x32xf32>, vector<32x32xf32>, vector<8x32xf32> -> vector<8x32xf32>
    %185 = vector.broadcast %37 : vector<1x32xf32> to vector<8x32xf32>
    %186 = arith.addf %184, %185 : vector<8x32xf32>
    %187 = vector.extract_strided_slice %14 {offsets = [0, 4, 0], sizes = [8, 1, 32], strides = [1, 1, 1]} : vector<8x8x32xf32> to vector<8x1x32xf32>
    %188 = vector.shape_cast %187 : vector<8x1x32xf32> to vector<8x32xf32>
    %189 = arith.addf %188, %182 : vector<8x32xf32>
    %190 = arith.negf %189 : vector<8x32xf32>
    %191 = math.exp %190 : vector<8x32xf32>
    %cst_65 = arith.constant 1.000000e+00 : f32
    %192 = vector.broadcast %cst_65 : f32 to vector<8x32xf32>
    %193 = arith.addf %192, %191 : vector<8x32xf32>
    %194 = arith.divf %192, %193 : vector<8x32xf32>
    %195 = vector.extract_strided_slice %22 {offsets = [0, 4, 0], sizes = [8, 1, 32], strides = [1, 1, 1]} : vector<8x8x32xf32> to vector<8x1x32xf32>
    %196 = vector.shape_cast %195 : vector<8x1x32xf32> to vector<8x32xf32>
    %197 = arith.addf %196, %183 : vector<8x32xf32>
    %198 = arith.negf %197 : vector<8x32xf32>
    %199 = math.exp %198 : vector<8x32xf32>
    %cst_66 = arith.constant 1.000000e+00 : f32
    %200 = vector.broadcast %cst_66 : f32 to vector<8x32xf32>
    %201 = arith.addf %200, %199 : vector<8x32xf32>
    %202 = arith.divf %200, %201 : vector<8x32xf32>
    %203 = vector.extract_strided_slice %30 {offsets = [0, 4, 0], sizes = [8, 1, 32], strides = [1, 1, 1]} : vector<8x8x32xf32> to vector<8x1x32xf32>
    %204 = vector.shape_cast %203 : vector<8x1x32xf32> to vector<8x32xf32>
    %205 = arith.mulf %194, %186 : vector<8x32xf32>
    %206 = arith.addf %204, %205 : vector<8x32xf32>
    %207 = math.tanh %206 : vector<8x32xf32>
    %cst_67 = arith.constant 1.000000e+00 : f32
    %208 = vector.broadcast %cst_67 : f32 to vector<8x32xf32>
    %209 = arith.subf %208, %202 : vector<8x32xf32>
    %210 = arith.mulf %209, %207 : vector<8x32xf32>
    %211 = arith.mulf %202, %181 : vector<8x32xf32>
    %212 = arith.addf %210, %211 : vector<8x32xf32>
    %c4_i32 = arith.constant 4 : i32
    %213 = vector.broadcast %c4_i32 : i32 to vector<8x1xi32>
    %214 = arith.cmpi sgt, %4, %213 : vector<8x1xi32>
    %215 = vector.shape_cast %214 : vector<8x1xi1> to vector<8x1xi1>
    %216 = vector.broadcast %215 : vector<8x1xi1> to vector<8x32xi1>
    %217 = arith.select %216, %212, %181 : vector<8x32xi1>, vector<8x32xf32>
    %cst_68 = arith.constant dense<0.000000e+00> : vector<8x32xf32>
    %218 = tpu.matmul %217, %32, %cst_68 {dimension_numbers = #tpu.dot_dimension_numbers<[1], [0], [0], [1], [0, 0, 1, 1], [], []>} : vector<8x32xf32>, vector<32x32xf32>, vector<8x32xf32> -> vector<8x32xf32>
    %cst_69 = arith.constant dense<0.000000e+00> : vector<8x32xf32>
    %219 = tpu.matmul %217, %34, %cst_69 {dimension_numbers = #tpu.dot_dimension_numbers<[1], [0], [0], [1], [0, 0, 1, 1], [], []>} : vector<8x32xf32>, vector<32x32xf32>, vector<8x32xf32> -> vector<8x32xf32>
    %cst_70 = arith.constant dense<0.000000e+00> : vector<8x32xf32>
    %220 = tpu.matmul %217, %36, %cst_70 {dimension_numbers = #tpu.dot_dimension_numbers<[1], [0], [0], [1], [0, 0, 1, 1], [], []>} : vector<8x32xf32>, vector<32x32xf32>, vector<8x32xf32> -> vector<8x32xf32>
    %221 = vector.broadcast %37 : vector<1x32xf32> to vector<8x32xf32>
    %222 = arith.addf %220, %221 : vector<8x32xf32>
    %223 = vector.extract_strided_slice %14 {offsets = [0, 5, 0], sizes = [8, 1, 32], strides = [1, 1, 1]} : vector<8x8x32xf32> to vector<8x1x32xf32>
    %224 = vector.shape_cast %223 : vector<8x1x32xf32> to vector<8x32xf32>
    %225 = arith.addf %224, %218 : vector<8x32xf32>
    %226 = arith.negf %225 : vector<8x32xf32>
    %227 = math.exp %226 : vector<8x32xf32>
    %cst_71 = arith.constant 1.000000e+00 : f32
    %228 = vector.broadcast %cst_71 : f32 to vector<8x32xf32>
    %229 = arith.addf %228, %227 : vector<8x32xf32>
    %230 = arith.divf %228, %229 : vector<8x32xf32>
    %231 = vector.extract_strided_slice %22 {offsets = [0, 5, 0], sizes = [8, 1, 32], strides = [1, 1, 1]} : vector<8x8x32xf32> to vector<8x1x32xf32>
    %232 = vector.shape_cast %231 : vector<8x1x32xf32> to vector<8x32xf32>
    %233 = arith.addf %232, %219 : vector<8x32xf32>
    %234 = arith.negf %233 : vector<8x32xf32>
    %235 = math.exp %234 : vector<8x32xf32>
    %cst_72 = arith.constant 1.000000e+00 : f32
    %236 = vector.broadcast %cst_72 : f32 to vector<8x32xf32>
    %237 = arith.addf %236, %235 : vector<8x32xf32>
    %238 = arith.divf %236, %237 : vector<8x32xf32>
    %239 = vector.extract_strided_slice %30 {offsets = [0, 5, 0], sizes = [8, 1, 32], strides = [1, 1, 1]} : vector<8x8x32xf32> to vector<8x1x32xf32>
    %240 = vector.shape_cast %239 : vector<8x1x32xf32> to vector<8x32xf32>
    %241 = arith.mulf %230, %222 : vector<8x32xf32>
    %242 = arith.addf %240, %241 : vector<8x32xf32>
    %243 = math.tanh %242 : vector<8x32xf32>
    %cst_73 = arith.constant 1.000000e+00 : f32
    %244 = vector.broadcast %cst_73 : f32 to vector<8x32xf32>
    %245 = arith.subf %244, %238 : vector<8x32xf32>
    %246 = arith.mulf %245, %243 : vector<8x32xf32>
    %247 = arith.mulf %238, %217 : vector<8x32xf32>
    %248 = arith.addf %246, %247 : vector<8x32xf32>
    %c5_i32 = arith.constant 5 : i32
    %249 = vector.broadcast %c5_i32 : i32 to vector<8x1xi32>
    %250 = arith.cmpi sgt, %4, %249 : vector<8x1xi32>
    %251 = vector.shape_cast %250 : vector<8x1xi1> to vector<8x1xi1>
    %252 = vector.broadcast %251 : vector<8x1xi1> to vector<8x32xi1>
    %253 = arith.select %252, %248, %217 : vector<8x32xi1>, vector<8x32xf32>
    %cst_74 = arith.constant dense<0.000000e+00> : vector<8x32xf32>
    %254 = tpu.matmul %253, %32, %cst_74 {dimension_numbers = #tpu.dot_dimension_numbers<[1], [0], [0], [1], [0, 0, 1, 1], [], []>} : vector<8x32xf32>, vector<32x32xf32>, vector<8x32xf32> -> vector<8x32xf32>
    %cst_75 = arith.constant dense<0.000000e+00> : vector<8x32xf32>
    %255 = tpu.matmul %253, %34, %cst_75 {dimension_numbers = #tpu.dot_dimension_numbers<[1], [0], [0], [1], [0, 0, 1, 1], [], []>} : vector<8x32xf32>, vector<32x32xf32>, vector<8x32xf32> -> vector<8x32xf32>
    %cst_76 = arith.constant dense<0.000000e+00> : vector<8x32xf32>
    %256 = tpu.matmul %253, %36, %cst_76 {dimension_numbers = #tpu.dot_dimension_numbers<[1], [0], [0], [1], [0, 0, 1, 1], [], []>} : vector<8x32xf32>, vector<32x32xf32>, vector<8x32xf32> -> vector<8x32xf32>
    %257 = vector.broadcast %37 : vector<1x32xf32> to vector<8x32xf32>
    %258 = arith.addf %256, %257 : vector<8x32xf32>
    %259 = vector.extract_strided_slice %14 {offsets = [0, 6, 0], sizes = [8, 1, 32], strides = [1, 1, 1]} : vector<8x8x32xf32> to vector<8x1x32xf32>
    %260 = vector.shape_cast %259 : vector<8x1x32xf32> to vector<8x32xf32>
    %261 = arith.addf %260, %254 : vector<8x32xf32>
    %262 = arith.negf %261 : vector<8x32xf32>
    %263 = math.exp %262 : vector<8x32xf32>
    %cst_77 = arith.constant 1.000000e+00 : f32
    %264 = vector.broadcast %cst_77 : f32 to vector<8x32xf32>
    %265 = arith.addf %264, %263 : vector<8x32xf32>
    %266 = arith.divf %264, %265 : vector<8x32xf32>
    %267 = vector.extract_strided_slice %22 {offsets = [0, 6, 0], sizes = [8, 1, 32], strides = [1, 1, 1]} : vector<8x8x32xf32> to vector<8x1x32xf32>
    %268 = vector.shape_cast %267 : vector<8x1x32xf32> to vector<8x32xf32>
    %269 = arith.addf %268, %255 : vector<8x32xf32>
    %270 = arith.negf %269 : vector<8x32xf32>
    %271 = math.exp %270 : vector<8x32xf32>
    %cst_78 = arith.constant 1.000000e+00 : f32
    %272 = vector.broadcast %cst_78 : f32 to vector<8x32xf32>
    %273 = arith.addf %272, %271 : vector<8x32xf32>
    %274 = arith.divf %272, %273 : vector<8x32xf32>
    %275 = vector.extract_strided_slice %30 {offsets = [0, 6, 0], sizes = [8, 1, 32], strides = [1, 1, 1]} : vector<8x8x32xf32> to vector<8x1x32xf32>
    %276 = vector.shape_cast %275 : vector<8x1x32xf32> to vector<8x32xf32>
    %277 = arith.mulf %266, %258 : vector<8x32xf32>
    %278 = arith.addf %276, %277 : vector<8x32xf32>
    %279 = math.tanh %278 : vector<8x32xf32>
    %cst_79 = arith.constant 1.000000e+00 : f32
    %280 = vector.broadcast %cst_79 : f32 to vector<8x32xf32>
    %281 = arith.subf %280, %274 : vector<8x32xf32>
    %282 = arith.mulf %281, %279 : vector<8x32xf32>
    %283 = arith.mulf %274, %253 : vector<8x32xf32>
    %284 = arith.addf %282, %283 : vector<8x32xf32>
    %c6_i32 = arith.constant 6 : i32
    %285 = vector.broadcast %c6_i32 : i32 to vector<8x1xi32>
    %286 = arith.cmpi sgt, %4, %285 : vector<8x1xi32>
    %287 = vector.shape_cast %286 : vector<8x1xi1> to vector<8x1xi1>
    %288 = vector.broadcast %287 : vector<8x1xi1> to vector<8x32xi1>
    %289 = arith.select %288, %284, %253 : vector<8x32xi1>, vector<8x32xf32>
    %cst_80 = arith.constant dense<0.000000e+00> : vector<8x32xf32>
    %290 = tpu.matmul %289, %32, %cst_80 {dimension_numbers = #tpu.dot_dimension_numbers<[1], [0], [0], [1], [0, 0, 1, 1], [], []>} : vector<8x32xf32>, vector<32x32xf32>, vector<8x32xf32> -> vector<8x32xf32>
    %cst_81 = arith.constant dense<0.000000e+00> : vector<8x32xf32>
    %291 = tpu.matmul %289, %34, %cst_81 {dimension_numbers = #tpu.dot_dimension_numbers<[1], [0], [0], [1], [0, 0, 1, 1], [], []>} : vector<8x32xf32>, vector<32x32xf32>, vector<8x32xf32> -> vector<8x32xf32>
    %cst_82 = arith.constant dense<0.000000e+00> : vector<8x32xf32>
    %292 = tpu.matmul %289, %36, %cst_82 {dimension_numbers = #tpu.dot_dimension_numbers<[1], [0], [0], [1], [0, 0, 1, 1], [], []>} : vector<8x32xf32>, vector<32x32xf32>, vector<8x32xf32> -> vector<8x32xf32>
    %293 = vector.broadcast %37 : vector<1x32xf32> to vector<8x32xf32>
    %294 = arith.addf %292, %293 : vector<8x32xf32>
    %295 = vector.extract_strided_slice %14 {offsets = [0, 7, 0], sizes = [8, 1, 32], strides = [1, 1, 1]} : vector<8x8x32xf32> to vector<8x1x32xf32>
    %296 = vector.shape_cast %295 : vector<8x1x32xf32> to vector<8x32xf32>
    %297 = arith.addf %296, %290 : vector<8x32xf32>
    %298 = arith.negf %297 : vector<8x32xf32>
    %299 = math.exp %298 : vector<8x32xf32>
    %cst_83 = arith.constant 1.000000e+00 : f32
    %300 = vector.broadcast %cst_83 : f32 to vector<8x32xf32>
    %301 = arith.addf %300, %299 : vector<8x32xf32>
    %302 = arith.divf %300, %301 : vector<8x32xf32>
    %303 = vector.extract_strided_slice %22 {offsets = [0, 7, 0], sizes = [8, 1, 32], strides = [1, 1, 1]} : vector<8x8x32xf32> to vector<8x1x32xf32>
    %304 = vector.shape_cast %303 : vector<8x1x32xf32> to vector<8x32xf32>
    %305 = arith.addf %304, %291 : vector<8x32xf32>
    %306 = arith.negf %305 : vector<8x32xf32>
    %307 = math.exp %306 : vector<8x32xf32>
    %cst_84 = arith.constant 1.000000e+00 : f32
    %308 = vector.broadcast %cst_84 : f32 to vector<8x32xf32>
    %309 = arith.addf %308, %307 : vector<8x32xf32>
    %310 = arith.divf %308, %309 : vector<8x32xf32>
    %311 = vector.extract_strided_slice %30 {offsets = [0, 7, 0], sizes = [8, 1, 32], strides = [1, 1, 1]} : vector<8x8x32xf32> to vector<8x1x32xf32>
    %312 = vector.shape_cast %311 : vector<8x1x32xf32> to vector<8x32xf32>
    %313 = arith.mulf %302, %294 : vector<8x32xf32>
    %314 = arith.addf %312, %313 : vector<8x32xf32>
    %315 = math.tanh %314 : vector<8x32xf32>
    %cst_85 = arith.constant 1.000000e+00 : f32
    %316 = vector.broadcast %cst_85 : f32 to vector<8x32xf32>
    %317 = arith.subf %316, %310 : vector<8x32xf32>
    %318 = arith.mulf %317, %315 : vector<8x32xf32>
    %319 = arith.mulf %310, %289 : vector<8x32xf32>
    %320 = arith.addf %318, %319 : vector<8x32xf32>
    %c7_i32 = arith.constant 7 : i32
    %321 = vector.broadcast %c7_i32 : i32 to vector<8x1xi32>
    %322 = arith.cmpi sgt, %4, %321 : vector<8x1xi32>
    %323 = vector.shape_cast %322 : vector<8x1xi1> to vector<8x1xi1>
    %324 = vector.broadcast %323 : vector<8x1xi1> to vector<8x32xi1>
    %325 = arith.select %324, %320, %289 : vector<8x32xi1>, vector<8x32xf32>
    %c0_86 = arith.constant 0 : index
    %c0_87 = arith.constant 0 : index
    %326 = vector.load %arg8[%c0_86, %c0_87] : memref<32x128xf32, #tpu.memory_space<vmem>>, vector<32x128xf32>
    %cst_88 = arith.constant dense<0.000000e+00> : vector<8x128xf32>
    %327 = tpu.matmul %325, %326, %cst_88 {dimension_numbers = #tpu.dot_dimension_numbers<[1], [0], [0], [1], [0, 0, 1, 1], [], []>} : vector<8x32xf32>, vector<32x128xf32>, vector<8x128xf32> -> vector<8x128xf32>
    %c0_89 = arith.constant 0 : index
    %c0_90 = arith.constant 0 : index
    %328 = vector.load %arg9[%c0_89, %c0_90] : memref<1x128xf32, #tpu.memory_space<vmem>>, vector<1x128xf32>
    %329 = vector.broadcast %328 : vector<1x128xf32> to vector<8x128xf32>
    %330 = arith.addf %327, %329 : vector<8x128xf32>
    %cst_91 = arith.constant dense<0xFF800000> : vector<8xf32>
    %331 = vector.multi_reduction <maximumf>, %330, %cst_91 [1] : vector<8x128xf32> to vector<8xf32>
    %332 = vector.shape_cast %331 : vector<8xf32> to vector<8x1xf32>
    %333 = vector.broadcast %332 : vector<8x1xf32> to vector<8x128xf32>
    %334 = arith.subf %330, %333 : vector<8x128xf32>
    %335 = math.exp %334 : vector<8x128xf32>
    %cst_92 = arith.constant dense<0.000000e+00> : vector<8xf32>
    %336 = vector.multi_reduction <add>, %335, %cst_92 [1] : vector<8x128xf32> to vector<8xf32>
    %337 = vector.shape_cast %336 : vector<8xf32> to vector<8x1xf32>
    %338 = vector.broadcast %337 : vector<8x1xf32> to vector<8x128xf32>
    %339 = arith.divf %335, %338 : vector<8x128xf32>
    %c0_93 = arith.constant 0 : index
    %c0_94 = arith.constant 0 : index
    %340 = vector.load %arg10[%c0_93, %c0_94] : memref<8x128xf32, #tpu.memory_space<vmem>>, vector<8x128xf32>
    tpu.vector_store %arg10[%c0_93, %c0_94], %339 {strides = array<i32>} : memref<8x128xf32, #tpu.memory_space<vmem>>, vector<8x128xf32>,
    return
  }
  func.func @transform_0(%arg0: i32) -> (i32, i32, i32) {
    %c0_i32 = arith.constant 0 : i32
    %c0_i32_0 = arith.constant 0 : i32
    %c0_i32_1 = arith.constant 0 : i32
    return %arg0, %c0_i32, %c0_i32_0 : i32, i32, i32
  }
  func.func @transform_1(%arg0: i32) -> (i32, i32, i32) {
    %c0_i32 = arith.constant 0 : i32
    %c0_i32_0 = arith.constant 0 : i32
    %c0_i32_1 = arith.constant 0 : i32
    return %arg0, %c0_i32, %c0_i32_0 : i32, i32, i32
  }
  func.func @transform_2(%arg0: i32) -> (i32, i32) {
    %c0_i32 = arith.constant 0 : i32
    %c0_i32_0 = arith.constant 0 : i32
    return %arg0, %c0_i32 : i32, i32
  }
  func.func @transform_3(%arg0: i32) -> (i32, i32, i32) {
    %c0_i32 = arith.constant 0 : i32
    %c0_i32_0 = arith.constant 0 : i32
    %c0_i32_1 = arith.constant 0 : i32
    %c0_i32_2 = arith.constant 0 : i32
    return %c0_i32, %c0_i32_0, %c0_i32_1 : i32, i32, i32
  }
  func.func @transform_4(%arg0: i32) -> (i32, i32, i32) {
    %c0_i32 = arith.constant 0 : i32
    %c0_i32_0 = arith.constant 0 : i32
    %c0_i32_1 = arith.constant 0 : i32
    %c0_i32_2 = arith.constant 0 : i32
    return %c0_i32, %c0_i32_0, %c0_i32_1 : i32, i32, i32
  }
  func.func @transform_5(%arg0: i32) -> (i32, i32, i32) {
    %c0_i32 = arith.constant 0 : i32
    %c0_i32_0 = arith.constant 0 : i32
    %c0_i32_1 = arith.constant 0 : i32
    %c0_i32_2 = arith.constant 0 : i32
    return %c0_i32, %c0_i32_0, %c0_i32_1 : i32, i32, i32
  }
  func.func @transform_6(%arg0: i32) -> (i32, i32) {
    %c0_i32 = arith.constant 0 : i32
    %c0_i32_0 = arith.constant 0 : i32
    %c0_i32_1 = arith.constant 0 : i32
    return %c0_i32, %c0_i32_0 : i32, i32
  }
  func.func @transform_7(%arg0: i32) -> (i32, i32) {
    %c0_i32 = arith.constant 0 : i32
    %c0_i32_0 = arith.constant 0 : i32
    %c0_i32_1 = arith.constant 0 : i32
    return %c0_i32, %c0_i32_0 : i32, i32
  }
  func.func @transform_8(%arg0: i32) -> (i32, i32) {
    %c0_i32 = arith.constant 0 : i32
    %c0_i32_0 = arith.constant 0 : i32
    %c0_i32_1 = arith.constant 0 : i32
    return %c0_i32, %c0_i32_0 : i32, i32
  }
  func.func @transform_9(%arg0: i32) -> (i32, i32) {
    %c0_i32 = arith.constant 0 : i32
    %c0_i32_0 = arith.constant 0 : i32
    return %arg0, %c0_i32 : i32, i32
  }
}

</mosaic_0001>

<llo_original>
// kernel: tpu_custom_call.1
$region0: #{tpu_custom_call.1}
  #allocation0 [shape = 'u32[]', space=smem, size = 0x4, offset = 0x4, fixed_abs, tag = 'smem constant byte address 0x4 - core index']
  #allocation1 [shape = 'u32[144,128]{1,0:T(1,128)}', space=vmem, size = 0x12000, scoped, tag = 'internal scratch']
  %s0 = inlined_call_operand.hbm [shape: f32[8,4,32], index: 0, kind: input, shape index: {}]
  %s1 = inlined_call_operand.hbm [shape: f32[8,8,32], index: 1, kind: input, shape index: {}]
  %s2 = inlined_call_operand.vmem [shape: s32[8,1], index: 2, kind: input, shape index: {}]
  %s3 = inlined_call_operand.hbm [shape: f32[3,32,32], index: 3, kind: input, shape index: {}]
  %s4 = inlined_call_operand.hbm [shape: f32[3,32,32], index: 4, kind: input, shape index: {}]
  %s5 = inlined_call_operand.vmem [shape: f32[3,1,32], index: 5, kind: input, shape index: {}]
  %s6 = inlined_call_operand.vmem [shape: f32[1,32], index: 6, kind: input, shape index: {}]
  %s7 = inlined_call_operand.hbm [shape: f32[32,128], index: 7, kind: input, shape index: {}]
  %s8 = inlined_call_operand.vmem [shape: f32[1,128], index: 8, kind: input, shape index: {}]
  %s9 = inlined_call_operand.hbm [shape: f32[8,128], index: 9, kind: output, shape index: {}]
  %s10 = sld [smem:[#allocation0]]
  $region66: #{tpu_custom_call.1} parent=0
    _
  %s12 = ssub.s32 1, %s10
  %s13 = scalar_select 0, %s12, %s10
  $region1: #{tpu_custom_call.1} parent=0
    #allocation2 [shape = 'u8[16384]{0}', space=vmem, size = 0x4000, scoped, tag = 'input window, operand 0, single buffered']
    #allocation3 [shape = 's32[1]{0}', space=sflag, size = 0x4, scoped, tag = 'scoped memory for tpu_custom_call.1']
    #allocation4 [shape = 's32[1]{0}', space=sflag, size = 0x4, scoped, tag = 'scoped memory for tpu_custom_call.1']
    #allocation5 [shape = 'u8[32768]{0}', space=vmem, size = 0x8000, scoped, tag = 'input window, operand 1, single buffered']
    #allocation6 [shape = 's32[1]{0}', space=sflag, size = 0x4, scoped, tag = 'scoped memory for tpu_custom_call.1']
    #allocation7 [shape = 'u8[49152]{0}', space=vmem, size = 0xc000, scoped, tag = 'input window, operand 3, single buffered']
    #allocation8 [shape = 'u8[49152]{0}', space=vmem, size = 0xc000, scoped, tag = 'input window, operand 4, single buffered']
    #allocation9 [shape = 's32[1]{0}', space=sflag, size = 0x4, scoped, tag = 'scoped memory for tpu_custom_call.1']
    #allocation10 [shape = 'u8[16384]{0}', space=vmem, size = 0x4000, scoped, tag = 'input window, operand 7, single buffered']
    #allocation11 [shape = 'u8[4096]{0}', space=vmem, size = 0x1000, scoped, tag = 'output window, operand 0, single buffered']
    %14 = vsyncpa [#allocation3], 0
    %15 = vsyncpa [#allocation6], 0
    %16 = vsyncpa [#allocation9], 0
    %17 = vsyncpa [#allocation4], 0
    // Predicated region
    $region2: #{tpu_custom_call.1} parent=1 // pred_check
      _
    $region3: #{tpu_custom_call.1} parent=1 // pred_check_branch
      %19 = sbr.rel (0) target = $region5
    $region4: #{tpu_custom_call.1} parent=1 // pred_region
      %s21 = ssub.s32 512, 512
      %22 = vsyncadd [#allocation3], %s21
      %s23 = sshll.u32 [#allocation2], 4
      %s24 = int_to_ptr.vmem [resolvable:$true] %s23
      %29 = dma.hbm_to_vmem [thread:$0]  %s0, 512, %s24, [#allocation3], 64, 64, 4
    $region5: #{tpu_custom_call.1} parent=1 // pred_fallthru
      _
    // Predicated region
    $region6: #{tpu_custom_call.1} parent=1 // pred_check
      _
    $region7: #{tpu_custom_call.1} parent=1 // pred_check_branch
      %31 = sbr.rel (0) target = $region9
    $region8: #{tpu_custom_call.1} parent=1 // pred_region
      %s33 = ssub.s32 1024, 1024
      %34 = vsyncadd [#allocation6], %s33
      %s35 = sshll.u32 [#allocation5], 4
      %s36 = int_to_ptr.vmem [resolvable:$true] %s35
      %41 = dma.hbm_to_vmem [thread:$0]  %s1, 1024, %s36, [#allocation6], 128, 128, 8
    $region9: #{tpu_custom_call.1} parent=1 // pred_fallthru
      _
    // Predicated region
    $region10: #{tpu_custom_call.1} parent=1 // pred_check
      _
    $region11: #{tpu_custom_call.1} parent=1 // pred_check_branch
      %43 = sbr.rel (0) target = $region13
    $region12: #{tpu_custom_call.1} parent=1 // pred_region
      _
    $region13: #{tpu_custom_call.1} parent=1 // pred_fallthru
      _
    // Predicated region
    $region14: #{tpu_custom_call.1} parent=1 // pred_check
      _
    $region15: #{tpu_custom_call.1} parent=1 // pred_check_branch
      %45 = sbr.rel (0) target = $region17
    $region16: #{tpu_custom_call.1} parent=1 // pred_region
      %s47 = ssub.s32 1536, 1536
      %48 = vsyncadd [#allocation6], %s47
      %s49 = sshll.u32 [#allocation7], 4
      %s50 = int_to_ptr.vmem [resolvable:$true] %s49
      %55 = dma.hbm_to_vmem [thread:$0]  %s3, 1536, %s50, [#allocation6], 128, 128, 8
    $region17: #{tpu_custom_call.1} parent=1 // pred_fallthru
      _
    // Predicated region
    $region18: #{tpu_custom_call.1} parent=1 // pred_check
      _
    $region19: #{tpu_custom_call.1} parent=1 // pred_check_branch
      %57 = sbr.rel (0) target = $region21
    $region20: #{tpu_custom_call.1} parent=1 // pred_region
      %s59 = ssub.s32 1536, 1536
      %60 = vsyncadd [#allocation9], %s59
      %s61 = sshll.u32 [#allocation8], 4
      %s62 = int_to_ptr.vmem [resolvable:$true] %s61
      %67 = dma.hbm_to_vmem [thread:$0]  %s4, 1536, %s62, [#allocation9], 128, 128, 8
    $region21: #{tpu_custom_call.1} parent=1 // pred_fallthru
      _
    // Predicated region
    $region22: #{tpu_custom_call.1} parent=1 // pred_check
      _
    $region23: #{tpu_custom_call.1} parent=1 // pred_check_branch
      %69 = sbr.rel (0) target = $region25
    $region24: #{tpu_custom_call.1} parent=1 // pred_region
      _
    $region25: #{tpu_custom_call.1} parent=1 // pred_fallthru
      _
    // Predicated region
    $region26: #{tpu_custom_call.1} parent=1 // pred_check
      _
    $region27: #{tpu_custom_call.1} parent=1 // pred_check_branch
      %71 = sbr.rel (0) target = $region29
    $region28: #{tpu_custom_call.1} parent=1 // pred_region
      _
    $region29: #{tpu_custom_call.1} parent=1 // pred_fallthru
      _
    // Predicated region
    $region30: #{tpu_custom_call.1} parent=1 // pred_check
      _
    $region31: #{tpu_custom_call.1} parent=1 // pred_check_branch
      %73 = sbr.rel (0) target = $region33
    $region32: #{tpu_custom_call.1} parent=1 // pred_region
      %s75 = ssub.s32 512, 512
      %76 = vsyncadd [#allocation9], %s75
      %s77 = sshll.u32 [#allocation10], 4
      %s78 = int_to_ptr.vmem [resolvable:$true] %s77
      %83 = dma.hbm_to_vmem [thread:$0]  %s7, 512, %s78, [#allocation9], 128, 128, 8
    $region33: #{tpu_custom_call.1} parent=1 // pred_fallthru
      _
    // Predicated region
    $region34: #{tpu_custom_call.1} parent=1 // pred_check
      _
    $region35: #{tpu_custom_call.1} parent=1 // pred_check_branch
      %85 = sbr.rel (0) target = $region37
    $region36: #{tpu_custom_call.1} parent=1 // pred_region
      _
    $region37: #{tpu_custom_call.1} parent=1 // pred_fallthru
      _
    // Predicated region
    $region38: #{tpu_custom_call.1} parent=1 // pred_check
      _
    $region39: #{tpu_custom_call.1} parent=1 // pred_check_branch
      %87 = sbr.rel (0) target = $region41
    $region40: #{tpu_custom_call.1} parent=1 // pred_region
      %88 = dma.done [#allocation3], 512
    $region41: #{tpu_custom_call.1} parent=1 // pred_fallthru
      _
    // Predicated region
    $region42: #{tpu_custom_call.1} parent=1 // pred_check
      _
    $region43: #{tpu_custom_call.1} parent=1 // pred_check_branch
      %90 = sbr.rel (0) target = $region45
    $region44: #{tpu_custom_call.1} parent=1 // pred_region
      %91 = dma.done [#allocation6], 1024
    $region45: #{tpu_custom_call.1} parent=1 // pred_fallthru
      _
    // Predicated region
    $region46: #{tpu_custom_call.1} parent=1 // pred_check
      _
    $region47: #{tpu_custom_call.1} parent=1 // pred_check_branch
      %93 = sbr.rel (0) target = $region49
    $region48: #{tpu_custom_call.1} parent=1 // pred_region
      %94 = dma.done [#allocation6], 1536
    $region49: #{tpu_custom_call.1} parent=1 // pred_fallthru
      _
    // Predicated region
    $region50: #{tpu_custom_call.1} parent=1 // pred_check
      _
    $region51: #{tpu_custom_call.1} parent=1 // pred_check_branch
      %96 = sbr.rel (0) target = $region53
    $region52: #{tpu_custom_call.1} parent=1 // pred_region
      %97 = dma.done [#allocation9], 1536
    $region53: #{tpu_custom_call.1} parent=1 // pred_fallthru
      _
    // Predicated region
    $region54: #{tpu_custom_call.1} parent=1 // pred_check
      _
    $region55: #{tpu_custom_call.1} parent=1 // pred_check_branch
      %99 = sbr.rel (0) target = $region57
    $region56: #{tpu_custom_call.1} parent=1 // pred_region
      %100 = dma.done [#allocation9], 512
    $region57: #{tpu_custom_call.1} parent=1 // pred_fallthru
      _
    %v101 = vld [vmem:[#allocation2] sm:$0xf]
    %v102 = vld [vmem:[#allocation2 + $0x4] sm:$0xf]
    %v103 = vld [vmem:[#allocation2 + $0x8] sm:$0xf]
    %v104 = vld [vmem:[#allocation2 + $0xc] sm:$0xf]
    %v105 = vld [vmem:[#allocation2 + $0x10] sm:$0xf]
    %v106 = vld [vmem:[#allocation2 + $0x14] sm:$0xf]
    %v107 = vld [vmem:[#allocation2 + $0x18] sm:$0xf]
    %v108 = vld [vmem:[#allocation2 + $0x1c] sm:$0xf]
    %vm109 = vcmask 257024
    %v110 = vsel %vm109, %v101, 0.0
    %v111 = vrot.slane %v110, 4
    %v112 = vadd.f32 %v110, %v111
    %v113 = vrot.slane %v112, 2
    %v114 = vadd.f32 %v112, %v113
    %v115 = vrot.slane %v114, 1
    %v116 = vadd.f32 %v114, %v115
    %v117 = vsel %vm109, %v102, 0.0
    %v118 = vrot.slane %v117, 4
    %v119 = vadd.f32 %v117, %v118
    %v120 = vrot.slane %v119, 2
    %v121 = vadd.f32 %v119, %v120
    %v122 = vrot.slane %v121, 1
    %v123 = vadd.f32 %v121, %v122
    %v124 = vsel %vm109, %v103, 0.0
    %v125 = vrot.slane %v124, 4
    %v126 = vadd.f32 %v124, %v125
    %v127 = vrot.slane %v126, 2
    %v128 = vadd.f32 %v126, %v127
    %v129 = vrot.slane %v128, 1
    %v130 = vadd.f32 %v128, %v129
    %v131 = vsel %vm109, %v104, 0.0
    %v132 = vrot.slane %v131, 4
    %v133 = vadd.f32 %v131, %v132
    %v134 = vrot.slane %v133, 2
    %v135 = vadd.f32 %v133, %v134
    %v136 = vrot.slane %v135, 1
    %v137 = vadd.f32 %v135, %v136
    %v138 = vsel %vm109, %v105, 0.0
    %v139 = vrot.slane %v138, 4
    %v140 = vadd.f32 %v138, %v139
    %v141 = vrot.slane %v140, 2
    %v142 = vadd.f32 %v140, %v141
    %v143 = vrot.slane %v142, 1
    %v144 = vadd.f32 %v142, %v143
    %v145 = vsel %vm109, %v106, 0.0
    %v146 = vrot.slane %v145, 4
    %v147 = vadd.f32 %v145, %v146
    %v148 = vrot.slane %v147, 2
    %v149 = vadd.f32 %v147, %v148
    %v150 = vrot.slane %v149, 1
    %v151 = vadd.f32 %v149, %v150
    %v152 = vsel %vm109, %v107, 0.0
    %v153 = vrot.slane %v152, 4
    %v154 = vadd.f32 %v152, %v153
    %v155 = vrot.slane %v154, 2
    %v156 = vadd.f32 %v154, %v155
    %v157 = vrot.slane %v156, 1
    %v158 = vadd.f32 %v156, %v157
    %v159 = vsel %vm109, %v108, 0.0
    %v160 = vrot.slane %v159, 4
    %v161 = vadd.f32 %v159, %v160
    %v162 = vrot.slane %v161, 2
    %v163 = vadd.f32 %v161, %v162
    %v164 = vrot.slane %v163, 1
    %v165 = vadd.f32 %v163, %v164
    %v166 = vrcp.pop 4.0
    %v167 = vmul.f32 %v116, %v166
    %v168 = vmul.f32 %v123, %v166
    %v169 = vmul.f32 %v130, %v166
    %v170 = vmul.f32 %v137, %v166
    %v171 = vmul.f32 %v144, %v166
    %v172 = vmul.f32 %v151, %v166
    %v173 = vmul.f32 %v158, %v166
    %v174 = vmul.f32 %v165, %v166
    %v175 = vld [vmem:[%s2] sm:$0xff]
    %v176 = vld [vmem:[#allocation5] sm:$0xff]
    %v177 = vld [vmem:[#allocation5 + $0x8] sm:$0xff]
    %v178 = vld [vmem:[#allocation5 + $0x10] sm:$0xff]
    %v179 = vld [vmem:[#allocation5 + $0x18] sm:$0xff]
    %v180 = vld [vmem:[#allocation5 + $0x20] sm:$0xff]
    %v181 = vld [vmem:[#allocation5 + $0x28] sm:$0xff]
    %v182 = vld [vmem:[#allocation5 + $0x30] sm:$0xff]
    %v183 = vld [vmem:[#allocation5 + $0x38] sm:$0xff]
    %v184 = vld [vmem:[#allocation7] sm:$0xff]
    %v185 = vld [vmem:[#allocation7 + $0x8] sm:$0xff]
    %v186 = vld [vmem:[#allocation7 + $0x10] sm:$0xff]
    %v187 = vld [vmem:[#allocation7 + $0x18] sm:$0xff]
    %v188 = vld [vmem:[%s5] sm:$0x1]
    %v190 = vlaneseq
    %v191 = vshrl.u32 %v190, 7
    %v192 = vsub.s32 0, %v191
    %v193 = vrot.slane %v188, %v192
    %vm195 = vcmask 261120
    %v197 = vsel %vm195, %v176, 0
    %v200 = vsel %vm195, %v177, 0
    %v203 = vsel %vm195, %v178, 0
    %v206 = vsel %vm195, %v179, 0
    %v209 = vsel %vm195, %v180, 0
    %v212 = vsel %vm195, %v181, 0
    %v215 = vsel %vm195, %v182, 0
    %v218 = vsel %vm195, %v183, 0
    %220 = vmatprep.subr.mxu0 0.0
    %221 = vmatpush1.msra.mxu0 0.0
    %222 = vmatprep.subr.mxu0 0.0
    %223 = vmatpush1.msra.mxu0 0.0
    %224 = vmatprep.subr.mxu0 0.0
    %225 = vmatpush1.msra.mxu0 0.0
    %226 = vmatprep.subr.mxu0 0.0
    %227 = vmatpush1.msra.mxu0 0.0
    %228 = vmatprep.subr.mxu0 0.0
    %229 = vmatpush1.msra.mxu0 0.0
    %230 = vmatprep.subr.mxu0 0.0
    %231 = vmatpush1.msra.mxu0 0.0
    %232 = vmatprep.subr.mxu0 0.0
    %233 = vmatpush1.msra.mxu0 0.0
    %234 = vmatprep.subr.mxu0 0.0
    %235 = vmatpush1.msra.mxu0 0.0
    %236 = vmatprep.subr.mxu0 0.0
    %237 = vmatpush1.msra.mxu0 0.0
    %238 = vmatprep.subr.mxu0 0.0
    %239 = vmatpush1.msra.mxu0 0.0
    %240 = vmatprep.subr.mxu0 0.0
    %241 = vmatpush1.msra.mxu0 0.0
    %242 = vmatprep.subr.mxu0 0.0
    %243 = vmatpush1.msra.mxu0 0.0
    %244 = vmatprep.subr.mxu0 0.0
    %245 = vmatpush1.msra.mxu0 %v187
    %246 = vmatprep.subr.mxu0 0.0
    %247 = vmatpush1.msra.mxu0 %v186
    %248 = vmatprep.subr.mxu0 0.0
    %249 = vmatpush1.msra.mxu0 %v185
    %250 = vmatprep.subr.mxu0 0.0
    %251 = vmatpush1.msra.mxu0 %v184
    %252 = vmatprep.subr.mxu0 0.0
    %253 = vmatpush2.msra.mxu0 0.0
    %254 = vmatprep.subr.mxu0 0.0
    %255 = vmatpush2.msra.mxu0 0.0
    %256 = vmatprep.subr.mxu0 0.0
    %257 = vmatpush2.msra.mxu0 0.0
    %258 = vmatprep.subr.mxu0 0.0
    %259 = vmatpush2.msra.mxu0 0.0
    %260 = vmatprep.subr.mxu0 0.0
    %261 = vmatpush2.msra.mxu0 0.0
    %262 = vmatprep.subr.mxu0 0.0
    %263 = vmatpush2.msra.mxu0 0.0
    %264 = vmatprep.subr.mxu0 0.0
    %265 = vmatpush2.msra.mxu0 0.0
    %266 = vmatprep.subr.mxu0 0.0
    %267 = vmatpush2.msra.mxu0 0.0
    %268 = vmatprep.subr.mxu0 0.0
    %269 = vmatpush2.msra.mxu0 0.0
    %270 = vmatprep.subr.mxu0 0.0
    %271 = vmatpush2.msra.mxu0 0.0
    %272 = vmatprep.subr.mxu0 0.0
    %273 = vmatpush2.msra.mxu0 0.0
    %274 = vmatprep.subr.mxu0 0.0
    %275 = vmatpush2.msra.mxu0 0.0
    %276 = vmatprep.subr.mxu0 0.0
    %277 = vmatpush2.msra.mxu0 0.0
    %278 = vmatprep.subr.mxu0 0.0
    %279 = vmatpush2.msra.mxu0 0.0
    %280 = vmatprep.subr.mxu0 0.0
    %281 = vmatpush2.msra.mxu0 0.0
    %282 = vmatprep.subr.mxu0 0.0
    %283 = vmatpush2.msra.mxu0 0.0
    %284 = vmatprep.mubr.f32.mxu0 0.0
    %285 = vmatmul.mubr.f32.gmra.mxu0 %v197
    %v286 = vpop.f32.mrf.mxu0
    %v287 = vadd.f32 %v193, %v286
    %v288 = vpop.f32.mrf.mxu0
    %289 = vmatprep.mubr.f32.mxu0 0.0
    %290 = vmatmul.mubr.f32.gmra.mxu0 %v200
    %v291 = vpop.f32.mrf.mxu0
    %v292 = vadd.f32 %v193, %v291
    %v293 = vpop.f32.mrf.mxu0
    %294 = vmatprep.mubr.f32.mxu0 0.0
    %295 = vmatmul.mubr.f32.gmra.mxu0 %v203
    %v296 = vpop.f32.mrf.mxu0
    %v297 = vadd.f32 %v193, %v296
    %v298 = vpop.f32.mrf.mxu0
    %299 = vmatprep.mubr.f32.mxu0 0.0
    %300 = vmatmul.mubr.f32.gmra.mxu0 %v206
    %v301 = vpop.f32.mrf.mxu0
    %v302 = vadd.f32 %v193, %v301
    %v303 = vpop.f32.mrf.mxu0
    %304 = vmatprep.mubr.f32.mxu0 0.0
    %305 = vmatmul.mubr.f32.gmra.mxu0 %v209
    %v306 = vpop.f32.mrf.mxu0
    %v307 = vadd.f32 %v193, %v306
    %v308 = vpop.f32.mrf.mxu0
    %309 = vmatprep.mubr.f32.mxu0 0.0
    %310 = vmatmul.mubr.f32.gmra.mxu0 %v212
    %v311 = vpop.f32.mrf.mxu0
    %v312 = vadd.f32 %v193, %v311
    %v313 = vpop.f32.mrf.mxu0
    %314 = vmatprep.mubr.f32.mxu0 0.0
    %315 = vmatmul.mubr.f32.gmra.mxu0 %v215
    %v316 = vpop.f32.mrf.mxu0
    %v317 = vadd.f32 %v193, %v316
    %v318 = vpop.f32.mrf.mxu0
    %319 = vmatprep.mubr.f32.mxu0 0.0
    %320 = vmatmul.mubr.f32.gmra.mxu0 %v218
    %v321 = vpop.f32.mrf.mxu0
    %v322 = vadd.f32 %v193, %v321
    %v323 = vpop.f32.mrf.mxu0
    %324 = vdwg.mxu0
    %s325 = scalar_lea.vmem [#allocation7], 32
    %v326 = vld [vmem:[%s325] sm:$0xff]
    %v327 = vld [vmem:[%s325 + $0x8] sm:$0xff]
    %v328 = vld [vmem:[%s325 + $0x10] sm:$0xff]
    %v329 = vld [vmem:[%s325 + $0x18] sm:$0xff]
    %s330 = scalar_lea.vmem %s5, 1
    %v331 = vld [vmem:[%s330] sm:$0x1]
    %v333 = vlaneseq
    %v334 = vshrl.u32 %v333, 7
    %v335 = vsub.s32 0, %v334
    %v336 = vrot.slane %v331, %v335
    %338 = vmatprep.subr.mxu0 0.0
    %339 = vmatpush1.msra.mxu0 0.0
    %340 = vmatprep.subr.mxu0 0.0
    %341 = vmatpush1.msra.mxu0 0.0
    %342 = vmatprep.subr.mxu0 0.0
    %343 = vmatpush1.msra.mxu0 0.0
    %344 = vmatprep.subr.mxu0 0.0
    %345 = vmatpush1.msra.mxu0 0.0
    %346 = vmatprep.subr.mxu0 0.0
    %347 = vmatpush1.msra.mxu0 0.0
    %348 = vmatprep.subr.mxu0 0.0
    %349 = vmatpush1.msra.mxu0 0.0
    %350 = vmatprep.subr.mxu0 0.0
    %351 = vmatpush1.msra.mxu0 0.0
    %352 = vmatprep.subr.mxu0 0.0
    %353 = vmatpush1.msra.mxu0 0.0
    %354 = vmatprep.subr.mxu0 0.0
    %355 = vmatpush1.msra.mxu0 0.0
    %356 = vmatprep.subr.mxu0 0.0
    %357 = vmatpush1.msra.mxu0 0.0
    %358 = vmatprep.subr.mxu0 0.0
    %359 = vmatpush1.msra.mxu0 0.0
    %360 = vmatprep.subr.mxu0 0.0
    %361 = vmatpush1.msra.mxu0 0.0
    %362 = vmatprep.subr.mxu0 0.0
    %363 = vmatpush1.msra.mxu0 %v329
    %364 = vmatprep.subr.mxu0 0.0
    %365 = vmatpush1.msra.mxu0 %v328
    %366 = vmatprep.subr.mxu0 0.0
    %367 = vmatpush1.msra.mxu0 %v327
    %368 = vmatprep.subr.mxu0 0.0
    %369 = vmatpush1.msra.mxu0 %v326
    %370 = vmatprep.subr.mxu0 0.0
    %371 = vmatpush2.msra.mxu0 0.0
    %372 = vmatprep.subr.mxu0 0.0
    %373 = vmatpush2.msra.mxu0 0.0
    %374 = vmatprep.subr.mxu0 0.0
    %375 = vmatpush2.msra.mxu0 0.0
    %376 = vmatprep.subr.mxu0 0.0
    %377 = vmatpush2.msra.mxu0 0.0
    %378 = vmatprep.subr.mxu0 0.0
    %379 = vmatpush2.msra.mxu0 0.0
    %380 = vmatprep.subr.mxu0 0.0
    %381 = vmatpush2.msra.mxu0 0.0
    %382 = vmatprep.subr.mxu0 0.0
    %383 = vmatpush2.msra.mxu0 0.0
    %384 = vmatprep.subr.mxu0 0.0
    %385 = vmatpush2.msra.mxu0 0.0
    %386 = vmatprep.subr.mxu0 0.0
    %387 = vmatpush2.msra.mxu0 0.0
    %388 = vmatprep.subr.mxu0 0.0
    %389 = vmatpush2.msra.mxu0 0.0
    %390 = vmatprep.subr.mxu0 0.0
    %391 = vmatpush2.msra.mxu0 0.0
    %392 = vmatprep.subr.mxu0 0.0
    %393 = vmatpush2.msra.mxu0 0.0
    %394 = vmatprep.subr.mxu0 0.0
    %395 = vmatpush2.msra.mxu0 0.0
    %396 = vmatprep.subr.mxu0 0.0
    %397 = vmatpush2.msra.mxu0 0.0
    %398 = vmatprep.subr.mxu0 0.0
    %399 = vmatpush2.msra.mxu0 0.0
    %400 = vmatprep.subr.mxu0 0.0
    %401 = vmatpush2.msra.mxu0 0.0
    %402 = vmatprep.mubr.f32.mxu0 0.0
    %403 = vmatmul.mubr.f32.gmra.mxu0 %v197
    %v404 = vpop.f32.mrf.mxu0
    %v405 = vadd.f32 %v336, %v404
    %v406 = vpop.f32.mrf.mxu0
    %407 = vmatprep.mubr.f32.mxu0 0.0
    %408 = vmatmul.mubr.f32.gmra.mxu0 %v200
    %v409 = vpop.f32.mrf.mxu0
    %v410 = vadd.f32 %v336, %v409
    %v411 = vpop.f32.mrf.mxu0
    %412 = vmatprep.mubr.f32.mxu0 0.0
    %413 = vmatmul.mubr.f32.gmra.mxu0 %v203
    %v414 = vpop.f32.mrf.mxu0
    %v415 = vadd.f32 %v336, %v414
    %v416 = vpop.f32.mrf.mxu0
    %417 = vmatprep.mubr.f32.mxu0 0.0
    %418 = vmatmul.mubr.f32.gmra.mxu0 %v206
    %v419 = vpop.f32.mrf.mxu0
    %v420 = vadd.f32 %v336, %v419
    %v421 = vpop.f32.mrf.mxu0
    %422 = vmatprep.mubr.f32.mxu0 0.0
    %423 = vmatmul.mubr.f32.gmra.mxu0 %v209
    %v424 = vpop.f32.mrf.mxu0
    %v425 = vadd.f32 %v336, %v424
    %v426 = vpop.f32.mrf.mxu0
    %427 = vmatprep.mubr.f32.mxu0 0.0
    %428 = vmatmul.mubr.f32.gmra.mxu0 %v212
    %v429 = vpop.f32.mrf.mxu0
    %v430 = vadd.f32 %v336, %v429
    %v431 = vpop.f32.mrf.mxu0
    %432 = vmatprep.mubr.f32.mxu0 0.0
    %433 = vmatmul.mubr.f32.gmra.mxu0 %v215
    %v434 = vpop.f32.mrf.mxu0
    %v435 = vadd.f32 %v336, %v434
    %v436 = vpop.f32.mrf.mxu0
    %437 = vmatprep.mubr.f32.mxu0 0.0
    %438 = vmatmul.mubr.f32.gmra.mxu0 %v218
    %v439 = vpop.f32.mrf.mxu0
    %v440 = vadd.f32 %v336, %v439
    %v441 = vpop.f32.mrf.mxu0
    %442 = vdwg.mxu0
    %s443 = scalar_lea.vmem [#allocation7], 64
    %v444 = vld [vmem:[%s443] sm:$0xff]
    %v445 = vld [vmem:[%s443 + $0x8] sm:$0xff]
    %v446 = vld [vmem:[%s443 + $0x10] sm:$0xff]
    %v447 = vld [vmem:[%s443 + $0x18] sm:$0xff]
    %s448 = scalar_lea.vmem %s5, 2
    %v449 = vld [vmem:[%s448] sm:$0x1]
    %v451 = vlaneseq
    %v452 = vshrl.u32 %v451, 7
    %v453 = vsub.s32 0, %v452
    %v454 = vrot.slane %v449, %v453
    %456 = vmatprep.subr.mxu0 0.0
    %457 = vmatpush1.msra.mxu0 0.0
    %458 = vmatprep.subr.mxu0 0.0
    %459 = vmatpush1.msra.mxu0 0.0
    %460 = vmatprep.subr.mxu0 0.0
    %461 = vmatpush1.msra.mxu0 0.0
    %462 = vmatprep.subr.mxu0 0.0
    %463 = vmatpush1.msra.mxu0 0.0
    %464 = vmatprep.subr.mxu0 0.0
    %465 = vmatpush1.msra.mxu0 0.0
    %466 = vmatprep.subr.mxu0 0.0
    %467 = vmatpush1.msra.mxu0 0.0
    %468 = vmatprep.subr.mxu0 0.0
    %469 = vmatpush1.msra.mxu0 0.0
    %470 = vmatprep.subr.mxu0 0.0
    %471 = vmatpush1.msra.mxu0 0.0
    %472 = vmatprep.subr.mxu0 0.0
    %473 = vmatpush1.msra.mxu0 0.0
    %474 = vmatprep.subr.mxu0 0.0
    %475 = vmatpush1.msra.mxu0 0.0
    %476 = vmatprep.subr.mxu0 0.0
    %477 = vmatpush1.msra.mxu0 0.0
    %478 = vmatprep.subr.mxu0 0.0
    %479 = vmatpush1.msra.mxu0 0.0
    %480 = vmatprep.subr.mxu0 0.0
    %481 = vmatpush1.msra.mxu0 %v447
    %482 = vmatprep.subr.mxu0 0.0
    %483 = vmatpush1.msra.mxu0 %v446
    %484 = vmatprep.subr.mxu0 0.0
    %485 = vmatpush1.msra.mxu0 %v445
    %486 = vmatprep.subr.mxu0 0.0
    %487 = vmatpush1.msra.mxu0 %v444
    %488 = vmatprep.subr.mxu0 0.0
    %489 = vmatpush2.msra.mxu0 0.0
    %490 = vmatprep.subr.mxu0 0.0
    %491 = vmatpush2.msra.mxu0 0.0
    %492 = vmatprep.subr.mxu0 0.0
    %493 = vmatpush2.msra.mxu0 0.0
    %494 = vmatprep.subr.mxu0 0.0
    %495 = vmatpush2.msra.mxu0 0.0
    %496 = vmatprep.subr.mxu0 0.0
    %497 = vmatpush2.msra.mxu0 0.0
    %498 = vmatprep.subr.mxu0 0.0
    %499 = vmatpush2.msra.mxu0 0.0
    %500 = vmatprep.subr.mxu0 0.0
    %501 = vmatpush2.msra.mxu0 0.0
    %502 = vmatprep.subr.mxu0 0.0
    %503 = vmatpush2.msra.mxu0 0.0
    %504 = vmatprep.subr.mxu0 0.0
    %505 = vmatpush2.msra.mxu0 0.0
    %506 = vmatprep.subr.mxu0 0.0
    %507 = vmatpush2.msra.mxu0 0.0
    %508 = vmatprep.subr.mxu0 0.0
    %509 = vmatpush2.msra.mxu0 0.0
    %510 = vmatprep.subr.mxu0 0.0
    %511 = vmatpush2.msra.mxu0 0.0
    %512 = vmatprep.subr.mxu0 0.0
    %513 = vmatpush2.msra.mxu0 0.0
    %514 = vmatprep.subr.mxu0 0.0
    %515 = vmatpush2.msra.mxu0 0.0
    %516 = vmatprep.subr.mxu0 0.0
    %517 = vmatpush2.msra.mxu0 0.0
    %518 = vmatprep.subr.mxu0 0.0
    %519 = vmatpush2.msra.mxu0 0.0
    %520 = vmatprep.mubr.f32.mxu0 0.0
    %521 = vmatmul.mubr.f32.gmra.mxu0 %v197
    %v522 = vpop.f32.mrf.mxu0
    %v523 = vadd.f32 %v454, %v522
    %v524 = vpop.f32.mrf.mxu0
    %525 = vmatprep.mubr.f32.mxu0 0.0
    %526 = vmatmul.mubr.f32.gmra.mxu0 %v200
    %v527 = vpop.f32.mrf.mxu0
    %v528 = vadd.f32 %v454, %v527
    %v529 = vpop.f32.mrf.mxu0
    %530 = vmatprep.mubr.f32.mxu0 0.0
    %531 = vmatmul.mubr.f32.gmra.mxu0 %v203
    %v532 = vpop.f32.mrf.mxu0
    %v533 = vadd.f32 %v454, %v532
    %v534 = vpop.f32.mrf.mxu0
    %535 = vmatprep.mubr.f32.mxu0 0.0
    %536 = vmatmul.mubr.f32.gmra.mxu0 %v206
    %v537 = vpop.f32.mrf.mxu0
    %v538 = vadd.f32 %v454, %v537
    %v539 = vpop.f32.mrf.mxu0
    %540 = vmatprep.mubr.f32.mxu0 0.0
    %541 = vmatmul.mubr.f32.gmra.mxu0 %v209
    %v542 = vpop.f32.mrf.mxu0
    %v543 = vadd.f32 %v454, %v542
    %v544 = vpop.f32.mrf.mxu0
    %545 = vmatprep.mubr.f32.mxu0 0.0
    %546 = vmatmul.mubr.f32.gmra.mxu0 %v212
    %v547 = vpop.f32.mrf.mxu0
    %v548 = vadd.f32 %v454, %v547
    %v549 = vpop.f32.mrf.mxu0
    %550 = vmatprep.mubr.f32.mxu0 0.0
    %551 = vmatmul.mubr.f32.gmra.mxu0 %v215
    %v552 = vpop.f32.mrf.mxu0
    %v553 = vadd.f32 %v454, %v552
    %v554 = vpop.f32.mrf.mxu0
    %555 = vmatprep.mubr.f32.mxu0 0.0
    %556 = vmatmul.mubr.f32.gmra.mxu0 %v218
    %v557 = vpop.f32.mrf.mxu0
    %v558 = vadd.f32 %v454, %v557
    %v559 = vpop.f32.mrf.mxu0
    %560 = vdwg.mxu0
    %v561 = vld [vmem:[#allocation8] sm:$0xff]
    %v562 = vld [vmem:[#allocation8 + $0x8] sm:$0xff]
    %v563 = vld [vmem:[#allocation8 + $0x10] sm:$0xff]
    %v564 = vld [vmem:[#allocation8 + $0x18] sm:$0xff]
    %s565 = scalar_lea.vmem [#allocation8], 32
    %v566 = vld [vmem:[%s565] sm:$0xff]
    %v567 = vld [vmem:[%s565 + $0x8] sm:$0xff]
    %v568 = vld [vmem:[%s565 + $0x10] sm:$0xff]
    %v569 = vld [vmem:[%s565 + $0x18] sm:$0xff]
    %s570 = scalar_lea.vmem [#allocation8], 64
    %v571 = vld [vmem:[%s570] sm:$0xff]
    %v572 = vld [vmem:[%s570 + $0x8] sm:$0xff]
    %v573 = vld [vmem:[%s570 + $0x10] sm:$0xff]
    %v574 = vld [vmem:[%s570 + $0x18] sm:$0xff]
    %v575 = vld [vmem:[%s6] sm:$0x1]
    %vm584 = vcmask 1041409
    %v585 = vsel %vm584, %v168, %v167
    %vm586 = vcmask 1042434
    %v587 = vsel %vm586, %v169, %v585
    %vm588 = vcmask 1043459
    %v589 = vsel %vm588, %v170, %v587
    %vm590 = vcmask 1044484
    %v591 = vsel %vm590, %v171, %v589
    %vm592 = vcmask 1045509
    %v593 = vsel %vm592, %v172, %v591
    %vm594 = vcmask 1046534
    %v595 = vsel %vm594, %v173, %v593
    %vm596 = vcmask 1047559
    %v597 = vsel %vm596, %v174, %v595
    %v598 = vsel %vm195, %v597, 0
    %600 = vmatprep.subr.mxu0 0.0
    %601 = vmatpush1.msra.mxu0 0.0
    %602 = vmatprep.subr.mxu0 0.0
    %603 = vmatpush1.msra.mxu0 0.0
    %604 = vmatprep.subr.mxu0 0.0
    %605 = vmatpush1.msra.mxu0 0.0
    %606 = vmatprep.subr.mxu0 0.0
    %607 = vmatpush1.msra.mxu0 0.0
    %608 = vmatprep.subr.mxu0 0.0
    %609 = vmatpush1.msra.mxu0 0.0
    %610 = vmatprep.subr.mxu0 0.0
    %611 = vmatpush1.msra.mxu0 0.0
    %612 = vmatprep.subr.mxu0 0.0
    %613 = vmatpush1.msra.mxu0 0.0
    %614 = vmatprep.subr.mxu0 0.0
    %615 = vmatpush1.msra.mxu0 0.0
    %616 = vmatprep.subr.mxu0 0.0
    %617 = vmatpush1.msra.mxu0 0.0
    %618 = vmatprep.subr.mxu0 0.0
    %619 = vmatpush1.msra.mxu0 0.0
    %620 = vmatprep.subr.mxu0 0.0
    %621 = vmatpush1.msra.mxu0 0.0
    %622 = vmatprep.subr.mxu0 0.0
    %623 = vmatpush1.msra.mxu0 0.0
    %624 = vmatprep.subr.mxu0 0.0
    %625 = vmatpush1.msra.mxu0 %v564
    %626 = vmatprep.subr.mxu0 0.0
    %627 = vmatpush1.msra.mxu0 %v563
    %628 = vmatprep.subr.mxu0 0.0
    %629 = vmatpush1.msra.mxu0 %v562
    %630 = vmatprep.subr.mxu0 0.0
    %631 = vmatpush1.msra.mxu0 %v561
    %632 = vmatprep.subr.mxu0 0.0
    %633 = vmatpush2.msra.mxu0 0.0
    %634 = vmatprep.subr.mxu0 0.0
    %635 = vmatpush2.msra.mxu0 0.0
    %636 = vmatprep.subr.mxu0 0.0
    %637 = vmatpush2.msra.mxu0 0.0
    %638 = vmatprep.subr.mxu0 0.0
    %639 = vmatpush2.msra.mxu0 0.0
    %640 = vmatprep.subr.mxu0 0.0
    %641 = vmatpush2.msra.mxu0 0.0
    %642 = vmatprep.subr.mxu0 0.0
    %643 = vmatpush2.msra.mxu0 0.0
    %644 = vmatprep.subr.mxu0 0.0
    %645 = vmatpush2.msra.mxu0 0.0
    %646 = vmatprep.subr.mxu0 0.0
    %647 = vmatpush2.msra.mxu0 0.0
    %648 = vmatprep.subr.mxu0 0.0
    %649 = vmatpush2.msra.mxu0 0.0
    %650 = vmatprep.subr.mxu0 0.0
    %651 = vmatpush2.msra.mxu0 0.0
    %652 = vmatprep.subr.mxu0 0.0
    %653 = vmatpush2.msra.mxu0 0.0
    %654 = vmatprep.subr.mxu0 0.0
    %655 = vmatpush2.msra.mxu0 0.0
    %656 = vmatprep.subr.mxu0 0.0
    %657 = vmatpush2.msra.mxu0 0.0
    %658 = vmatprep.subr.mxu0 0.0
    %659 = vmatpush2.msra.mxu0 0.0
    %660 = vmatprep.subr.mxu0 0.0
    %661 = vmatpush2.msra.mxu0 0.0
    %662 = vmatprep.subr.mxu0 0.0
    %663 = vmatpush2.msra.mxu0 0.0
    %664 = vmatprep.mubr.f32.mxu0 0.0
    %665 = vmatmul.mubr.f32.gmra.mxu0 %v598
    %v666 = vpop.f32.mrf.mxu0
    %v667 = vadd.f32 0.0, %v666
    %v668 = vpop.f32.mrf.mxu0
    %669 = vdwg.mxu0
    %670 = vmatprep.subr.mxu0 0.0
    %671 = vmatpush1.msra.mxu0 0.0
    %672 = vmatprep.subr.mxu0 0.0
    %673 = vmatpush1.msra.mxu0 0.0
    %674 = vmatprep.subr.mxu0 0.0
    %675 = vmatpush1.msra.mxu0 0.0
    %676 = vmatprep.subr.mxu0 0.0
    %677 = vmatpush1.msra.mxu0 0.0
    %678 = vmatprep.subr.mxu0 0.0
    %679 = vmatpush1.msra.mxu0 0.0
    %680 = vmatprep.subr.mxu0 0.0
    %681 = vmatpush1.msra.mxu0 0.0
    %682 = vmatprep.subr.mxu0 0.0
    %683 = vmatpush1.msra.mxu0 0.0
    %684 = vmatprep.subr.mxu0 0.0
    %685 = vmatpush1.msra.mxu0 0.0
    %686 = vmatprep.subr.mxu0 0.0
    %687 = vmatpush1.msra.mxu0 0.0
    %688 = vmatprep.subr.mxu0 0.0
    %689 = vmatpush1.msra.mxu0 0.0
    %690 = vmatprep.subr.mxu0 0.0
    %691 = vmatpush1.msra.mxu0 0.0
    %692 = vmatprep.subr.mxu0 0.0
    %693 = vmatpush1.msra.mxu0 0.0
    %694 = vmatprep.subr.mxu0 0.0
    %695 = vmatpush1.msra.mxu0 %v569
    %696 = vmatprep.subr.mxu0 0.0
    %697 = vmatpush1.msra.mxu0 %v568
    %698 = vmatprep.subr.mxu0 0.0
    %699 = vmatpush1.msra.mxu0 %v567
    %700 = vmatprep.subr.mxu0 0.0
    %701 = vmatpush1.msra.mxu0 %v566
    %702 = vmatprep.subr.mxu0 0.0
    %703 = vmatpush2.msra.mxu0 0.0
    %704 = vmatprep.subr.mxu0 0.0
    %705 = vmatpush2.msra.mxu0 0.0
    %706 = vmatprep.subr.mxu0 0.0
    %707 = vmatpush2.msra.mxu0 0.0
    %708 = vmatprep.subr.mxu0 0.0
    %709 = vmatpush2.msra.mxu0 0.0
    %710 = vmatprep.subr.mxu0 0.0
    %711 = vmatpush2.msra.mxu0 0.0
    %712 = vmatprep.subr.mxu0 0.0
    %713 = vmatpush2.msra.mxu0 0.0
    %714 = vmatprep.subr.mxu0 0.0
    %715 = vmatpush2.msra.mxu0 0.0
    %716 = vmatprep.subr.mxu0 0.0
    %717 = vmatpush2.msra.mxu0 0.0
    %718 = vmatprep.subr.mxu0 0.0
    %719 = vmatpush2.msra.mxu0 0.0
    %720 = vmatprep.subr.mxu0 0.0
    %721 = vmatpush2.msra.mxu0 0.0
    %722 = vmatprep.subr.mxu0 0.0
    %723 = vmatpush2.msra.mxu0 0.0
    %724 = vmatprep.subr.mxu0 0.0
    %725 = vmatpush2.msra.mxu0 0.0
    %726 = vmatprep.subr.mxu0 0.0
    %727 = vmatpush2.msra.mxu0 0.0
    %728 = vmatprep.subr.mxu0 0.0
    %729 = vmatpush2.msra.mxu0 0.0
    %730 = vmatprep.subr.mxu0 0.0
    %731 = vmatpush2.msra.mxu0 0.0
    %732 = vmatprep.subr.mxu0 0.0
    %733 = vmatpush2.msra.mxu0 0.0
    %734 = vmatprep.mubr.f32.mxu0 0.0
    %735 = vmatmul.mubr.f32.gmra.mxu0 %v598
    %v736 = vpop.f32.mrf.mxu0
    %v737 = vadd.f32 0.0, %v736
    %v738 = vpop.f32.mrf.mxu0
    %739 = vdwg.mxu0
    %v741 = vlaneseq
    %v742 = vshrl.u32 %v741, 7
    %v743 = vsub.s32 0, %v742
    %v744 = vrot.slane %v575, %v743
    %746 = vmatprep.subr.mxu0 0.0
    %747 = vmatpush1.msra.mxu0 0.0
    %748 = vmatprep.subr.mxu0 0.0
    %749 = vmatpush1.msra.mxu0 0.0
    %750 = vmatprep.subr.mxu0 0.0
    %751 = vmatpush1.msra.mxu0 0.0
    %752 = vmatprep.subr.mxu0 0.0
    %753 = vmatpush1.msra.mxu0 0.0
    %754 = vmatprep.subr.mxu0 0.0
    %755 = vmatpush1.msra.mxu0 0.0
    %756 = vmatprep.subr.mxu0 0.0
    %757 = vmatpush1.msra.mxu0 0.0
    %758 = vmatprep.subr.mxu0 0.0
    %759 = vmatpush1.msra.mxu0 0.0
    %760 = vmatprep.subr.mxu0 0.0
    %761 = vmatpush1.msra.mxu0 0.0
    %762 = vmatprep.subr.mxu0 0.0
    %763 = vmatpush1.msra.mxu0 0.0
    %764 = vmatprep.subr.mxu0 0.0
    %765 = vmatpush1.msra.mxu0 0.0
    %766 = vmatprep.subr.mxu0 0.0
    %767 = vmatpush1.msra.mxu0 0.0
    %768 = vmatprep.subr.mxu0 0.0
    %769 = vmatpush1.msra.mxu0 0.0
    %770 = vmatprep.subr.mxu0 0.0
    %771 = vmatpush1.msra.mxu0 %v574
    %772 = vmatprep.subr.mxu0 0.0
    %773 = vmatpush1.msra.mxu0 %v573
    %774 = vmatprep.subr.mxu0 0.0
    %775 = vmatpush1.msra.mxu0 %v572
    %776 = vmatprep.subr.mxu0 0.0
    %777 = vmatpush1.msra.mxu0 %v571
    %778 = vmatprep.subr.mxu0 0.0
    %779 = vmatpush2.msra.mxu0 0.0
    %780 = vmatprep.subr.mxu0 0.0
    %781 = vmatpush2.msra.mxu0 0.0
    %782 = vmatprep.subr.mxu0 0.0
    %783 = vmatpush2.msra.mxu0 0.0
    %784 = vmatprep.subr.mxu0 0.0
    %785 = vmatpush2.msra.mxu0 0.0
    %786 = vmatprep.subr.mxu0 0.0
    %787 = vmatpush2.msra.mxu0 0.0
    %788 = vmatprep.subr.mxu0 0.0
    %789 = vmatpush2.msra.mxu0 0.0
    %790 = vmatprep.subr.mxu0 0.0
    %791 = vmatpush2.msra.mxu0 0.0
    %792 = vmatprep.subr.mxu0 0.0
    %793 = vmatpush2.msra.mxu0 0.0
    %794 = vmatprep.subr.mxu0 0.0
    %795 = vmatpush2.msra.mxu0 0.0
    %796 = vmatprep.subr.mxu0 0.0
    %797 = vmatpush2.msra.mxu0 0.0
    %798 = vmatprep.subr.mxu0 0.0
    %799 = vmatpush2.msra.mxu0 0.0
    %800 = vmatprep.subr.mxu0 0.0
    %801 = vmatpush2.msra.mxu0 0.0
    %802 = vmatprep.subr.mxu0 0.0
    %803 = vmatpush2.msra.mxu0 0.0
    %804 = vmatprep.subr.mxu0 0.0
    %805 = vmatpush2.msra.mxu0 0.0
    %806 = vmatprep.subr.mxu0 0.0
    %807 = vmatpush2.msra.mxu0 0.0
    %808 = vmatprep.subr.mxu0 0.0
    %809 = vmatpush2.msra.mxu0 0.0
    %810 = vmatprep.mubr.f32.mxu0 0.0
    %811 = vmatmul.mubr.f32.gmra.mxu0 %v598
    %v812 = vpop.f32.mrf.mxu0
    %v813 = vadd.f32 %v744, %v812
    %v814 = vpop.f32.mrf.mxu0
    %815 = vdwg.mxu0
    %v817 = vrot.slane %v667, 1
    %v818 = vrot.slane %v667, 2
    %v819 = vrot.slane %v667, 3
    %v820 = vrot.slane %v667, 4
    %v821 = vrot.slane %v667, 5
    %v822 = vrot.slane %v667, 6
    %v823 = vrot.slane %v667, 7
    %v832 = vadd.f32 %v287, %v667
    %v833 = vadd.f32 %v292, %v817
    %v834 = vadd.f32 %v297, %v818
    %v835 = vadd.f32 %v302, %v819
    %v836 = vadd.f32 %v307, %v820
    %v837 = vadd.f32 %v312, %v821
    %v838 = vadd.f32 %v317, %v822
    %v839 = vadd.f32 %v322, %v823
    %v840 = vxor.u32 %v832, 2147483648
    %v841 = vxor.u32 %v833, 2147483648
    %v842 = vxor.u32 %v834, 2147483648
    %v843 = vxor.u32 %v835, 2147483648
    %v844 = vxor.u32 %v836, 2147483648
    %v845 = vxor.u32 %v837, 2147483648
    %v846 = vxor.u32 %v838, 2147483648
    %v847 = vxor.u32 %v839, 2147483648
    %v848 = vmul.f32 %v840, 1.442695
    %v849 = vpow.pop %v848
    %v850 = vmul.f32 %v841, 1.442695
    %v851 = vpow.pop %v850
    %v852 = vmul.f32 %v842, 1.442695
    %v853 = vpow.pop %v852
    %v854 = vmul.f32 %v843, 1.442695
    %v855 = vpow.pop %v854
    %v856 = vmul.f32 %v844, 1.442695
    %v857 = vpow.pop %v856
    %v858 = vmul.f32 %v845, 1.442695
    %v859 = vpow.pop %v858
    %v860 = vmul.f32 %v846, 1.442695
    %v861 = vpow.pop %v860
    %v862 = vmul.f32 %v847, 1.442695
    %v863 = vpow.pop %v862
    %v864 = vadd.f32 %v849, 1.0
    %v865 = vadd.f32 %v851, 1.0
    %v866 = vadd.f32 %v853, 1.0
    %v867 = vadd.f32 %v855, 1.0
    %v868 = vadd.f32 %v857, 1.0
    %v869 = vadd.f32 %v859, 1.0
    %v870 = vadd.f32 %v861, 1.0
    %v871 = vadd.f32 %v863, 1.0
    %v872 = vrcp.pop %v864
    %v873 = vmul.f32 1.0, %v872
    %v874 = vrcp.pop %v865
    %v875 = vmul.f32 1.0, %v874
    %v876 = vrcp.pop %v866
    %v877 = vmul.f32 1.0, %v876
    %v878 = vrcp.pop %v867
    %v879 = vmul.f32 1.0, %v878
    %v880 = vrcp.pop %v868
    %v881 = vmul.f32 1.0, %v880
    %v882 = vrcp.pop %v869
    %v883 = vmul.f32 1.0, %v882
    %v884 = vrcp.pop %v870
    %v885 = vmul.f32 1.0, %v884
    %v886 = vrcp.pop %v871
    %v887 = vmul.f32 1.0, %v886
    %v889 = vrot.slane %v737, 1
    %v890 = vrot.slane %v737, 2
    %v891 = vrot.slane %v737, 3
    %v892 = vrot.slane %v737, 4
    %v893 = vrot.slane %v737, 5
    %v894 = vrot.slane %v737, 6
    %v895 = vrot.slane %v737, 7
    %v904 = vadd.f32 %v405, %v737
    %v905 = vadd.f32 %v410, %v889
    %v906 = vadd.f32 %v415, %v890
    %v907 = vadd.f32 %v420, %v891
    %v908 = vadd.f32 %v425, %v892
    %v909 = vadd.f32 %v430, %v893
    %v910 = vadd.f32 %v435, %v894
    %v911 = vadd.f32 %v440, %v895
    %v912 = vxor.u32 %v904, 2147483648
    %v913 = vxor.u32 %v905, 2147483648
    %v914 = vxor.u32 %v906, 2147483648
    %v915 = vxor.u32 %v907, 2147483648
    %v916 = vxor.u32 %v908, 2147483648
    %v917 = vxor.u32 %v909, 2147483648
    %v918 = vxor.u32 %v910, 2147483648
    %v919 = vxor.u32 %v911, 2147483648
    %v920 = vmul.f32 %v912, 1.442695
    %v921 = vpow.pop %v920
    %v922 = vmul.f32 %v913, 1.442695
    %v923 = vpow.pop %v922
    %v924 = vmul.f32 %v914, 1.442695
    %v925 = vpow.pop %v924
    %v926 = vmul.f32 %v915, 1.442695
    %v927 = vpow.pop %v926
    %v928 = vmul.f32 %v916, 1.442695
    %v929 = vpow.pop %v928
    %v930 = vmul.f32 %v917, 1.442695
    %v931 = vpow.pop %v930
    %v932 = vmul.f32 %v918, 1.442695
    %v933 = vpow.pop %v932
    %v934 = vmul.f32 %v919, 1.442695
    %v935 = vpow.pop %v934
    %v936 = vadd.f32 %v921, 1.0
    %v937 = vadd.f32 %v923, 1.0
    %v938 = vadd.f32 %v925, 1.0
    %v939 = vadd.f32 %v927, 1.0
    %v940 = vadd.f32 %v929, 1.0
    %v941 = vadd.f32 %v931, 1.0
    %v942 = vadd.f32 %v933, 1.0
    %v943 = vadd.f32 %v935, 1.0
    %v944 = vrcp.pop %v936
    %v945 = vmul.f32 1.0, %v944
    %v946 = vrcp.pop %v937
    %v947 = vmul.f32 1.0, %v946
    %v948 = vrcp.pop %v938
    %v949 = vmul.f32 1.0, %v948
    %v950 = vrcp.pop %v939
    %v951 = vmul.f32 1.0, %v950
    %v952 = vrcp.pop %v940
    %v953 = vmul.f32 1.0, %v952
    %v954 = vrcp.pop %v941
    %v955 = vmul.f32 1.0, %v954
    %v956 = vrcp.pop %v942
    %v957 = vmul.f32 1.0, %v956
    %v958 = vrcp.pop %v943
    %v959 = vmul.f32 1.0, %v958
    %v961 = vrot.slane %v813, 1
    %v962 = vrot.slane %v813, 2
    %v963 = vrot.slane %v813, 3
    %v964 = vrot.slane %v813, 4
    %v965 = vrot.slane %v813, 5
    %v966 = vrot.slane %v813, 6
    %v967 = vrot.slane %v813, 7
    %v976 = vmul.f32 %v873, %v813
    %v977 = vmul.f32 %v875, %v961
    %v978 = vmul.f32 %v877, %v962
    %v979 = vmul.f32 %v879, %v963
    %v980 = vmul.f32 %v881, %v964
    %v981 = vmul.f32 %v883, %v965
    %v982 = vmul.f32 %v885, %v966
    %v983 = vmul.f32 %v887, %v967
    %v984 = vadd.f32 %v523, %v976
    %v985 = vadd.f32 %v528, %v977
    %v986 = vadd.f32 %v533, %v978
    %v987 = vadd.f32 %v538, %v979
    %v988 = vadd.f32 %v543, %v980
    %v989 = vadd.f32 %v548, %v981
    %v990 = vadd.f32 %v553, %v982
    %v991 = vadd.f32 %v558, %v983
    %v992 = vtanh.pop %v984
    %v993 = vtanh.pop %v985
    %v994 = vtanh.pop %v986
    %v995 = vtanh.pop %v987
    %v996 = vtanh.pop %v988
    %v997 = vtanh.pop %v989
    %v998 = vtanh.pop %v990
    %v999 = vtanh.pop %v991
    %v1000 = vsub.f32 1.0, %v945
    %v1001 = vsub.f32 1.0, %v947
    %v1002 = vsub.f32 1.0, %v949
    %v1003 = vsub.f32 1.0, %v951
    %v1004 = vsub.f32 1.0, %v953
    %v1005 = vsub.f32 1.0, %v955
    %v1006 = vsub.f32 1.0, %v957
    %v1007 = vsub.f32 1.0, %v959
    %v1008 = vmul.f32 %v1000, %v992
    %v1009 = vmul.f32 %v1001, %v993
    %v1010 = vmul.f32 %v1002, %v994
    %v1011 = vmul.f32 %v1003, %v995
    %v1012 = vmul.f32 %v1004, %v996
    %v1013 = vmul.f32 %v1005, %v997
    %v1014 = vmul.f32 %v1006, %v998
    %v1015 = vmul.f32 %v1007, %v999
    %v1016 = vmul.f32 %v945, %v167
    %v1017 = vmul.f32 %v947, %v168
    %v1018 = vmul.f32 %v949, %v169
    %v1019 = vmul.f32 %v951, %v170
    %v1020 = vmul.f32 %v953, %v171
    %v1021 = vmul.f32 %v955, %v172
    %v1022 = vmul.f32 %v957, %v173
    %v1023 = vmul.f32 %v959, %v174
    %v1024 = vadd.f32 %v1008, %v1016
    %v1025 = vadd.f32 %v1009, %v1017
    %v1026 = vadd.f32 %v1010, %v1018
    %v1027 = vadd.f32 %v1011, %v1019
    %v1028 = vadd.f32 %v1012, %v1020
    %v1029 = vadd.f32 %v1013, %v1021
    %v1030 = vadd.f32 %v1014, %v1022
    %v1031 = vadd.f32 %v1015, %v1023
    %vm1032 = vcmp.gt.s32.totalorder %v175, 0
    %v1033 = vsel %vm1032, 1, 0
    %1034 = vset.pattern.permute.xlu0 0
    %1035 = vperm.xlu0 %1034, %v1033
    %v1036 = vpop.permute.xlu0 %1035
    %vm1037 = vcmp.eq.s32.totalorder %v1036, 1
    %v1046 = vrot.slane %v1025, 7
    %v1047 = vsel %vm584, %v1046, %v1024
    %v1048 = vrot.slane %v1026, 6
    %v1049 = vsel %vm586, %v1048, %v1047
    %v1050 = vrot.slane %v1027, 5
    %v1051 = vsel %vm588, %v1050, %v1049
    %v1052 = vrot.slane %v1028, 4
    %v1053 = vsel %vm590, %v1052, %v1051
    %v1054 = vrot.slane %v1029, 3
    %v1055 = vsel %vm592, %v1054, %v1053
    %v1056 = vrot.slane %v1030, 2
    %v1057 = vsel %vm594, %v1056, %v1055
    %v1058 = vrot.slane %v1031, 1
    %v1059 = vsel %vm596, %v1058, %v1057
    %v1062 = vsel %vm1037, %v1059, %v597
    %v1064 = vsel %vm195, %v1062, 0
    %1066 = vmatprep.subr.mxu0 0.0
    %1067 = vmatpush1.msra.mxu0 0.0
    %1068 = vmatprep.subr.mxu0 0.0
    %1069 = vmatpush1.msra.mxu0 0.0
    %1070 = vmatprep.subr.mxu0 0.0
    %1071 = vmatpush1.msra.mxu0 0.0
    %1072 = vmatprep.subr.mxu0 0.0
    %1073 = vmatpush1.msra.mxu0 0.0
    %1074 = vmatprep.subr.mxu0 0.0
    %1075 = vmatpush1.msra.mxu0 0.0
    %1076 = vmatprep.subr.mxu0 0.0
    %1077 = vmatpush1.msra.mxu0 0.0
    %1078 = vmatprep.subr.mxu0 0.0
    %1079 = vmatpush1.msra.mxu0 0.0
    %1080 = vmatprep.subr.mxu0 0.0
    %1081 = vmatpush1.msra.mxu0 0.0
    %1082 = vmatprep.subr.mxu0 0.0
    %1083 = vmatpush1.msra.mxu0 0.0
    %1084 = vmatprep.subr.mxu0 0.0
    %1085 = vmatpush1.msra.mxu0 0.0
    %1086 = vmatprep.subr.mxu0 0.0
    %1087 = vmatpush1.msra.mxu0 0.0
    %1088 = vmatprep.subr.mxu0 0.0
    %1089 = vmatpush1.msra.mxu0 0.0
    %1090 = vmatprep.subr.mxu0 0.0
    %1091 = vmatpush1.msra.mxu0 %v564
    %1092 = vmatprep.subr.mxu0 0.0
    %1093 = vmatpush1.msra.mxu0 %v563
    %1094 = vmatprep.subr.mxu0 0.0
    %1095 = vmatpush1.msra.mxu0 %v562
    %1096 = vmatprep.subr.mxu0 0.0
    %1097 = vmatpush1.msra.mxu0 %v561
    %1098 = vmatprep.subr.mxu0 0.0
    %1099 = vmatpush2.msra.mxu0 0.0
    %1100 = vmatprep.subr.mxu0 0.0
    %1101 = vmatpush2.msra.mxu0 0.0
    %1102 = vmatprep.subr.mxu0 0.0
    %1103 = vmatpush2.msra.mxu0 0.0
    %1104 = vmatprep.subr.mxu0 0.0
    %1105 = vmatpush2.msra.mxu0 0.0
    %1106 = vmatprep.subr.mxu0 0.0
    %1107 = vmatpush2.msra.mxu0 0.0
    %1108 = vmatprep.subr.mxu0 0.0
    %1109 = vmatpush2.msra.mxu0 0.0
    %1110 = vmatprep.subr.mxu0 0.0
    %1111 = vmatpush2.msra.mxu0 0.0
    %1112 = vmatprep.subr.mxu0 0.0
    %1113 = vmatpush2.msra.mxu0 0.0
    %1114 = vmatprep.subr.mxu0 0.0
    %1115 = vmatpush2.msra.mxu0 0.0
    %1116 = vmatprep.subr.mxu0 0.0
    %1117 = vmatpush2.msra.mxu0 0.0
    %1118 = vmatprep.subr.mxu0 0.0
    %1119 = vmatpush2.msra.mxu0 0.0
    %1120 = vmatprep.subr.mxu0 0.0
    %1121 = vmatpush2.msra.mxu0 0.0
    %1122 = vmatprep.subr.mxu0 0.0
    %1123 = vmatpush2.msra.mxu0 0.0
    %1124 = vmatprep.subr.mxu0 0.0
    %1125 = vmatpush2.msra.mxu0 0.0
    %1126 = vmatprep.subr.mxu0 0.0
    %1127 = vmatpush2.msra.mxu0 0.0
    %1128 = vmatprep.subr.mxu0 0.0
    %1129 = vmatpush2.msra.mxu0 0.0
    %1130 = vmatprep.mubr.f32.mxu0 0.0
    %1131 = vmatmul.mubr.f32.gmra.mxu0 %v1064
    %v1132 = vpop.f32.mrf.mxu0
    %v1133 = vadd.f32 0.0, %v1132
    %v1134 = vpop.f32.mrf.mxu0
    %1135 = vdwg.mxu0
    %1136 = vmatprep.subr.mxu0 0.0
    %1137 = vmatpush1.msra.mxu0 0.0
    %1138 = vmatprep.subr.mxu0 0.0
    %1139 = vmatpush1.msra.mxu0 0.0
    %1140 = vmatprep.subr.mxu0 0.0
    %1141 = vmatpush1.msra.mxu0 0.0
    %1142 = vmatprep.subr.mxu0 0.0
    %1143 = vmatpush1.msra.mxu0 0.0
    %1144 = vmatprep.subr.mxu0 0.0
    %1145 = vmatpush1.msra.mxu0 0.0
    %1146 = vmatprep.subr.mxu0 0.0
    %1147 = vmatpush1.msra.mxu0 0.0
    %1148 = vmatprep.subr.mxu0 0.0
    %1149 = vmatpush1.msra.mxu0 0.0
    %1150 = vmatprep.subr.mxu0 0.0
    %1151 = vmatpush1.msra.mxu0 0.0
    %1152 = vmatprep.subr.mxu0 0.0
    %1153 = vmatpush1.msra.mxu0 0.0
    %1154 = vmatprep.subr.mxu0 0.0
    %1155 = vmatpush1.msra.mxu0 0.0
    %1156 = vmatprep.subr.mxu0 0.0
    %1157 = vmatpush1.msra.mxu0 0.0
    %1158 = vmatprep.subr.mxu0 0.0
    %1159 = vmatpush1.msra.mxu0 0.0
    %1160 = vmatprep.subr.mxu0 0.0
    %1161 = vmatpush1.msra.mxu0 %v569
    %1162 = vmatprep.subr.mxu0 0.0
    %1163 = vmatpush1.msra.mxu0 %v568
    %1164 = vmatprep.subr.mxu0 0.0
    %1165 = vmatpush1.msra.mxu0 %v567
    %1166 = vmatprep.subr.mxu0 0.0
    %1167 = vmatpush1.msra.mxu0 %v566
    %1168 = vmatprep.subr.mxu0 0.0
    %1169 = vmatpush2.msra.mxu0 0.0
    %1170 = vmatprep.subr.mxu0 0.0
    %1171 = vmatpush2.msra.mxu0 0.0
    %1172 = vmatprep.subr.mxu0 0.0
    %1173 = vmatpush2.msra.mxu0 0.0
    %1174 = vmatprep.subr.mxu0 0.0
    %1175 = vmatpush2.msra.mxu0 0.0
    %1176 = vmatprep.subr.mxu0 0.0
    %1177 = vmatpush2.msra.mxu0 0.0
    %1178 = vmatprep.subr.mxu0 0.0
    %1179 = vmatpush2.msra.mxu0 0.0
    %1180 = vmatprep.subr.mxu0 0.0
    %1181 = vmatpush2.msra.mxu0 0.0
    %1182 = vmatprep.subr.mxu0 0.0
    %1183 = vmatpush2.msra.mxu0 0.0
    %1184 = vmatprep.subr.mxu0 0.0
    %1185 = vmatpush2.msra.mxu0 0.0
    %1186 = vmatprep.subr.mxu0 0.0
    %1187 = vmatpush2.msra.mxu0 0.0
    %1188 = vmatprep.subr.mxu0 0.0
    %1189 = vmatpush2.msra.mxu0 0.0
    %1190 = vmatprep.subr.mxu0 0.0
    %1191 = vmatpush2.msra.mxu0 0.0
    %1192 = vmatprep.subr.mxu0 0.0
    %1193 = vmatpush2.msra.mxu0 0.0
    %1194 = vmatprep.subr.mxu0 0.0
    %1195 = vmatpush2.msra.mxu0 0.0
    %1196 = vmatprep.subr.mxu0 0.0
    %1197 = vmatpush2.msra.mxu0 0.0
    %1198 = vmatprep.subr.mxu0 0.0
    %1199 = vmatpush2.msra.mxu0 0.0
    %1200 = vmatprep.mubr.f32.mxu0 0.0
    %1201 = vmatmul.mubr.f32.gmra.mxu0 %v1064
    %v1202 = vpop.f32.mrf.mxu0
    %v1203 = vadd.f32 0.0, %v1202
    %v1204 = vpop.f32.mrf.mxu0
    %1205 = vdwg.mxu0
    %1206 = vmatprep.subr.mxu0 0.0
    %1207 = vmatpush1.msra.mxu0 0.0
    %1208 = vmatprep.subr.mxu0 0.0
    %1209 = vmatpush1.msra.mxu0 0.0
    %1210 = vmatprep.subr.mxu0 0.0
    %1211 = vmatpush1.msra.mxu0 0.0
    %1212 = vmatprep.subr.mxu0 0.0
    %1213 = vmatpush1.msra.mxu0 0.0
    %1214 = vmatprep.subr.mxu0 0.0
    %1215 = vmatpush1.msra.mxu0 0.0
    %1216 = vmatprep.subr.mxu0 0.0
    %1217 = vmatpush1.msra.mxu0 0.0
    %1218 = vmatprep.subr.mxu0 0.0
    %1219 = vmatpush1.msra.mxu0 0.0
    %1220 = vmatprep.subr.mxu0 0.0
    %1221 = vmatpush1.msra.mxu0 0.0
    %1222 = vmatprep.subr.mxu0 0.0
    %1223 = vmatpush1.msra.mxu0 0.0
    %1224 = vmatprep.subr.mxu0 0.0
    %1225 = vmatpush1.msra.mxu0 0.0
    %1226 = vmatprep.subr.mxu0 0.0
    %1227 = vmatpush1.msra.mxu0 0.0
    %1228 = vmatprep.subr.mxu0 0.0
    %1229 = vmatpush1.msra.mxu0 0.0
    %1230 = vmatprep.subr.mxu0 0.0
    %1231 = vmatpush1.msra.mxu0 %v574
    %1232 = vmatprep.subr.mxu0 0.0
    %1233 = vmatpush1.msra.mxu0 %v573
    %1234 = vmatprep.subr.mxu0 0.0
    %1235 = vmatpush1.msra.mxu0 %v572
    %1236 = vmatprep.subr.mxu0 0.0
    %1237 = vmatpush1.msra.mxu0 %v571
    %1238 = vmatprep.subr.mxu0 0.0
    %1239 = vmatpush2.msra.mxu0 0.0
    %1240 = vmatprep.subr.mxu0 0.0
    %1241 = vmatpush2.msra.mxu0 0.0
    %1242 = vmatprep.subr.mxu0 0.0
    %1243 = vmatpush2.msra.mxu0 0.0
    %1244 = vmatprep.subr.mxu0 0.0
    %1245 = vmatpush2.msra.mxu0 0.0
    %1246 = vmatprep.subr.mxu0 0.0
    %1247 = vmatpush2.msra.mxu0 0.0
    %1248 = vmatprep.subr.mxu0 0.0
    %1249 = vmatpush2.msra.mxu0 0.0
    %1250 = vmatprep.subr.mxu0 0.0
    %1251 = vmatpush2.msra.mxu0 0.0
    %1252 = vmatprep.subr.mxu0 0.0
    %1253 = vmatpush2.msra.mxu0 0.0
    %1254 = vmatprep.subr.mxu0 0.0
    %1255 = vmatpush2.msra.mxu0 0.0
    %1256 = vmatprep.subr.mxu0 0.0
    %1257 = vmatpush2.msra.mxu0 0.0
    %1258 = vmatprep.subr.mxu0 0.0
    %1259 = vmatpush2.msra.mxu0 0.0
    %1260 = vmatprep.subr.mxu0 0.0
    %1261 = vmatpush2.msra.mxu0 0.0
    %1262 = vmatprep.subr.mxu0 0.0
    %1263 = vmatpush2.msra.mxu0 0.0
    %1264 = vmatprep.subr.mxu0 0.0
    %1265 = vmatpush2.msra.mxu0 0.0
    %1266 = vmatprep.subr.mxu0 0.0
    %1267 = vmatpush2.msra.mxu0 0.0
    %1268 = vmatprep.subr.mxu0 0.0
    %1269 = vmatpush2.msra.mxu0 0.0
    %1270 = vmatprep.mubr.f32.mxu0 0.0
    %1271 = vmatmul.mubr.f32.gmra.mxu0 %v1064
    %v1272 = vpop.f32.mrf.mxu0
    %v1273 = vadd.f32 %v744, %v1272
    %v1274 = vpop.f32.mrf.mxu0
    %1275 = vdwg.mxu0
    %v1277 = vrot.slane %v1133, 7
    %v1278 = vrot.slane %v1133, 1
    %v1279 = vrot.slane %v1133, 2
    %v1280 = vrot.slane %v1133, 3
    %v1281 = vrot.slane %v1133, 4
    %v1282 = vrot.slane %v1133, 5
    %v1283 = vrot.slane %v1133, 6
    %v1292 = vadd.f32 %v287, %v1277
    %v1293 = vadd.f32 %v292, %v1133
    %v1294 = vadd.f32 %v297, %v1278
    %v1295 = vadd.f32 %v302, %v1279
    %v1296 = vadd.f32 %v307, %v1280
    %v1297 = vadd.f32 %v312, %v1281
    %v1298 = vadd.f32 %v317, %v1282
    %v1299 = vadd.f32 %v322, %v1283
    %v1300 = vxor.u32 %v1292, 2147483648
    %v1301 = vxor.u32 %v1293, 2147483648
    %v1302 = vxor.u32 %v1294, 2147483648
    %v1303 = vxor.u32 %v1295, 2147483648
    %v1304 = vxor.u32 %v1296, 2147483648
    %v1305 = vxor.u32 %v1297, 2147483648
    %v1306 = vxor.u32 %v1298, 2147483648
    %v1307 = vxor.u32 %v1299, 2147483648
    %v1308 = vmul.f32 %v1300, 1.442695
    %v1309 = vpow.pop %v1308
    %v1310 = vmul.f32 %v1301, 1.442695
    %v1311 = vpow.pop %v1310
    %v1312 = vmul.f32 %v1302, 1.442695
    %v1313 = vpow.pop %v1312
    %v1314 = vmul.f32 %v1303, 1.442695
    %v1315 = vpow.pop %v1314
    %v1316 = vmul.f32 %v1304, 1.442695
    %v1317 = vpow.pop %v1316
    %v1318 = vmul.f32 %v1305, 1.442695
    %v1319 = vpow.pop %v1318
    %v1320 = vmul.f32 %v1306, 1.442695
    %v1321 = vpow.pop %v1320
    %v1322 = vmul.f32 %v1307, 1.442695
    %v1323 = vpow.pop %v1322
    %v1324 = vadd.f32 %v1309, 1.0
    %v1325 = vadd.f32 %v1311, 1.0
    %v1326 = vadd.f32 %v1313, 1.0
    %v1327 = vadd.f32 %v1315, 1.0
    %v1328 = vadd.f32 %v1317, 1.0
    %v1329 = vadd.f32 %v1319, 1.0
    %v1330 = vadd.f32 %v1321, 1.0
    %v1331 = vadd.f32 %v1323, 1.0
    %v1332 = vrcp.pop %v1324
    %v1333 = vmul.f32 1.0, %v1332
    %v1334 = vrcp.pop %v1325
    %v1335 = vmul.f32 1.0, %v1334
    %v1336 = vrcp.pop %v1326
    %v1337 = vmul.f32 1.0, %v1336
    %v1338 = vrcp.pop %v1327
    %v1339 = vmul.f32 1.0, %v1338
    %v1340 = vrcp.pop %v1328
    %v1341 = vmul.f32 1.0, %v1340
    %v1342 = vrcp.pop %v1329
    %v1343 = vmul.f32 1.0, %v1342
    %v1344 = vrcp.pop %v1330
    %v1345 = vmul.f32 1.0, %v1344
    %v1346 = vrcp.pop %v1331
    %v1347 = vmul.f32 1.0, %v1346
    %v1349 = vrot.slane %v1203, 7
    %v1350 = vrot.slane %v1203, 1
    %v1351 = vrot.slane %v1203, 2
    %v1352 = vrot.slane %v1203, 3
    %v1353 = vrot.slane %v1203, 4
    %v1354 = vrot.slane %v1203, 5
    %v1355 = vrot.slane %v1203, 6
    %v1364 = vadd.f32 %v405, %v1349
    %v1365 = vadd.f32 %v410, %v1203
    %v1366 = vadd.f32 %v415, %v1350
    %v1367 = vadd.f32 %v420, %v1351
    %v1368 = vadd.f32 %v425, %v1352
    %v1369 = vadd.f32 %v430, %v1353
    %v1370 = vadd.f32 %v435, %v1354
    %v1371 = vadd.f32 %v440, %v1355
    %v1372 = vxor.u32 %v1364, 2147483648
    %v1373 = vxor.u32 %v1365, 2147483648
    %v1374 = vxor.u32 %v1366, 2147483648
    %v1375 = vxor.u32 %v1367, 2147483648
    %v1376 = vxor.u32 %v1368, 2147483648
    %v1377 = vxor.u32 %v1369, 2147483648
    %v1378 = vxor.u32 %v1370, 2147483648
    %v1379 = vxor.u32 %v1371, 2147483648
    %v1380 = vmul.f32 %v1372, 1.442695
    %v1381 = vpow.pop %v1380
    %v1382 = vmul.f32 %v1373, 1.442695
    %v1383 = vpow.pop %v1382
    %v1384 = vmul.f32 %v1374, 1.442695
    %v1385 = vpow.pop %v1384
    %v1386 = vmul.f32 %v1375, 1.442695
    %v1387 = vpow.pop %v1386
    %v1388 = vmul.f32 %v1376, 1.442695
    %v1389 = vpow.pop %v1388
    %v1390 = vmul.f32 %v1377, 1.442695
    %v1391 = vpow.pop %v1390
    %v1392 = vmul.f32 %v1378, 1.442695
    %v1393 = vpow.pop %v1392
    %v1394 = vmul.f32 %v1379, 1.442695
    %v1395 = vpow.pop %v1394
    %v1396 = vadd.f32 %v1381, 1.0
    %v1397 = vadd.f32 %v1383, 1.0
    %v1398 = vadd.f32 %v1385, 1.0
    %v1399 = vadd.f32 %v1387, 1.0
    %v1400 = vadd.f32 %v1389, 1.0
    %v1401 = vadd.f32 %v1391, 1.0
    %v1402 = vadd.f32 %v1393, 1.0
    %v1403 = vadd.f32 %v1395, 1.0
    %v1404 = vrcp.pop %v1396
    %v1405 = vmul.f32 1.0, %v1404
    %v1406 = vrcp.pop %v1397
    %v1407 = vmul.f32 1.0, %v1406
    %v1408 = vrcp.pop %v1398
    %v1409 = vmul.f32 1.0, %v1408
    %v1410 = vrcp.pop %v1399
    %v1411 = vmul.f32 1.0, %v1410
    %v1412 = vrcp.pop %v1400
    %v1413 = vmul.f32 1.0, %v1412
    %v1414 = vrcp.pop %v1401
    %v1415 = vmul.f32 1.0, %v1414
    %v1416 = vrcp.pop %v1402
    %v1417 = vmul.f32 1.0, %v1416
    %v1418 = vrcp.pop %v1403
    %v1419 = vmul.f32 1.0, %v1418
    %v1421 = vrot.slane %v1273, 7
    %v1422 = vrot.slane %v1273, 1
    %v1423 = vrot.slane %v1273, 2
    %v1424 = vrot.slane %v1273, 3
    %v1425 = vrot.slane %v1273, 4
    %v1426 = vrot.slane %v1273, 5
    %v1427 = vrot.slane %v1273, 6
    %v1436 = vmul.f32 %v1333, %v1421
    %v1437 = vmul.f32 %v1335, %v1273
    %v1438 = vmul.f32 %v1337, %v1422
    %v1439 = vmul.f32 %v1339, %v1423
    %v1440 = vmul.f32 %v1341, %v1424
    %v1441 = vmul.f32 %v1343, %v1425
    %v1442 = vmul.f32 %v1345, %v1426
    %v1443 = vmul.f32 %v1347, %v1427
    %v1444 = vadd.f32 %v523, %v1436
    %v1445 = vadd.f32 %v528, %v1437
    %v1446 = vadd.f32 %v533, %v1438
    %v1447 = vadd.f32 %v538, %v1439
    %v1448 = vadd.f32 %v543, %v1440
    %v1449 = vadd.f32 %v548, %v1441
    %v1450 = vadd.f32 %v553, %v1442
    %v1451 = vadd.f32 %v558, %v1443
    %v1452 = vtanh.pop %v1444
    %v1453 = vtanh.pop %v1445
    %v1454 = vtanh.pop %v1446
    %v1455 = vtanh.pop %v1447
    %v1456 = vtanh.pop %v1448
    %v1457 = vtanh.pop %v1449
    %v1458 = vtanh.pop %v1450
    %v1459 = vtanh.pop %v1451
    %v1460 = vsub.f32 1.0, %v1405
    %v1461 = vsub.f32 1.0, %v1407
    %v1462 = vsub.f32 1.0, %v1409
    %v1463 = vsub.f32 1.0, %v1411
    %v1464 = vsub.f32 1.0, %v1413
    %v1465 = vsub.f32 1.0, %v1415
    %v1466 = vsub.f32 1.0, %v1417
    %v1467 = vsub.f32 1.0, %v1419
    %v1468 = vmul.f32 %v1460, %v1452
    %v1469 = vmul.f32 %v1461, %v1453
    %v1470 = vmul.f32 %v1462, %v1454
    %v1471 = vmul.f32 %v1463, %v1455
    %v1472 = vmul.f32 %v1464, %v1456
    %v1473 = vmul.f32 %v1465, %v1457
    %v1474 = vmul.f32 %v1466, %v1458
    %v1475 = vmul.f32 %v1467, %v1459
    %v1476 = vrot.slane %v1062, 7
    %v1477 = vrot.slane %v1062, 1
    %v1478 = vrot.slane %v1062, 2
    %v1479 = vrot.slane %v1062, 3
    %v1480 = vrot.slane %v1062, 4
    %v1481 = vrot.slane %v1062, 5
    %v1482 = vrot.slane %v1062, 6
    %v1491 = vmul.f32 %v1405, %v1476
    %v1492 = vmul.f32 %v1407, %v1062
    %v1493 = vmul.f32 %v1409, %v1477
    %v1494 = vmul.f32 %v1411, %v1478
    %v1495 = vmul.f32 %v1413, %v1479
    %v1496 = vmul.f32 %v1415, %v1480
    %v1497 = vmul.f32 %v1417, %v1481
    %v1498 = vmul.f32 %v1419, %v1482
    %v1499 = vadd.f32 %v1468, %v1491
    %v1500 = vadd.f32 %v1469, %v1492
    %v1501 = vadd.f32 %v1470, %v1493
    %v1502 = vadd.f32 %v1471, %v1494
    %v1503 = vadd.f32 %v1472, %v1495
    %v1504 = vadd.f32 %v1473, %v1496
    %v1505 = vadd.f32 %v1474, %v1497
    %v1506 = vadd.f32 %v1475, %v1498
    %vm1507 = vcmp.gt.s32.totalorder %v175, 1
    %v1508 = vsel %vm1507, 1, 0
    %1509 = vset.pattern.permute.xlu0 0
    %1510 = vperm.xlu0 %1509, %v1508
    %v1511 = vpop.permute.xlu0 %1510
    %vm1512 = vcmp.eq.s32.totalorder %v1511, 1
    %v1521 = vrot.slane %v1499, 1
    %v1522 = vsel %vm584, %v1500, %v1521
    %v1523 = vrot.slane %v1501, 7
    %v1524 = vsel %vm586, %v1523, %v1522
    %v1525 = vrot.slane %v1502, 6
    %v1526 = vsel %vm588, %v1525, %v1524
    %v1527 = vrot.slane %v1503, 5
    %v1528 = vsel %vm590, %v1527, %v1526
    %v1529 = vrot.slane %v1504, 4
    %v1530 = vsel %vm592, %v1529, %v1528
    %v1531 = vrot.slane %v1505, 3
    %v1532 = vsel %vm594, %v1531, %v1530
    %v1533 = vrot.slane %v1506, 2
    %v1534 = vsel %vm596, %v1533, %v1532
    %v1536 = vsel %vm1512, %v1534, %v1062
    %v1538 = vsel %vm195, %v1536, 0
    %1540 = vmatprep.subr.mxu0 0.0
    %1541 = vmatpush1.msra.mxu0 0.0
    %1542 = vmatprep.subr.mxu0 0.0
    %1543 = vmatpush1.msra.mxu0 0.0
    %1544 = vmatprep.subr.mxu0 0.0
    %1545 = vmatpush1.msra.mxu0 0.0
    %1546 = vmatprep.subr.mxu0 0.0
    %1547 = vmatpush1.msra.mxu0 0.0
    %1548 = vmatprep.subr.mxu0 0.0
    %1549 = vmatpush1.msra.mxu0 0.0
    %1550 = vmatprep.subr.mxu0 0.0
    %1551 = vmatpush1.msra.mxu0 0.0
    %1552 = vmatprep.subr.mxu0 0.0
    %1553 = vmatpush1.msra.mxu0 0.0
    %1554 = vmatprep.subr.mxu0 0.0
    %1555 = vmatpush1.msra.mxu0 0.0
    %1556 = vmatprep.subr.mxu0 0.0
    %1557 = vmatpush1.msra.mxu0 0.0
    %1558 = vmatprep.subr.mxu0 0.0
    %1559 = vmatpush1.msra.mxu0 0.0
    %1560 = vmatprep.subr.mxu0 0.0
    %1561 = vmatpush1.msra.mxu0 0.0
    %1562 = vmatprep.subr.mxu0 0.0
    %1563 = vmatpush1.msra.mxu0 0.0
    %1564 = vmatprep.subr.mxu0 0.0
    %1565 = vmatpush1.msra.mxu0 %v564
    %1566 = vmatprep.subr.mxu0 0.0
    %1567 = vmatpush1.msra.mxu0 %v563
    %1568 = vmatprep.subr.mxu0 0.0
    %1569 = vmatpush1.msra.mxu0 %v562
    %1570 = vmatprep.subr.mxu0 0.0
    %1571 = vmatpush1.msra.mxu0 %v561
    %1572 = vmatprep.subr.mxu0 0.0
    %1573 = vmatpush2.msra.mxu0 0.0
    %1574 = vmatprep.subr.mxu0 0.0
    %1575 = vmatpush2.msra.mxu0 0.0
    %1576 = vmatprep.subr.mxu0 0.0
    %1577 = vmatpush2.msra.mxu0 0.0
    %1578 = vmatprep.subr.mxu0 0.0
    %1579 = vmatpush2.msra.mxu0 0.0
    %1580 = vmatprep.subr.mxu0 0.0
    %1581 = vmatpush2.msra.mxu0 0.0
    %1582 = vmatprep.subr.mxu0 0.0
    %1583 = vmatpush2.msra.mxu0 0.0
    %1584 = vmatprep.subr.mxu0 0.0
    %1585 = vmatpush2.msra.mxu0 0.0
    %1586 = vmatprep.subr.mxu0 0.0
    %1587 = vmatpush2.msra.mxu0 0.0
    %1588 = vmatprep.subr.mxu0 0.0
    %1589 = vmatpush2.msra.mxu0 0.0
    %1590 = vmatprep.subr.mxu0 0.0
    %1591 = vmatpush2.msra.mxu0 0.0
    %1592 = vmatprep.subr.mxu0 0.0
    %1593 = vmatpush2.msra.mxu0 0.0
    %1594 = vmatprep.subr.mxu0 0.0
    %1595 = vmatpush2.msra.mxu0 0.0
    %1596 = vmatprep.subr.mxu0 0.0
    %1597 = vmatpush2.msra.mxu0 0.0
    %1598 = vmatprep.subr.mxu0 0.0
    %1599 = vmatpush2.msra.mxu0 0.0
    %1600 = vmatprep.subr.mxu0 0.0
    %1601 = vmatpush2.msra.mxu0 0.0
    %1602 = vmatprep.subr.mxu0 0.0
    %1603 = vmatpush2.msra.mxu0 0.0
    %1604 = vmatprep.mubr.f32.mxu0 0.0
    %1605 = vmatmul.mubr.f32.gmra.mxu0 %v1538
    %v1606 = vpop.f32.mrf.mxu0
    %v1607 = vadd.f32 0.0, %v1606
    %v1608 = vpop.f32.mrf.mxu0
    %1609 = vdwg.mxu0
    %1610 = vmatprep.subr.mxu0 0.0
    %1611 = vmatpush1.msra.mxu0 0.0
    %1612 = vmatprep.subr.mxu0 0.0
    %1613 = vmatpush1.msra.mxu0 0.0
    %1614 = vmatprep.subr.mxu0 0.0
    %1615 = vmatpush1.msra.mxu0 0.0
    %1616 = vmatprep.subr.mxu0 0.0
    %1617 = vmatpush1.msra.mxu0 0.0
    %1618 = vmatprep.subr.mxu0 0.0
    %1619 = vmatpush1.msra.mxu0 0.0
    %1620 = vmatprep.subr.mxu0 0.0
    %1621 = vmatpush1.msra.mxu0 0.0
    %1622 = vmatprep.subr.mxu0 0.0
    %1623 = vmatpush1.msra.mxu0 0.0
    %1624 = vmatprep.subr.mxu0 0.0
    %1625 = vmatpush1.msra.mxu0 0.0
    %1626 = vmatprep.subr.mxu0 0.0
    %1627 = vmatpush1.msra.mxu0 0.0
    %1628 = vmatprep.subr.mxu0 0.0
    %1629 = vmatpush1.msra.mxu0 0.0
    %1630 = vmatprep.subr.mxu0 0.0
    %1631 = vmatpush1.msra.mxu0 0.0
    %1632 = vmatprep.subr.mxu0 0.0
    %1633 = vmatpush1.msra.mxu0 0.0
    %1634 = vmatprep.subr.mxu0 0.0
    %1635 = vmatpush1.msra.mxu0 %v569
    %1636 = vmatprep.subr.mxu0 0.0
    %1637 = vmatpush1.msra.mxu0 %v568
    %1638 = vmatprep.subr.mxu0 0.0
    %1639 = vmatpush1.msra.mxu0 %v567
    %1640 = vmatprep.subr.mxu0 0.0
    %1641 = vmatpush1.msra.mxu0 %v566
    %1642 = vmatprep.subr.mxu0 0.0
    %1643 = vmatpush2.msra.mxu0 0.0
    %1644 = vmatprep.subr.mxu0 0.0
    %1645 = vmatpush2.msra.mxu0 0.0
    %1646 = vmatprep.subr.mxu0 0.0
    %1647 = vmatpush2.msra.mxu0 0.0
    %1648 = vmatprep.subr.mxu0 0.0
    %1649 = vmatpush2.msra.mxu0 0.0
    %1650 = vmatprep.subr.mxu0 0.0
    %1651 = vmatpush2.msra.mxu0 0.0
    %1652 = vmatprep.subr.mxu0 0.0
    %1653 = vmatpush2.msra.mxu0 0.0
    %1654 = vmatprep.subr.mxu0 0.0
    %1655 = vmatpush2.msra.mxu0 0.0
    %1656 = vmatprep.subr.mxu0 0.0
    %1657 = vmatpush2.msra.mxu0 0.0
    %1658 = vmatprep.subr.mxu0 0.0
    %1659 = vmatpush2.msra.mxu0 0.0
    %1660 = vmatprep.subr.mxu0 0.0
    %1661 = vmatpush2.msra.mxu0 0.0
    %1662 = vmatprep.subr.mxu0 0.0
    %1663 = vmatpush2.msra.mxu0 0.0
    %1664 = vmatprep.subr.mxu0 0.0
    %1665 = vmatpush2.msra.mxu0 0.0
    %1666 = vmatprep.subr.mxu0 0.0
    %1667 = vmatpush2.msra.mxu0 0.0
    %1668 = vmatprep.subr.mxu0 0.0
    %1669 = vmatpush2.msra.mxu0 0.0
    %1670 = vmatprep.subr.mxu0 0.0
    %1671 = vmatpush2.msra.mxu0 0.0
    %1672 = vmatprep.subr.mxu0 0.0
    %1673 = vmatpush2.msra.mxu0 0.0
    %1674 = vmatprep.mubr.f32.mxu0 0.0
    %1675 = vmatmul.mubr.f32.gmra.mxu0 %v1538
    %v1676 = vpop.f32.mrf.mxu0
    %v1677 = vadd.f32 0.0, %v1676
    %v1678 = vpop.f32.mrf.mxu0
    %1679 = vdwg.mxu0
    %1680 = vmatprep.subr.mxu0 0.0
    %1681 = vmatpush1.msra.mxu0 0.0
    %1682 = vmatprep.subr.mxu0 0.0
    %1683 = vmatpush1.msra.mxu0 0.0
    %1684 = vmatprep.subr.mxu0 0.0
    %1685 = vmatpush1.msra.mxu0 0.0
    %1686 = vmatprep.subr.mxu0 0.0
    %1687 = vmatpush1.msra.mxu0 0.0
    %1688 = vmatprep.subr.mxu0 0.0
    %1689 = vmatpush1.msra.mxu0 0.0
    %1690 = vmatprep.subr.mxu0 0.0
    %1691 = vmatpush1.msra.mxu0 0.0
    %1692 = vmatprep.subr.mxu0 0.0
    %1693 = vmatpush1.msra.mxu0 0.0
    %1694 = vmatprep.subr.mxu0 0.0
    %1695 = vmatpush1.msra.mxu0 0.0
    %1696 = vmatprep.subr.mxu0 0.0
    %1697 = vmatpush1.msra.mxu0 0.0
    %1698 = vmatprep.subr.mxu0 0.0
    %1699 = vmatpush1.msra.mxu0 0.0
    %1700 = vmatprep.subr.mxu0 0.0
    %1701 = vmatpush1.msra.mxu0 0.0
    %1702 = vmatprep.subr.mxu0 0.0
    %1703 = vmatpush1.msra.mxu0 0.0
    %1704 = vmatprep.subr.mxu0 0.0
    %1705 = vmatpush1.msra.mxu0 %v574
    %1706 = vmatprep.subr.mxu0 0.0
    %1707 = vmatpush1.msra.mxu0 %v573
    %1708 = vmatprep.subr.mxu0 0.0
    %1709 = vmatpush1.msra.mxu0 %v572
    %1710 = vmatprep.subr.mxu0 0.0
    %1711 = vmatpush1.msra.mxu0 %v571
    %1712 = vmatprep.subr.mxu0 0.0
    %1713 = vmatpush2.msra.mxu0 0.0
    %1714 = vmatprep.subr.mxu0 0.0
    %1715 = vmatpush2.msra.mxu0 0.0
    %1716 = vmatprep.subr.mxu0 0.0
    %1717 = vmatpush2.msra.mxu0 0.0
    %1718 = vmatprep.subr.mxu0 0.0
    %1719 = vmatpush2.msra.mxu0 0.0
    %1720 = vmatprep.subr.mxu0 0.0
    %1721 = vmatpush2.msra.mxu0 0.0
    %1722 = vmatprep.subr.mxu0 0.0
    %1723 = vmatpush2.msra.mxu0 0.0
    %1724 = vmatprep.subr.mxu0 0.0
    %1725 = vmatpush2.msra.mxu0 0.0
    %1726 = vmatprep.subr.mxu0 0.0
    %1727 = vmatpush2.msra.mxu0 0.0
    %1728 = vmatprep.subr.mxu0 0.0
    %1729 = vmatpush2.msra.mxu0 0.0
    %1730 = vmatprep.subr.mxu0 0.0
    %1731 = vmatpush2.msra.mxu0 0.0
    %1732 = vmatprep.subr.mxu0 0.0
    %1733 = vmatpush2.msra.mxu0 0.0
    %1734 = vmatprep.subr.mxu0 0.0
    %1735 = vmatpush2.msra.mxu0 0.0
    %1736 = vmatprep.subr.mxu0 0.0
    %1737 = vmatpush2.msra.mxu0 0.0
    %1738 = vmatprep.subr.mxu0 0.0
    %1739 = vmatpush2.msra.mxu0 0.0
    %1740 = vmatprep.subr.mxu0 0.0
    %1741 = vmatpush2.msra.mxu0 0.0
    %1742 = vmatprep.subr.mxu0 0.0
    %1743 = vmatpush2.msra.mxu0 0.0
    %1744 = vmatprep.mubr.f32.mxu0 0.0
    %1745 = vmatmul.mubr.f32.gmra.mxu0 %v1538
    %v1746 = vpop.f32.mrf.mxu0
    %v1747 = vadd.f32 %v744, %v1746
    %v1748 = vpop.f32.mrf.mxu0
    %1749 = vdwg.mxu0
    %v1751 = vrot.slane %v1607, 6
    %v1752 = vrot.slane %v1607, 7
    %v1753 = vrot.slane %v1607, 1
    %v1754 = vrot.slane %v1607, 2
    %v1755 = vrot.slane %v1607, 3
    %v1756 = vrot.slane %v1607, 4
    %v1757 = vrot.slane %v1607, 5
    %v1766 = vadd.f32 %v287, %v1751
    %v1767 = vadd.f32 %v292, %v1752
    %v1768 = vadd.f32 %v297, %v1607
    %v1769 = vadd.f32 %v302, %v1753
    %v1770 = vadd.f32 %v307, %v1754
    %v1771 = vadd.f32 %v312, %v1755
    %v1772 = vadd.f32 %v317, %v1756
    %v1773 = vadd.f32 %v322, %v1757
    %v1774 = vxor.u32 %v1766, 2147483648
    %v1775 = vxor.u32 %v1767, 2147483648
    %v1776 = vxor.u32 %v1768, 2147483648
    %v1777 = vxor.u32 %v1769, 2147483648
    %v1778 = vxor.u32 %v1770, 2147483648
    %v1779 = vxor.u32 %v1771, 2147483648
    %v1780 = vxor.u32 %v1772, 2147483648
    %v1781 = vxor.u32 %v1773, 2147483648
    %v1782 = vmul.f32 %v1774, 1.442695
    %v1783 = vpow.pop %v1782
    %v1784 = vmul.f32 %v1775, 1.442695
    %v1785 = vpow.pop %v1784
    %v1786 = vmul.f32 %v1776, 1.442695
    %v1787 = vpow.pop %v1786
    %v1788 = vmul.f32 %v1777, 1.442695
    %v1789 = vpow.pop %v1788
    %v1790 = vmul.f32 %v1778, 1.442695
    %v1791 = vpow.pop %v1790
    %v1792 = vmul.f32 %v1779, 1.442695
    %v1793 = vpow.pop %v1792
    %v1794 = vmul.f32 %v1780, 1.442695
    %v1795 = vpow.pop %v1794
    %v1796 = vmul.f32 %v1781, 1.442695
    %v1797 = vpow.pop %v1796
    %v1798 = vadd.f32 %v1783, 1.0
    %v1799 = vadd.f32 %v1785, 1.0
    %v1800 = vadd.f32 %v1787, 1.0
    %v1801 = vadd.f32 %v1789, 1.0
    %v1802 = vadd.f32 %v1791, 1.0
    %v1803 = vadd.f32 %v1793, 1.0
    %v1804 = vadd.f32 %v1795, 1.0
    %v1805 = vadd.f32 %v1797, 1.0
    %v1806 = vrcp.pop %v1798
    %v1807 = vmul.f32 1.0, %v1806
    %v1808 = vrcp.pop %v1799
    %v1809 = vmul.f32 1.0, %v1808
    %v1810 = vrcp.pop %v1800
    %v1811 = vmul.f32 1.0, %v1810
    %v1812 = vrcp.pop %v1801
    %v1813 = vmul.f32 1.0, %v1812
    %v1814 = vrcp.pop %v1802
    %v1815 = vmul.f32 1.0, %v1814
    %v1816 = vrcp.pop %v1803
    %v1817 = vmul.f32 1.0, %v1816
    %v1818 = vrcp.pop %v1804
    %v1819 = vmul.f32 1.0, %v1818
    %v1820 = vrcp.pop %v1805
    %v1821 = vmul.f32 1.0, %v1820
    %v1823 = vrot.slane %v1677, 6
    %v1824 = vrot.slane %v1677, 7
    %v1825 = vrot.slane %v1677, 1
    %v1826 = vrot.slane %v1677, 2
    %v1827 = vrot.slane %v1677, 3
    %v1828 = vrot.slane %v1677, 4
    %v1829 = vrot.slane %v1677, 5
    %v1838 = vadd.f32 %v405, %v1823
    %v1839 = vadd.f32 %v410, %v1824
    %v1840 = vadd.f32 %v415, %v1677
    %v1841 = vadd.f32 %v420, %v1825
    %v1842 = vadd.f32 %v425, %v1826
    %v1843 = vadd.f32 %v430, %v1827
    %v1844 = vadd.f32 %v435, %v1828
    %v1845 = vadd.f32 %v440, %v1829
    %v1846 = vxor.u32 %v1838, 2147483648
    %v1847 = vxor.u32 %v1839, 2147483648
    %v1848 = vxor.u32 %v1840, 2147483648
    %v1849 = vxor.u32 %v1841, 2147483648
    %v1850 = vxor.u32 %v1842, 2147483648
    %v1851 = vxor.u32 %v1843, 2147483648
    %v1852 = vxor.u32 %v1844, 2147483648
    %v1853 = vxor.u32 %v1845, 2147483648
    %v1854 = vmul.f32 %v1846, 1.442695
    %v1855 = vpow.pop %v1854
    %v1856 = vmul.f32 %v1847, 1.442695
    %v1857 = vpow.pop %v1856
    %v1858 = vmul.f32 %v1848, 1.442695
    %v1859 = vpow.pop %v1858
    %v1860 = vmul.f32 %v1849, 1.442695
    %v1861 = vpow.pop %v1860
    %v1862 = vmul.f32 %v1850, 1.442695
    %v1863 = vpow.pop %v1862
    %v1864 = vmul.f32 %v1851, 1.442695
    %v1865 = vpow.pop %v1864
    %v1866 = vmul.f32 %v1852, 1.442695
    %v1867 = vpow.pop %v1866
    %v1868 = vmul.f32 %v1853, 1.442695
    %v1869 = vpow.pop %v1868
    %v1870 = vadd.f32 %v1855, 1.0
    %v1871 = vadd.f32 %v1857, 1.0
    %v1872 = vadd.f32 %v1859, 1.0
    %v1873 = vadd.f32 %v1861, 1.0
    %v1874 = vadd.f32 %v1863, 1.0
    %v1875 = vadd.f32 %v1865, 1.0
    %v1876 = vadd.f32 %v1867, 1.0
    %v1877 = vadd.f32 %v1869, 1.0
    %v1878 = vrcp.pop %v1870
    %v1879 = vmul.f32 1.0, %v1878
    %v1880 = vrcp.pop %v1871
    %v1881 = vmul.f32 1.0, %v1880
    %v1882 = vrcp.pop %v1872
    %v1883 = vmul.f32 1.0, %v1882
    %v1884 = vrcp.pop %v1873
    %v1885 = vmul.f32 1.0, %v1884
    %v1886 = vrcp.pop %v1874
    %v1887 = vmul.f32 1.0, %v1886
    %v1888 = vrcp.pop %v1875
    %v1889 = vmul.f32 1.0, %v1888
    %v1890 = vrcp.pop %v1876
    %v1891 = vmul.f32 1.0, %v1890
    %v1892 = vrcp.pop %v1877
    %v1893 = vmul.f32 1.0, %v1892
    %v1895 = vrot.slane %v1747, 6
    %v1896 = vrot.slane %v1747, 7
    %v1897 = vrot.slane %v1747, 1
    %v1898 = vrot.slane %v1747, 2
    %v1899 = vrot.slane %v1747, 3
    %v1900 = vrot.slane %v1747, 4
    %v1901 = vrot.slane %v1747, 5
    %v1910 = vmul.f32 %v1807, %v1895
    %v1911 = vmul.f32 %v1809, %v1896
    %v1912 = vmul.f32 %v1811, %v1747
    %v1913 = vmul.f32 %v1813, %v1897
    %v1914 = vmul.f32 %v1815, %v1898
    %v1915 = vmul.f32 %v1817, %v1899
    %v1916 = vmul.f32 %v1819, %v1900
    %v1917 = vmul.f32 %v1821, %v1901
    %v1918 = vadd.f32 %v523, %v1910
    %v1919 = vadd.f32 %v528, %v1911
    %v1920 = vadd.f32 %v533, %v1912
    %v1921 = vadd.f32 %v538, %v1913
    %v1922 = vadd.f32 %v543, %v1914
    %v1923 = vadd.f32 %v548, %v1915
    %v1924 = vadd.f32 %v553, %v1916
    %v1925 = vadd.f32 %v558, %v1917
    %v1926 = vtanh.pop %v1918
    %v1927 = vtanh.pop %v1919
    %v1928 = vtanh.pop %v1920
    %v1929 = vtanh.pop %v1921
    %v1930 = vtanh.pop %v1922
    %v1931 = vtanh.pop %v1923
    %v1932 = vtanh.pop %v1924
    %v1933 = vtanh.pop %v1925
    %v1934 = vsub.f32 1.0, %v1879
    %v1935 = vsub.f32 1.0, %v1881
    %v1936 = vsub.f32 1.0, %v1883
    %v1937 = vsub.f32 1.0, %v1885
    %v1938 = vsub.f32 1.0, %v1887
    %v1939 = vsub.f32 1.0, %v1889
    %v1940 = vsub.f32 1.0, %v1891
    %v1941 = vsub.f32 1.0, %v1893
    %v1942 = vmul.f32 %v1934, %v1926
    %v1943 = vmul.f32 %v1935, %v1927
    %v1944 = vmul.f32 %v1936, %v1928
    %v1945 = vmul.f32 %v1937, %v1929
    %v1946 = vmul.f32 %v1938, %v1930
    %v1947 = vmul.f32 %v1939, %v1931
    %v1948 = vmul.f32 %v1940, %v1932
    %v1949 = vmul.f32 %v1941, %v1933
    %v1950 = vrot.slane %v1536, 6
    %v1951 = vrot.slane %v1536, 7
    %v1952 = vrot.slane %v1536, 1
    %v1953 = vrot.slane %v1536, 2
    %v1954 = vrot.slane %v1536, 3
    %v1955 = vrot.slane %v1536, 4
    %v1956 = vrot.slane %v1536, 5
    %v1965 = vmul.f32 %v1879, %v1950
    %v1966 = vmul.f32 %v1881, %v1951
    %v1967 = vmul.f32 %v1883, %v1536
    %v1968 = vmul.f32 %v1885, %v1952
    %v1969 = vmul.f32 %v1887, %v1953
    %v1970 = vmul.f32 %v1889, %v1954
    %v1971 = vmul.f32 %v1891, %v1955
    %v1972 = vmul.f32 %v1893, %v1956
    %v1973 = vadd.f32 %v1942, %v1965
    %v1974 = vadd.f32 %v1943, %v1966
    %v1975 = vadd.f32 %v1944, %v1967
    %v1976 = vadd.f32 %v1945, %v1968
    %v1977 = vadd.f32 %v1946, %v1969
    %v1978 = vadd.f32 %v1947, %v1970
    %v1979 = vadd.f32 %v1948, %v1971
    %v1980 = vadd.f32 %v1949, %v1972
    %vm1981 = vcmp.gt.s32.totalorder %v175, 2
    %v1982 = vsel %vm1981, 1, 0
    %1983 = vset.pattern.permute.xlu0 0
    %1984 = vperm.xlu0 %1983, %v1982
    %v1985 = vpop.permute.xlu0 %1984
    %vm1986 = vcmp.eq.s32.totalorder %v1985, 1
    %v1995 = vrot.slane %v1973, 2
    %v1996 = vrot.slane %v1974, 1
    %v1997 = vsel %vm584, %v1996, %v1995
    %v1998 = vsel %vm586, %v1975, %v1997
    %v1999 = vrot.slane %v1976, 7
    %v2000 = vsel %vm588, %v1999, %v1998
    %v2001 = vrot.slane %v1977, 6
    %v2002 = vsel %vm590, %v2001, %v2000
    %v2003 = vrot.slane %v1978, 5
    %v2004 = vsel %vm592, %v2003, %v2002
    %v2005 = vrot.slane %v1979, 4
    %v2006 = vsel %vm594, %v2005, %v2004
    %v2007 = vrot.slane %v1980, 3
    %v2008 = vsel %vm596, %v2007, %v2006
    %v2010 = vsel %vm1986, %v2008, %v1536
    %v2012 = vsel %vm195, %v2010, 0
    %2014 = vmatprep.subr.mxu0 0.0
    %2015 = vmatpush1.msra.mxu0 0.0
    %2016 = vmatprep.subr.mxu0 0.0
    %2017 = vmatpush1.msra.mxu0 0.0
    %2018 = vmatprep.subr.mxu0 0.0
    %2019 = vmatpush1.msra.mxu0 0.0
    %2020 = vmatprep.subr.mxu0 0.0
    %2021 = vmatpush1.msra.mxu0 0.0
    %2022 = vmatprep.subr.mxu0 0.0
    %2023 = vmatpush1.msra.mxu0 0.0
    %2024 = vmatprep.subr.mxu0 0.0
    %2025 = vmatpush1.msra.mxu0 0.0
    %2026 = vmatprep.subr.mxu0 0.0
    %2027 = vmatpush1.msra.mxu0 0.0
    %2028 = vmatprep.subr.mxu0 0.0
    %2029 = vmatpush1.msra.mxu0 0.0
    %2030 = vmatprep.subr.mxu0 0.0
    %2031 = vmatpush1.msra.mxu0 0.0
    %2032 = vmatprep.subr.mxu0 0.0
    %2033 = vmatpush1.msra.mxu0 0.0
    %2034 = vmatprep.subr.mxu0 0.0
    %2035 = vmatpush1.msra.mxu0 0.0
    %2036 = vmatprep.subr.mxu0 0.0
    %2037 = vmatpush1.msra.mxu0 0.0
    %2038 = vmatprep.subr.mxu0 0.0
    %2039 = vmatpush1.msra.mxu0 %v564
    %2040 = vmatprep.subr.mxu0 0.0
    %2041 = vmatpush1.msra.mxu0 %v563
    %2042 = vmatprep.subr.mxu0 0.0
    %2043 = vmatpush1.msra.mxu0 %v562
    %2044 = vmatprep.subr.mxu0 0.0
    %2045 = vmatpush1.msra.mxu0 %v561
    %2046 = vmatprep.subr.mxu0 0.0
    %2047 = vmatpush2.msra.mxu0 0.0
    %2048 = vmatprep.subr.mxu0 0.0
    %2049 = vmatpush2.msra.mxu0 0.0
    %2050 = vmatprep.subr.mxu0 0.0
    %2051 = vmatpush2.msra.mxu0 0.0
    %2052 = vmatprep.subr.mxu0 0.0
    %2053 = vmatpush2.msra.mxu0 0.0
    %2054 = vmatprep.subr.mxu0 0.0
    %2055 = vmatpush2.msra.mxu0 0.0
    %2056 = vmatprep.subr.mxu0 0.0
    %2057 = vmatpush2.msra.mxu0 0.0
    %2058 = vmatprep.subr.mxu0 0.0
    %2059 = vmatpush2.msra.mxu0 0.0
    %2060 = vmatprep.subr.mxu0 0.0
    %2061 = vmatpush2.msra.mxu0 0.0
    %2062 = vmatprep.subr.mxu0 0.0
    %2063 = vmatpush2.msra.mxu0 0.0
    %2064 = vmatprep.subr.mxu0 0.0
    %2065 = vmatpush2.msra.mxu0 0.0
    %2066 = vmatprep.subr.mxu0 0.0
    %2067 = vmatpush2.msra.mxu0 0.0
    %2068 = vmatprep.subr.mxu0 0.0
    %2069 = vmatpush2.msra.mxu0 0.0
    %2070 = vmatprep.subr.mxu0 0.0
    %2071 = vmatpush2.msra.mxu0 0.0
    %2072 = vmatprep.subr.mxu0 0.0
    %2073 = vmatpush2.msra.mxu0 0.0
    %2074 = vmatprep.subr.mxu0 0.0
    %2075 = vmatpush2.msra.mxu0 0.0
    %2076 = vmatprep.subr.mxu0 0.0
    %2077 = vmatpush2.msra.mxu0 0.0
    %2078 = vmatprep.mubr.f32.mxu0 0.0
    %2079 = vmatmul.mubr.f32.gmra.mxu0 %v2012
    %v2080 = vpop.f32.mrf.mxu0
    %v2081 = vadd.f32 0.0, %v2080
    %v2082 = vpop.f32.mrf.mxu0
    %2083 = vdwg.mxu0
    %2084 = vmatprep.subr.mxu0 0.0
    %2085 = vmatpush1.msra.mxu0 0.0
    %2086 = vmatprep.subr.mxu0 0.0
    %2087 = vmatpush1.msra.mxu0 0.0
    %2088 = vmatprep.subr.mxu0 0.0
    %2089 = vmatpush1.msra.mxu0 0.0
    %2090 = vmatprep.subr.mxu0 0.0
    %2091 = vmatpush1.msra.mxu0 0.0
    %2092 = vmatprep.subr.mxu0 0.0
    %2093 = vmatpush1.msra.mxu0 0.0
    %2094 = vmatprep.subr.mxu0 0.0
    %2095 = vmatpush1.msra.mxu0 0.0
    %2096 = vmatprep.subr.mxu0 0.0
    %2097 = vmatpush1.msra.mxu0 0.0
    %2098 = vmatprep.subr.mxu0 0.0
    %2099 = vmatpush1.msra.mxu0 0.0
    %2100 = vmatprep.subr.mxu0 0.0
    %2101 = vmatpush1.msra.mxu0 0.0
    %2102 = vmatprep.subr.mxu0 0.0
    %2103 = vmatpush1.msra.mxu0 0.0
    %2104 = vmatprep.subr.mxu0 0.0
    %2105 = vmatpush1.msra.mxu0 0.0
    %2106 = vmatprep.subr.mxu0 0.0
    %2107 = vmatpush1.msra.mxu0 0.0
    %2108 = vmatprep.subr.mxu0 0.0
    %2109 = vmatpush1.msra.mxu0 %v569
    %2110 = vmatprep.subr.mxu0 0.0
    %2111 = vmatpush1.msra.mxu0 %v568
    %2112 = vmatprep.subr.mxu0 0.0
    %2113 = vmatpush1.msra.mxu0 %v567
    %2114 = vmatprep.subr.mxu0 0.0
    %2115 = vmatpush1.msra.mxu0 %v566
    %2116 = vmatprep.subr.mxu0 0.0
    %2117 = vmatpush2.msra.mxu0 0.0
    %2118 = vmatprep.subr.mxu0 0.0
    %2119 = vmatpush2.msra.mxu0 0.0
    %2120 = vmatprep.subr.mxu0 0.0
    %2121 = vmatpush2.msra.mxu0 0.0
    %2122 = vmatprep.subr.mxu0 0.0
    %2123 = vmatpush2.msra.mxu0 0.0
    %2124 = vmatprep.subr.mxu0 0.0
    %2125 = vmatpush2.msra.mxu0 0.0
    %2126 = vmatprep.subr.mxu0 0.0
    %2127 = vmatpush2.msra.mxu0 0.0
    %2128 = vmatprep.subr.mxu0 0.0
    %2129 = vmatpush2.msra.mxu0 0.0
    %2130 = vmatprep.subr.mxu0 0.0
    %2131 = vmatpush2.msra.mxu0 0.0
    %2132 = vmatprep.subr.mxu0 0.0
    %2133 = vmatpush2.msra.mxu0 0.0
    %2134 = vmatprep.subr.mxu0 0.0
    %2135 = vmatpush2.msra.mxu0 0.0
    %2136 = vmatprep.subr.mxu0 0.0
    %2137 = vmatpush2.msra.mxu0 0.0
    %2138 = vmatprep.subr.mxu0 0.0
    %2139 = vmatpush2.msra.mxu0 0.0
    %2140 = vmatprep.subr.mxu0 0.0
    %2141 = vmatpush2.msra.mxu0 0.0
    %2142 = vmatprep.subr.mxu0 0.0
    %2143 = vmatpush2.msra.mxu0 0.0
    %2144 = vmatprep.subr.mxu0 0.0
    %2145 = vmatpush2.msra.mxu0 0.0
    %2146 = vmatprep.subr.mxu0 0.0
    %2147 = vmatpush2.msra.mxu0 0.0
    %2148 = vmatprep.mubr.f32.mxu0 0.0
    %2149 = vmatmul.mubr.f32.gmra.mxu0 %v2012
    %v2150 = vpop.f32.mrf.mxu0
    %v2151 = vadd.f32 0.0, %v2150
    %v2152 = vpop.f32.mrf.mxu0
    %2153 = vdwg.mxu0
    %2154 = vmatprep.subr.mxu0 0.0
    %2155 = vmatpush1.msra.mxu0 0.0
    %2156 = vmatprep.subr.mxu0 0.0
    %2157 = vmatpush1.msra.mxu0 0.0
    %2158 = vmatprep.subr.mxu0 0.0
    %2159 = vmatpush1.msra.mxu0 0.0
    %2160 = vmatprep.subr.mxu0 0.0
    %2161 = vmatpush1.msra.mxu0 0.0
    %2162 = vmatprep.subr.mxu0 0.0
    %2163 = vmatpush1.msra.mxu0 0.0
    %2164 = vmatprep.subr.mxu0 0.0
    %2165 = vmatpush1.msra.mxu0 0.0
    %2166 = vmatprep.subr.mxu0 0.0
    %2167 = vmatpush1.msra.mxu0 0.0
    %2168 = vmatprep.subr.mxu0 0.0
    %2169 = vmatpush1.msra.mxu0 0.0
    %2170 = vmatprep.subr.mxu0 0.0
    %2171 = vmatpush1.msra.mxu0 0.0
    %2172 = vmatprep.subr.mxu0 0.0
    %2173 = vmatpush1.msra.mxu0 0.0
    %2174 = vmatprep.subr.mxu0 0.0
    %2175 = vmatpush1.msra.mxu0 0.0
    %2176 = vmatprep.subr.mxu0 0.0
    %2177 = vmatpush1.msra.mxu0 0.0
    %2178 = vmatprep.subr.mxu0 0.0
    %2179 = vmatpush1.msra.mxu0 %v574
    %2180 = vmatprep.subr.mxu0 0.0
    %2181 = vmatpush1.msra.mxu0 %v573
    %2182 = vmatprep.subr.mxu0 0.0
    %2183 = vmatpush1.msra.mxu0 %v572
    %2184 = vmatprep.subr.mxu0 0.0
    %2185 = vmatpush1.msra.mxu0 %v571
    %2186 = vmatprep.subr.mxu0 0.0
    %2187 = vmatpush2.msra.mxu0 0.0
    %2188 = vmatprep.subr.mxu0 0.0
    %2189 = vmatpush2.msra.mxu0 0.0
    %2190 = vmatprep.subr.mxu0 0.0
    %2191 = vmatpush2.msra.mxu0 0.0
    %2192 = vmatprep.subr.mxu0 0.0
    %2193 = vmatpush2.msra.mxu0 0.0
    %2194 = vmatprep.subr.mxu0 0.0
    %2195 = vmatpush2.msra.mxu0 0.0
    %2196 = vmatprep.subr.mxu0 0.0
    %2197 = vmatpush2.msra.mxu0 0.0
    %2198 = vmatprep.subr.mxu0 0.0
    %2199 = vmatpush2.msra.mxu0 0.0
    %2200 = vmatprep.subr.mxu0 0.0
    %2201 = vmatpush2.msra.mxu0 0.0
    %2202 = vmatprep.subr.mxu0 0.0
    %2203 = vmatpush2.msra.mxu0 0.0
    %2204 = vmatprep.subr.mxu0 0.0
    %2205 = vmatpush2.msra.mxu0 0.0
    %2206 = vmatprep.subr.mxu0 0.0
    %2207 = vmatpush2.msra.mxu0 0.0
    %2208 = vmatprep.subr.mxu0 0.0
    %2209 = vmatpush2.msra.mxu0 0.0
    %2210 = vmatprep.subr.mxu0 0.0
    %2211 = vmatpush2.msra.mxu0 0.0
    %2212 = vmatprep.subr.mxu0 0.0
    %2213 = vmatpush2.msra.mxu0 0.0
    %2214 = vmatprep.subr.mxu0 0.0
    %2215 = vmatpush2.msra.mxu0 0.0
    %2216 = vmatprep.subr.mxu0 0.0
    %2217 = vmatpush2.msra.mxu0 0.0
    %2218 = vmatprep.mubr.f32.mxu0 0.0
    %2219 = vmatmul.mubr.f32.gmra.mxu0 %v2012
    %v2220 = vpop.f32.mrf.mxu0
    %v2221 = vadd.f32 %v744, %v2220
    %v2222 = vpop.f32.mrf.mxu0
    %2223 = vdwg.mxu0
    %v2225 = vrot.slane %v2081, 5
    %v2226 = vrot.slane %v2081, 6
    %v2227 = vrot.slane %v2081, 7
    %v2228 = vrot.slane %v2081, 1
    %v2229 = vrot.slane %v2081, 2
    %v2230 = vrot.slane %v2081, 3
    %v2231 = vrot.slane %v2081, 4
    %v2240 = vadd.f32 %v287, %v2225
    %v2241 = vadd.f32 %v292, %v2226
    %v2242 = vadd.f32 %v297, %v2227
    %v2243 = vadd.f32 %v302, %v2081
    %v2244 = vadd.f32 %v307, %v2228
    %v2245 = vadd.f32 %v312, %v2229
    %v2246 = vadd.f32 %v317, %v2230
    %v2247 = vadd.f32 %v322, %v2231
    %v2248 = vxor.u32 %v2240, 2147483648
    %v2249 = vxor.u32 %v2241, 2147483648
    %v2250 = vxor.u32 %v2242, 2147483648
    %v2251 = vxor.u32 %v2243, 2147483648
    %v2252 = vxor.u32 %v2244, 2147483648
    %v2253 = vxor.u32 %v2245, 2147483648
    %v2254 = vxor.u32 %v2246, 2147483648
    %v2255 = vxor.u32 %v2247, 2147483648
    %v2256 = vmul.f32 %v2248, 1.442695
    %v2257 = vpow.pop %v2256
    %v2258 = vmul.f32 %v2249, 1.442695
    %v2259 = vpow.pop %v2258
    %v2260 = vmul.f32 %v2250, 1.442695
    %v2261 = vpow.pop %v2260
    %v2262 = vmul.f32 %v2251, 1.442695
    %v2263 = vpow.pop %v2262
    %v2264 = vmul.f32 %v2252, 1.442695
    %v2265 = vpow.pop %v2264
    %v2266 = vmul.f32 %v2253, 1.442695
    %v2267 = vpow.pop %v2266
    %v2268 = vmul.f32 %v2254, 1.442695
    %v2269 = vpow.pop %v2268
    %v2270 = vmul.f32 %v2255, 1.442695
    %v2271 = vpow.pop %v2270
    %v2272 = vadd.f32 %v2257, 1.0
    %v2273 = vadd.f32 %v2259, 1.0
    %v2274 = vadd.f32 %v2261, 1.0
    %v2275 = vadd.f32 %v2263, 1.0
    %v2276 = vadd.f32 %v2265, 1.0
    %v2277 = vadd.f32 %v2267, 1.0
    %v2278 = vadd.f32 %v2269, 1.0
    %v2279 = vadd.f32 %v2271, 1.0
    %v2280 = vrcp.pop %v2272
    %v2281 = vmul.f32 1.0, %v2280
    %v2282 = vrcp.pop %v2273
    %v2283 = vmul.f32 1.0, %v2282
    %v2284 = vrcp.pop %v2274
    %v2285 = vmul.f32 1.0, %v2284
    %v2286 = vrcp.pop %v2275
    %v2287 = vmul.f32 1.0, %v2286
    %v2288 = vrcp.pop %v2276
    %v2289 = vmul.f32 1.0, %v2288
    %v2290 = vrcp.pop %v2277
    %v2291 = vmul.f32 1.0, %v2290
    %v2292 = vrcp.pop %v2278
    %v2293 = vmul.f32 1.0, %v2292
    %v2294 = vrcp.pop %v2279
    %v2295 = vmul.f32 1.0, %v2294
    %v2297 = vrot.slane %v2151, 5
    %v2298 = vrot.slane %v2151, 6
    %v2299 = vrot.slane %v2151, 7
    %v2300 = vrot.slane %v2151, 1
    %v2301 = vrot.slane %v2151, 2
    %v2302 = vrot.slane %v2151, 3
    %v2303 = vrot.slane %v2151, 4
    %v2312 = vadd.f32 %v405, %v2297
    %v2313 = vadd.f32 %v410, %v2298
    %v2314 = vadd.f32 %v415, %v2299
    %v2315 = vadd.f32 %v420, %v2151
    %v2316 = vadd.f32 %v425, %v2300
    %v2317 = vadd.f32 %v430, %v2301
    %v2318 = vadd.f32 %v435, %v2302
    %v2319 = vadd.f32 %v440, %v2303
    %v2320 = vxor.u32 %v2312, 2147483648
    %v2321 = vxor.u32 %v2313, 2147483648
    %v2322 = vxor.u32 %v2314, 2147483648
    %v2323 = vxor.u32 %v2315, 2147483648
    %v2324 = vxor.u32 %v2316, 2147483648
    %v2325 = vxor.u32 %v2317, 2147483648
    %v2326 = vxor.u32 %v2318, 2147483648
    %v2327 = vxor.u32 %v2319, 2147483648
    %v2328 = vmul.f32 %v2320, 1.442695
    %v2329 = vpow.pop %v2328
    %v2330 = vmul.f32 %v2321, 1.442695
    %v2331 = vpow.pop %v2330
    %v2332 = vmul.f32 %v2322, 1.442695
    %v2333 = vpow.pop %v2332
    %v2334 = vmul.f32 %v2323, 1.442695
    %v2335 = vpow.pop %v2334
    %v2336 = vmul.f32 %v2324, 1.442695
    %v2337 = vpow.pop %v2336
    %v2338 = vmul.f32 %v2325, 1.442695
    %v2339 = vpow.pop %v2338
    %v2340 = vmul.f32 %v2326, 1.442695
    %v2341 = vpow.pop %v2340
    %v2342 = vmul.f32 %v2327, 1.442695
    %v2343 = vpow.pop %v2342
    %v2344 = vadd.f32 %v2329, 1.0
    %v2345 = vadd.f32 %v2331, 1.0
    %v2346 = vadd.f32 %v2333, 1.0
    %v2347 = vadd.f32 %v2335, 1.0
    %v2348 = vadd.f32 %v2337, 1.0
    %v2349 = vadd.f32 %v2339, 1.0
    %v2350 = vadd.f32 %v2341, 1.0
    %v2351 = vadd.f32 %v2343, 1.0
    %v2352 = vrcp.pop %v2344
    %v2353 = vmul.f32 1.0, %v2352
    %v2354 = vrcp.pop %v2345
    %v2355 = vmul.f32 1.0, %v2354
    %v2356 = vrcp.pop %v2346
    %v2357 = vmul.f32 1.0, %v2356
    %v2358 = vrcp.pop %v2347
    %v2359 = vmul.f32 1.0, %v2358
    %v2360 = vrcp.pop %v2348
    %v2361 = vmul.f32 1.0, %v2360
    %v2362 = vrcp.pop %v2349
    %v2363 = vmul.f32 1.0, %v2362
    %v2364 = vrcp.pop %v2350
    %v2365 = vmul.f32 1.0, %v2364
    %v2366 = vrcp.pop %v2351
    %v2367 = vmul.f32 1.0, %v2366
    %v2369 = vrot.slane %v2221, 5
    %v2370 = vrot.slane %v2221, 6
    %v2371 = vrot.slane %v2221, 7
    %v2372 = vrot.slane %v2221, 1
    %v2373 = vrot.slane %v2221, 2
    %v2374 = vrot.slane %v2221, 3
    %v2375 = vrot.slane %v2221, 4
    %v2384 = vmul.f32 %v2281, %v2369
    %v2385 = vmul.f32 %v2283, %v2370
    %v2386 = vmul.f32 %v2285, %v2371
    %v2387 = vmul.f32 %v2287, %v2221
    %v2388 = vmul.f32 %v2289, %v2372
    %v2389 = vmul.f32 %v2291, %v2373
    %v2390 = vmul.f32 %v2293, %v2374
    %v2391 = vmul.f32 %v2295, %v2375
    %v2392 = vadd.f32 %v523, %v2384
    %v2393 = vadd.f32 %v528, %v2385
    %v2394 = vadd.f32 %v533, %v2386
    %v2395 = vadd.f32 %v538, %v2387
    %v2396 = vadd.f32 %v543, %v2388
    %v2397 = vadd.f32 %v548, %v2389
    %v2398 = vadd.f32 %v553, %v2390
    %v2399 = vadd.f32 %v558, %v2391
    %v2400 = vtanh.pop %v2392
    %v2401 = vtanh.pop %v2393
    %v2402 = vtanh.pop %v2394
    %v2403 = vtanh.pop %v2395
    %v2404 = vtanh.pop %v2396
    %v2405 = vtanh.pop %v2397
    %v2406 = vtanh.pop %v2398
    %v2407 = vtanh.pop %v2399
    %v2408 = vsub.f32 1.0, %v2353
    %v2409 = vsub.f32 1.0, %v2355
    %v2410 = vsub.f32 1.0, %v2357
    %v2411 = vsub.f32 1.0, %v2359
    %v2412 = vsub.f32 1.0, %v2361
    %v2413 = vsub.f32 1.0, %v2363
    %v2414 = vsub.f32 1.0, %v2365
    %v2415 = vsub.f32 1.0, %v2367
    %v2416 = vmul.f32 %v2408, %v2400
    %v2417 = vmul.f32 %v2409, %v2401
    %v2418 = vmul.f32 %v2410, %v2402
    %v2419 = vmul.f32 %v2411, %v2403
    %v2420 = vmul.f32 %v2412, %v2404
    %v2421 = vmul.f32 %v2413, %v2405
    %v2422 = vmul.f32 %v2414, %v2406
    %v2423 = vmul.f32 %v2415, %v2407
    %v2424 = vrot.slane %v2010, 5
    %v2425 = vrot.slane %v2010, 6
    %v2426 = vrot.slane %v2010, 7
    %v2427 = vrot.slane %v2010, 1
    %v2428 = vrot.slane %v2010, 2
    %v2429 = vrot.slane %v2010, 3
    %v2430 = vrot.slane %v2010, 4
    %v2439 = vmul.f32 %v2353, %v2424
    %v2440 = vmul.f32 %v2355, %v2425
    %v2441 = vmul.f32 %v2357, %v2426
    %v2442 = vmul.f32 %v2359, %v2010
    %v2443 = vmul.f32 %v2361, %v2427
    %v2444 = vmul.f32 %v2363, %v2428
    %v2445 = vmul.f32 %v2365, %v2429
    %v2446 = vmul.f32 %v2367, %v2430
    %v2447 = vadd.f32 %v2416, %v2439
    %v2448 = vadd.f32 %v2417, %v2440
    %v2449 = vadd.f32 %v2418, %v2441
    %v2450 = vadd.f32 %v2419, %v2442
    %v2451 = vadd.f32 %v2420, %v2443
    %v2452 = vadd.f32 %v2421, %v2444
    %v2453 = vadd.f32 %v2422, %v2445
    %v2454 = vadd.f32 %v2423, %v2446
    %vm2455 = vcmp.gt.s32.totalorder %v175, 3
    %v2456 = vsel %vm2455, 1, 0
    %2457 = vset.pattern.permute.xlu0 0
    %2458 = vperm.xlu0 %2457, %v2456
    %v2459 = vpop.permute.xlu0 %2458
    %vm2460 = vcmp.eq.s32.totalorder %v2459, 1
    %v2469 = vrot.slane %v2447, 3
    %v2470 = vrot.slane %v2448, 2
    %v2471 = vsel %vm584, %v2470, %v2469
    %v2472 = vrot.slane %v2449, 1
    %v2473 = vsel %vm586, %v2472, %v2471
    %v2474 = vsel %vm588, %v2450, %v2473
    %v2475 = vrot.slane %v2451, 7
    %v2476 = vsel %vm590, %v2475, %v2474
    %v2477 = vrot.slane %v2452, 6
    %v2478 = vsel %vm592, %v2477, %v2476
    %v2479 = vrot.slane %v2453, 5
    %v2480 = vsel %vm594, %v2479, %v2478
    %v2481 = vrot.slane %v2454, 4
    %v2482 = vsel %vm596, %v2481, %v2480
    %v2484 = vsel %vm2460, %v2482, %v2010
    %v2486 = vsel %vm195, %v2484, 0
    %2488 = vmatprep.subr.mxu0 0.0
    %2489 = vmatpush1.msra.mxu0 0.0
    %2490 = vmatprep.subr.mxu0 0.0
    %2491 = vmatpush1.msra.mxu0 0.0
    %2492 = vmatprep.subr.mxu0 0.0
    %2493 = vmatpush1.msra.mxu0 0.0
    %2494 = vmatprep.subr.mxu0 0.0
    %2495 = vmatpush1.msra.mxu0 0.0
    %2496 = vmatprep.subr.mxu0 0.0
    %2497 = vmatpush1.msra.mxu0 0.0
    %2498 = vmatprep.subr.mxu0 0.0
    %2499 = vmatpush1.msra.mxu0 0.0
    %2500 = vmatprep.subr.mxu0 0.0
    %2501 = vmatpush1.msra.mxu0 0.0
    %2502 = vmatprep.subr.mxu0 0.0
    %2503 = vmatpush1.msra.mxu0 0.0
    %2504 = vmatprep.subr.mxu0 0.0
    %2505 = vmatpush1.msra.mxu0 0.0
    %2506 = vmatprep.subr.mxu0 0.0
    %2507 = vmatpush1.msra.mxu0 0.0
    %2508 = vmatprep.subr.mxu0 0.0
    %2509 = vmatpush1.msra.mxu0 0.0
    %2510 = vmatprep.subr.mxu0 0.0
    %2511 = vmatpush1.msra.mxu0 0.0
    %2512 = vmatprep.subr.mxu0 0.0
    %2513 = vmatpush1.msra.mxu0 %v564
    %2514 = vmatprep.subr.mxu0 0.0
    %2515 = vmatpush1.msra.mxu0 %v563
    %2516 = vmatprep.subr.mxu0 0.0
    %2517 = vmatpush1.msra.mxu0 %v562
    %2518 = vmatprep.subr.mxu0 0.0
    %2519 = vmatpush1.msra.mxu0 %v561
    %2520 = vmatprep.subr.mxu0 0.0
    %2521 = vmatpush2.msra.mxu0 0.0
    %2522 = vmatprep.subr.mxu0 0.0
    %2523 = vmatpush2.msra.mxu0 0.0
    %2524 = vmatprep.subr.mxu0 0.0
    %2525 = vmatpush2.msra.mxu0 0.0
    %2526 = vmatprep.subr.mxu0 0.0
    %2527 = vmatpush2.msra.mxu0 0.0
    %2528 = vmatprep.subr.mxu0 0.0
    %2529 = vmatpush2.msra.mxu0 0.0
    %2530 = vmatprep.subr.mxu0 0.0
    %2531 = vmatpush2.msra.mxu0 0.0
    %2532 = vmatprep.subr.mxu0 0.0
    %2533 = vmatpush2.msra.mxu0 0.0
    %2534 = vmatprep.subr.mxu0 0.0
    %2535 = vmatpush2.msra.mxu0 0.0
    %2536 = vmatprep.subr.mxu0 0.0
    %2537 = vmatpush2.msra.mxu0 0.0
    %2538 = vmatprep.subr.mxu0 0.0
    %2539 = vmatpush2.msra.mxu0 0.0
    %2540 = vmatprep.subr.mxu0 0.0
    %2541 = vmatpush2.msra.mxu0 0.0
    %2542 = vmatprep.subr.mxu0 0.0
    %2543 = vmatpush2.msra.mxu0 0.0
    %2544 = vmatprep.subr.mxu0 0.0
    %2545 = vmatpush2.msra.mxu0 0.0
    %2546 = vmatprep.subr.mxu0 0.0
    %2547 = vmatpush2.msra.mxu0 0.0
    %2548 = vmatprep.subr.mxu0 0.0
    %2549 = vmatpush2.msra.mxu0 0.0
    %2550 = vmatprep.subr.mxu0 0.0
    %2551 = vmatpush2.msra.mxu0 0.0
    %2552 = vmatprep.mubr.f32.mxu0 0.0
    %2553 = vmatmul.mubr.f32.gmra.mxu0 %v2486
    %v2554 = vpop.f32.mrf.mxu0
    %v2555 = vadd.f32 0.0, %v2554
    %v2556 = vpop.f32.mrf.mxu0
    %2557 = vdwg.mxu0
    %2558 = vmatprep.subr.mxu0 0.0
    %2559 = vmatpush1.msra.mxu0 0.0
    %2560 = vmatprep.subr.mxu0 0.0
    %2561 = vmatpush1.msra.mxu0 0.0
    %2562 = vmatprep.subr.mxu0 0.0
    %2563 = vmatpush1.msra.mxu0 0.0
    %2564 = vmatprep.subr.mxu0 0.0
    %2565 = vmatpush1.msra.mxu0 0.0
    %2566 = vmatprep.subr.mxu0 0.0
    %2567 = vmatpush1.msra.mxu0 0.0
    %2568 = vmatprep.subr.mxu0 0.0
    %2569 = vmatpush1.msra.mxu0 0.0
    %2570 = vmatprep.subr.mxu0 0.0
    %2571 = vmatpush1.msra.mxu0 0.0
    %2572 = vmatprep.subr.mxu0 0.0
    %2573 = vmatpush1.msra.mxu0 0.0
    %2574 = vmatprep.subr.mxu0 0.0
    %2575 = vmatpush1.msra.mxu0 0.0
    %2576 = vmatprep.subr.mxu0 0.0
    %2577 = vmatpush1.msra.mxu0 0.0
    %2578 = vmatprep.subr.mxu0 0.0
    %2579 = vmatpush1.msra.mxu0 0.0
    %2580 = vmatprep.subr.mxu0 0.0
    %2581 = vmatpush1.msra.mxu0 0.0
    %2582 = vmatprep.subr.mxu0 0.0
    %2583 = vmatpush1.msra.mxu0 %v569
    %2584 = vmatprep.subr.mxu0 0.0
    %2585 = vmatpush1.msra.mxu0 %v568
    %2586 = vmatprep.subr.mxu0 0.0
    %2587 = vmatpush1.msra.mxu0 %v567
    %2588 = vmatprep.subr.mxu0 0.0
    %2589 = vmatpush1.msra.mxu0 %v566
    %2590 = vmatprep.subr.mxu0 0.0
    %2591 = vmatpush2.msra.mxu0 0.0
    %2592 = vmatprep.subr.mxu0 0.0
    %2593 = vmatpush2.msra.mxu0 0.0
    %2594 = vmatprep.subr.mxu0 0.0
    %2595 = vmatpush2.msra.mxu0 0.0
    %2596 = vmatprep.subr.mxu0 0.0
    %2597 = vmatpush2.msra.mxu0 0.0
    %2598 = vmatprep.subr.mxu0 0.0
    %2599 = vmatpush2.msra.mxu0 0.0
    %2600 = vmatprep.subr.mxu0 0.0
    %2601 = vmatpush2.msra.mxu0 0.0
    %2602 = vmatprep.subr.mxu0 0.0
    %2603 = vmatpush2.msra.mxu0 0.0
    %2604 = vmatprep.subr.mxu0 0.0
    %2605 = vmatpush2.msra.mxu0 0.0
    %2606 = vmatprep.subr.mxu0 0.0
    %2607 = vmatpush2.msra.mxu0 0.0
    %2608 = vmatprep.subr.mxu0 0.0
    %2609 = vmatpush2.msra.mxu0 0.0
    %2610 = vmatprep.subr.mxu0 0.0
    %2611 = vmatpush2.msra.mxu0 0.0
    %2612 = vmatprep.subr.mxu0 0.0
    %2613 = vmatpush2.msra.mxu0 0.0
    %2614 = vmatprep.subr.mxu0 0.0
    %2615 = vmatpush2.msra.mxu0 0.0
    %2616 = vmatprep.subr.mxu0 0.0
    %2617 = vmatpush2.msra.mxu0 0.0
    %2618 = vmatprep.subr.mxu0 0.0
    %2619 = vmatpush2.msra.mxu0 0.0
    %2620 = vmatprep.subr.mxu0 0.0
    %2621 = vmatpush2.msra.mxu0 0.0
    %2622 = vmatprep.mubr.f32.mxu0 0.0
    %2623 = vmatmul.mubr.f32.gmra.mxu0 %v2486
    %v2624 = vpop.f32.mrf.mxu0
    %v2625 = vadd.f32 0.0, %v2624
    %v2626 = vpop.f32.mrf.mxu0
    %2627 = vdwg.mxu0
    %2628 = vmatprep.subr.mxu0 0.0
    %2629 = vmatpush1.msra.mxu0 0.0
    %2630 = vmatprep.subr.mxu0 0.0
    %2631 = vmatpush1.msra.mxu0 0.0
    %2632 = vmatprep.subr.mxu0 0.0
    %2633 = vmatpush1.msra.mxu0 0.0
    %2634 = vmatprep.subr.mxu0 0.0
    %2635 = vmatpush1.msra.mxu0 0.0
    %2636 = vmatprep.subr.mxu0 0.0
    %2637 = vmatpush1.msra.mxu0 0.0
    %2638 = vmatprep.subr.mxu0 0.0
    %2639 = vmatpush1.msra.mxu0 0.0
    %2640 = vmatprep.subr.mxu0 0.0
    %2641 = vmatpush1.msra.mxu0 0.0
    %2642 = vmatprep.subr.mxu0 0.0
    %2643 = vmatpush1.msra.mxu0 0.0
    %2644 = vmatprep.subr.mxu0 0.0
    %2645 = vmatpush1.msra.mxu0 0.0
    %2646 = vmatprep.subr.mxu0 0.0
    %2647 = vmatpush1.msra.mxu0 0.0
    %2648 = vmatprep.subr.mxu0 0.0
    %2649 = vmatpush1.msra.mxu0 0.0
    %2650 = vmatprep.subr.mxu0 0.0
    %2651 = vmatpush1.msra.mxu0 0.0
    %2652 = vmatprep.subr.mxu0 0.0
    %2653 = vmatpush1.msra.mxu0 %v574
    %2654 = vmatprep.subr.mxu0 0.0
    %2655 = vmatpush1.msra.mxu0 %v573
    %2656 = vmatprep.subr.mxu0 0.0
    %2657 = vmatpush1.msra.mxu0 %v572
    %2658 = vmatprep.subr.mxu0 0.0
    %2659 = vmatpush1.msra.mxu0 %v571
    %2660 = vmatprep.subr.mxu0 0.0
    %2661 = vmatpush2.msra.mxu0 0.0
    %2662 = vmatprep.subr.mxu0 0.0
    %2663 = vmatpush2.msra.mxu0 0.0
    %2664 = vmatprep.subr.mxu0 0.0
    %2665 = vmatpush2.msra.mxu0 0.0
    %2666 = vmatprep.subr.mxu0 0.0
    %2667 = vmatpush2.msra.mxu0 0.0
    %2668 = vmatprep.subr.mxu0 0.0
    %2669 = vmatpush2.msra.mxu0 0.0
    %2670 = vmatprep.subr.mxu0 0.0
    %2671 = vmatpush2.msra.mxu0 0.0
    %2672 = vmatprep.subr.mxu0 0.0
    %2673 = vmatpush2.msra.mxu0 0.0
    %2674 = vmatprep.subr.mxu0 0.0
    %2675 = vmatpush2.msra.mxu0 0.0
    %2676 = vmatprep.subr.mxu0 0.0
    %2677 = vmatpush2.msra.mxu0 0.0
    %2678 = vmatprep.subr.mxu0 0.0
    %2679 = vmatpush2.msra.mxu0 0.0
    %2680 = vmatprep.subr.mxu0 0.0
    %2681 = vmatpush2.msra.mxu0 0.0
    %2682 = vmatprep.subr.mxu0 0.0
    %2683 = vmatpush2.msra.mxu0 0.0
    %2684 = vmatprep.subr.mxu0 0.0
    %2685 = vmatpush2.msra.mxu0 0.0
    %2686 = vmatprep.subr.mxu0 0.0
    %2687 = vmatpush2.msra.mxu0 0.0
    %2688 = vmatprep.subr.mxu0 0.0
    %2689 = vmatpush2.msra.mxu0 0.0
    %2690 = vmatprep.subr.mxu0 0.0
    %2691 = vmatpush2.msra.mxu0 0.0
    %2692 = vmatprep.mubr.f32.mxu0 0.0
    %2693 = vmatmul.mubr.f32.gmra.mxu0 %v2486
    %v2694 = vpop.f32.mrf.mxu0
    %v2695 = vadd.f32 %v744, %v2694
    %v2696 = vpop.f32.mrf.mxu0
    %2697 = vdwg.mxu0
    %v2699 = vrot.slane %v2555, 4
    %v2700 = vrot.slane %v2555, 5
    %v2701 = vrot.slane %v2555, 6
    %v2702 = vrot.slane %v2555, 7
    %v2703 = vrot.slane %v2555, 1
    %v2704 = vrot.slane %v2555, 2
    %v2705 = vrot.slane %v2555, 3
    %v2714 = vadd.f32 %v287, %v2699
    %v2715 = vadd.f32 %v292, %v2700
    %v2716 = vadd.f32 %v297, %v2701
    %v2717 = vadd.f32 %v302, %v2702
    %v2718 = vadd.f32 %v307, %v2555
    %v2719 = vadd.f32 %v312, %v2703
    %v2720 = vadd.f32 %v317, %v2704
    %v2721 = vadd.f32 %v322, %v2705
    %v2722 = vxor.u32 %v2714, 2147483648
    %v2723 = vxor.u32 %v2715, 2147483648
    %v2724 = vxor.u32 %v2716, 2147483648
    %v2725 = vxor.u32 %v2717, 2147483648
    %v2726 = vxor.u32 %v2718, 2147483648
    %v2727 = vxor.u32 %v2719, 2147483648
    %v2728 = vxor.u32 %v2720, 2147483648
    %v2729 = vxor.u32 %v2721, 2147483648
    %v2730 = vmul.f32 %v2722, 1.442695
    %v2731 = vpow.pop %v2730
    %v2732 = vmul.f32 %v2723, 1.442695
    %v2733 = vpow.pop %v2732
    %v2734 = vmul.f32 %v2724, 1.442695
    %v2735 = vpow.pop %v2734
    %v2736 = vmul.f32 %v2725, 1.442695
    %v2737 = vpow.pop %v2736
    %v2738 = vmul.f32 %v2726, 1.442695
    %v2739 = vpow.pop %v2738
    %v2740 = vmul.f32 %v2727, 1.442695
    %v2741 = vpow.pop %v2740
    %v2742 = vmul.f32 %v2728, 1.442695
    %v2743 = vpow.pop %v2742
    %v2744 = vmul.f32 %v2729, 1.442695
    %v2745 = vpow.pop %v2744
    %v2746 = vadd.f32 %v2731, 1.0
    %v2747 = vadd.f32 %v2733, 1.0
    %v2748 = vadd.f32 %v2735, 1.0
    %v2749 = vadd.f32 %v2737, 1.0
    %v2750 = vadd.f32 %v2739, 1.0
    %v2751 = vadd.f32 %v2741, 1.0
    %v2752 = vadd.f32 %v2743, 1.0
    %v2753 = vadd.f32 %v2745, 1.0
    %v2754 = vrcp.pop %v2746
    %v2755 = vmul.f32 1.0, %v2754
    %v2756 = vrcp.pop %v2747
    %v2757 = vmul.f32 1.0, %v2756
    %v2758 = vrcp.pop %v2748
    %v2759 = vmul.f32 1.0, %v2758
    %v2760 = vrcp.pop %v2749
    %v2761 = vmul.f32 1.0, %v2760
    %v2762 = vrcp.pop %v2750
    %v2763 = vmul.f32 1.0, %v2762
    %v2764 = vrcp.pop %v2751
    %v2765 = vmul.f32 1.0, %v2764
    %v2766 = vrcp.pop %v2752
    %v2767 = vmul.f32 1.0, %v2766
    %v2768 = vrcp.pop %v2753
    %v2769 = vmul.f32 1.0, %v2768
    %v2771 = vrot.slane %v2625, 4
    %v2772 = vrot.slane %v2625, 5
    %v2773 = vrot.slane %v2625, 6
    %v2774 = vrot.slane %v2625, 7
    %v2775 = vrot.slane %v2625, 1
    %v2776 = vrot.slane %v2625, 2
    %v2777 = vrot.slane %v2625, 3
    %v2786 = vadd.f32 %v405, %v2771
    %v2787 = vadd.f32 %v410, %v2772
    %v2788 = vadd.f32 %v415, %v2773
    %v2789 = vadd.f32 %v420, %v2774
    %v2790 = vadd.f32 %v425, %v2625
    %v2791 = vadd.f32 %v430, %v2775
    %v2792 = vadd.f32 %v435, %v2776
    %v2793 = vadd.f32 %v440, %v2777
    %v2794 = vxor.u32 %v2786, 2147483648
    %v2795 = vxor.u32 %v2787, 2147483648
    %v2796 = vxor.u32 %v2788, 2147483648
    %v2797 = vxor.u32 %v2789, 2147483648
    %v2798 = vxor.u32 %v2790, 2147483648
    %v2799 = vxor.u32 %v2791, 2147483648
    %v2800 = vxor.u32 %v2792, 2147483648
    %v2801 = vxor.u32 %v2793, 2147483648
    %v2802 = vmul.f32 %v2794, 1.442695
    %v2803 = vpow.pop %v2802
    %v2804 = vmul.f32 %v2795, 1.442695
    %v2805 = vpow.pop %v2804
    %v2806 = vmul.f32 %v2796, 1.442695
    %v2807 = vpow.pop %v2806
    %v2808 = vmul.f32 %v2797, 1.442695
    %v2809 = vpow.pop %v2808
    %v2810 = vmul.f32 %v2798, 1.442695
    %v2811 = vpow.pop %v2810
    %v2812 = vmul.f32 %v2799, 1.442695
    %v2813 = vpow.pop %v2812
    %v2814 = vmul.f32 %v2800, 1.442695
    %v2815 = vpow.pop %v2814
    %v2816 = vmul.f32 %v2801, 1.442695
    %v2817 = vpow.pop %v2816
    %v2818 = vadd.f32 %v2803, 1.0
    %v2819 = vadd.f32 %v2805, 1.0
    %v2820 = vadd.f32 %v2807, 1.0
    %v2821 = vadd.f32 %v2809, 1.0
    %v2822 = vadd.f32 %v2811, 1.0
    %v2823 = vadd.f32 %v2813, 1.0
    %v2824 = vadd.f32 %v2815, 1.0
    %v2825 = vadd.f32 %v2817, 1.0
    %v2826 = vrcp.pop %v2818
    %v2827 = vmul.f32 1.0, %v2826
    %v2828 = vrcp.pop %v2819
    %v2829 = vmul.f32 1.0, %v2828
    %v2830 = vrcp.pop %v2820
    %v2831 = vmul.f32 1.0, %v2830
    %v2832 = vrcp.pop %v2821
    %v2833 = vmul.f32 1.0, %v2832
    %v2834 = vrcp.pop %v2822
    %v2835 = vmul.f32 1.0, %v2834
    %v2836 = vrcp.pop %v2823
    %v2837 = vmul.f32 1.0, %v2836
    %v2838 = vrcp.pop %v2824
    %v2839 = vmul.f32 1.0, %v2838
    %v2840 = vrcp.pop %v2825
    %v2841 = vmul.f32 1.0, %v2840
    %v2843 = vrot.slane %v2695, 4
    %v2844 = vrot.slane %v2695, 5
    %v2845 = vrot.slane %v2695, 6
    %v2846 = vrot.slane %v2695, 7
    %v2847 = vrot.slane %v2695, 1
    %v2848 = vrot.slane %v2695, 2
    %v2849 = vrot.slane %v2695, 3
    %v2858 = vmul.f32 %v2755, %v2843
    %v2859 = vmul.f32 %v2757, %v2844
    %v2860 = vmul.f32 %v2759, %v2845
    %v2861 = vmul.f32 %v2761, %v2846
    %v2862 = vmul.f32 %v2763, %v2695
    %v2863 = vmul.f32 %v2765, %v2847
    %v2864 = vmul.f32 %v2767, %v2848
    %v2865 = vmul.f32 %v2769, %v2849
    %v2866 = vadd.f32 %v523, %v2858
    %v2867 = vadd.f32 %v528, %v2859
    %v2868 = vadd.f32 %v533, %v2860
    %v2869 = vadd.f32 %v538, %v2861
    %v2870 = vadd.f32 %v543, %v2862
    %v2871 = vadd.f32 %v548, %v2863
    %v2872 = vadd.f32 %v553, %v2864
    %v2873 = vadd.f32 %v558, %v2865
    %v2874 = vtanh.pop %v2866
    %v2875 = vtanh.pop %v2867
    %v2876 = vtanh.pop %v2868
    %v2877 = vtanh.pop %v2869
    %v2878 = vtanh.pop %v2870
    %v2879 = vtanh.pop %v2871
    %v2880 = vtanh.pop %v2872
    %v2881 = vtanh.pop %v2873
    %v2882 = vsub.f32 1.0, %v2827
    %v2883 = vsub.f32 1.0, %v2829
    %v2884 = vsub.f32 1.0, %v2831
    %v2885 = vsub.f32 1.0, %v2833
    %v2886 = vsub.f32 1.0, %v2835
    %v2887 = vsub.f32 1.0, %v2837
    %v2888 = vsub.f32 1.0, %v2839
    %v2889 = vsub.f32 1.0, %v2841
    %v2890 = vmul.f32 %v2882, %v2874
    %v2891 = vmul.f32 %v2883, %v2875
    %v2892 = vmul.f32 %v2884, %v2876
    %v2893 = vmul.f32 %v2885, %v2877
    %v2894 = vmul.f32 %v2886, %v2878
    %v2895 = vmul.f32 %v2887, %v2879
    %v2896 = vmul.f32 %v2888, %v2880
    %v2897 = vmul.f32 %v2889, %v2881
    %v2898 = vrot.slane %v2484, 4
    %v2899 = vrot.slane %v2484, 5
    %v2900 = vrot.slane %v2484, 6
    %v2901 = vrot.slane %v2484, 7
    %v2902 = vrot.slane %v2484, 1
    %v2903 = vrot.slane %v2484, 2
    %v2904 = vrot.slane %v2484, 3
    %v2913 = vmul.f32 %v2827, %v2898
    %v2914 = vmul.f32 %v2829, %v2899
    %v2915 = vmul.f32 %v2831, %v2900
    %v2916 = vmul.f32 %v2833, %v2901
    %v2917 = vmul.f32 %v2835, %v2484
    %v2918 = vmul.f32 %v2837, %v2902
    %v2919 = vmul.f32 %v2839, %v2903
    %v2920 = vmul.f32 %v2841, %v2904
    %v2921 = vadd.f32 %v2890, %v2913
    %v2922 = vadd.f32 %v2891, %v2914
    %v2923 = vadd.f32 %v2892, %v2915
    %v2924 = vadd.f32 %v2893, %v2916
    %v2925 = vadd.f32 %v2894, %v2917
    %v2926 = vadd.f32 %v2895, %v2918
    %v2927 = vadd.f32 %v2896, %v2919
    %v2928 = vadd.f32 %v2897, %v2920
    %vm2929 = vcmp.gt.s32.totalorder %v175, 4
    %v2930 = vsel %vm2929, 1, 0
    %2931 = vset.pattern.permute.xlu0 0
    %2932 = vperm.xlu0 %2931, %v2930
    %v2933 = vpop.permute.xlu0 %2932
    %vm2934 = vcmp.eq.s32.totalorder %v2933, 1
    %v2943 = vrot.slane %v2921, 4
    %v2944 = vrot.slane %v2922, 3
    %v2945 = vsel %vm584, %v2944, %v2943
    %v2946 = vrot.slane %v2923, 2
    %v2947 = vsel %vm586, %v2946, %v2945
    %v2948 = vrot.slane %v2924, 1
    %v2949 = vsel %vm588, %v2948, %v2947
    %v2950 = vsel %vm590, %v2925, %v2949
    %v2951 = vrot.slane %v2926, 7
    %v2952 = vsel %vm592, %v2951, %v2950
    %v2953 = vrot.slane %v2927, 6
    %v2954 = vsel %vm594, %v2953, %v2952
    %v2955 = vrot.slane %v2928, 5
    %v2956 = vsel %vm596, %v2955, %v2954
    %v2958 = vsel %vm2934, %v2956, %v2484
    %v2960 = vsel %vm195, %v2958, 0
    %2962 = vmatprep.subr.mxu0 0.0
    %2963 = vmatpush1.msra.mxu0 0.0
    %2964 = vmatprep.subr.mxu0 0.0
    %2965 = vmatpush1.msra.mxu0 0.0
    %2966 = vmatprep.subr.mxu0 0.0
    %2967 = vmatpush1.msra.mxu0 0.0
    %2968 = vmatprep.subr.mxu0 0.0
    %2969 = vmatpush1.msra.mxu0 0.0
    %2970 = vmatprep.subr.mxu0 0.0
    %2971 = vmatpush1.msra.mxu0 0.0
    %2972 = vmatprep.subr.mxu0 0.0
    %2973 = vmatpush1.msra.mxu0 0.0
    %2974 = vmatprep.subr.mxu0 0.0
    %2975 = vmatpush1.msra.mxu0 0.0
    %2976 = vmatprep.subr.mxu0 0.0
    %2977 = vmatpush1.msra.mxu0 0.0
    %2978 = vmatprep.subr.mxu0 0.0
    %2979 = vmatpush1.msra.mxu0 0.0
    %2980 = vmatprep.subr.mxu0 0.0
    %2981 = vmatpush1.msra.mxu0 0.0
    %2982 = vmatprep.subr.mxu0 0.0
    %2983 = vmatpush1.msra.mxu0 0.0
    %2984 = vmatprep.subr.mxu0 0.0
    %2985 = vmatpush1.msra.mxu0 0.0
    %2986 = vmatprep.subr.mxu0 0.0
    %2987 = vmatpush1.msra.mxu0 %v564
    %2988 = vmatprep.subr.mxu0 0.0
    %2989 = vmatpush1.msra.mxu0 %v563
    %2990 = vmatprep.subr.mxu0 0.0
    %2991 = vmatpush1.msra.mxu0 %v562
    %2992 = vmatprep.subr.mxu0 0.0
    %2993 = vmatpush1.msra.mxu0 %v561
    %2994 = vmatprep.subr.mxu0 0.0
    %2995 = vmatpush2.msra.mxu0 0.0
    %2996 = vmatprep.subr.mxu0 0.0
    %2997 = vmatpush2.msra.mxu0 0.0
    %2998 = vmatprep.subr.mxu0 0.0
    %2999 = vmatpush2.msra.mxu0 0.0
    %3000 = vmatprep.subr.mxu0 0.0
    %3001 = vmatpush2.msra.mxu0 0.0
    %3002 = vmatprep.subr.mxu0 0.0
    %3003 = vmatpush2.msra.mxu0 0.0
    %3004 = vmatprep.subr.mxu0 0.0
    %3005 = vmatpush2.msra.mxu0 0.0
    %3006 = vmatprep.subr.mxu0 0.0
    %3007 = vmatpush2.msra.mxu0 0.0
    %3008 = vmatprep.subr.mxu0 0.0
    %3009 = vmatpush2.msra.mxu0 0.0
    %3010 = vmatprep.subr.mxu0 0.0
    %3011 = vmatpush2.msra.mxu0 0.0
    %3012 = vmatprep.subr.mxu0 0.0
    %3013 = vmatpush2.msra.mxu0 0.0
    %3014 = vmatprep.subr.mxu0 0.0
    %3015 = vmatpush2.msra.mxu0 0.0
    %3016 = vmatprep.subr.mxu0 0.0
    %3017 = vmatpush2.msra.mxu0 0.0
    %3018 = vmatprep.subr.mxu0 0.0
    %3019 = vmatpush2.msra.mxu0 0.0
    %3020 = vmatprep.subr.mxu0 0.0
    %3021 = vmatpush2.msra.mxu0 0.0
    %3022 = vmatprep.subr.mxu0 0.0
    %3023 = vmatpush2.msra.mxu0 0.0
    %3024 = vmatprep.subr.mxu0 0.0
    %3025 = vmatpush2.msra.mxu0 0.0
    %3026 = vmatprep.mubr.f32.mxu0 0.0
    %3027 = vmatmul.mubr.f32.gmra.mxu0 %v2960
    %v3028 = vpop.f32.mrf.mxu0
    %v3029 = vadd.f32 0.0, %v3028
    %v3030 = vpop.f32.mrf.mxu0
    %3031 = vdwg.mxu0
    %3032 = vmatprep.subr.mxu0 0.0
    %3033 = vmatpush1.msra.mxu0 0.0
    %3034 = vmatprep.subr.mxu0 0.0
    %3035 = vmatpush1.msra.mxu0 0.0
    %3036 = vmatprep.subr.mxu0 0.0
    %3037 = vmatpush1.msra.mxu0 0.0
    %3038 = vmatprep.subr.mxu0 0.0
    %3039 = vmatpush1.msra.mxu0 0.0
    %3040 = vmatprep.subr.mxu0 0.0
    %3041 = vmatpush1.msra.mxu0 0.0
    %3042 = vmatprep.subr.mxu0 0.0
    %3043 = vmatpush1.msra.mxu0 0.0
    %3044 = vmatprep.subr.mxu0 0.0
    %3045 = vmatpush1.msra.mxu0 0.0
    %3046 = vmatprep.subr.mxu0 0.0
    %3047 = vmatpush1.msra.mxu0 0.0
    %3048 = vmatprep.subr.mxu0 0.0
    %3049 = vmatpush1.msra.mxu0 0.0
    %3050 = vmatprep.subr.mxu0 0.0
    %3051 = vmatpush1.msra.mxu0 0.0
    %3052 = vmatprep.subr.mxu0 0.0
    %3053 = vmatpush1.msra.mxu0 0.0
    %3054 = vmatprep.subr.mxu0 0.0
    %3055 = vmatpush1.msra.mxu0 0.0
    %3056 = vmatprep.subr.mxu0 0.0
    %3057 = vmatpush1.msra.mxu0 %v569
    %3058 = vmatprep.subr.mxu0 0.0
    %3059 = vmatpush1.msra.mxu0 %v568
    %3060 = vmatprep.subr.mxu0 0.0
    %3061 = vmatpush1.msra.mxu0 %v567
    %3062 = vmatprep.subr.mxu0 0.0
    %3063 = vmatpush1.msra.mxu0 %v566
    %3064 = vmatprep.subr.mxu0 0.0
    %3065 = vmatpush2.msra.mxu0 0.0
    %3066 = vmatprep.subr.mxu0 0.0
    %3067 = vmatpush2.msra.mxu0 0.0
    %3068 = vmatprep.subr.mxu0 0.0
    %3069 = vmatpush2.msra.mxu0 0.0
    %3070 = vmatprep.subr.mxu0 0.0
    %3071 = vmatpush2.msra.mxu0 0.0
    %3072 = vmatprep.subr.mxu0 0.0
    %3073 = vmatpush2.msra.mxu0 0.0
    %3074 = vmatprep.subr.mxu0 0.0
    %3075 = vmatpush2.msra.mxu0 0.0
    %3076 = vmatprep.subr.mxu0 0.0
    %3077 = vmatpush2.msra.mxu0 0.0
    %3078 = vmatprep.subr.mxu0 0.0
    %3079 = vmatpush2.msra.mxu0 0.0
    %3080 = vmatprep.subr.mxu0 0.0
    %3081 = vmatpush2.msra.mxu0 0.0
    %3082 = vmatprep.subr.mxu0 0.0
    %3083 = vmatpush2.msra.mxu0 0.0
    %3084 = vmatprep.subr.mxu0 0.0
    %3085 = vmatpush2.msra.mxu0 0.0
    %3086 = vmatprep.subr.mxu0 0.0
    %3087 = vmatpush2.msra.mxu0 0.0
    %3088 = vmatprep.subr.mxu0 0.0
    %3089 = vmatpush2.msra.mxu0 0.0
    %3090 = vmatprep.subr.mxu0 0.0
    %3091 = vmatpush2.msra.mxu0 0.0
    %3092 = vmatprep.subr.mxu0 0.0
    %3093 = vmatpush2.msra.mxu0 0.0
    %3094 = vmatprep.subr.mxu0 0.0
    %3095 = vmatpush2.msra.mxu0 0.0
    %3096 = vmatprep.mubr.f32.mxu0 0.0
    %3097 = vmatmul.mubr.f32.gmra.mxu0 %v2960
    %v3098 = vpop.f32.mrf.mxu0
    %v3099 = vadd.f32 0.0, %v3098
    %v3100 = vpop.f32.mrf.mxu0
    %3101 = vdwg.mxu0
    %3102 = vmatprep.subr.mxu0 0.0
    %3103 = vmatpush1.msra.mxu0 0.0
    %3104 = vmatprep.subr.mxu0 0.0
    %3105 = vmatpush1.msra.mxu0 0.0
    %3106 = vmatprep.subr.mxu0 0.0
    %3107 = vmatpush1.msra.mxu0 0.0
    %3108 = vmatprep.subr.mxu0 0.0
    %3109 = vmatpush1.msra.mxu0 0.0
    %3110 = vmatprep.subr.mxu0 0.0
    %3111 = vmatpush1.msra.mxu0 0.0
    %3112 = vmatprep.subr.mxu0 0.0
    %3113 = vmatpush1.msra.mxu0 0.0
    %3114 = vmatprep.subr.mxu0 0.0
    %3115 = vmatpush1.msra.mxu0 0.0
    %3116 = vmatprep.subr.mxu0 0.0
    %3117 = vmatpush1.msra.mxu0 0.0
    %3118 = vmatprep.subr.mxu0 0.0
    %3119 = vmatpush1.msra.mxu0 0.0
    %3120 = vmatprep.subr.mxu0 0.0
    %3121 = vmatpush1.msra.mxu0 0.0
    %3122 = vmatprep.subr.mxu0 0.0
    %3123 = vmatpush1.msra.mxu0 0.0
    %3124 = vmatprep.subr.mxu0 0.0
    %3125 = vmatpush1.msra.mxu0 0.0
    %3126 = vmatprep.subr.mxu0 0.0
    %3127 = vmatpush1.msra.mxu0 %v574
    %3128 = vmatprep.subr.mxu0 0.0
    %3129 = vmatpush1.msra.mxu0 %v573
    %3130 = vmatprep.subr.mxu0 0.0
    %3131 = vmatpush1.msra.mxu0 %v572
    %3132 = vmatprep.subr.mxu0 0.0
    %3133 = vmatpush1.msra.mxu0 %v571
    %3134 = vmatprep.subr.mxu0 0.0
    %3135 = vmatpush2.msra.mxu0 0.0
    %3136 = vmatprep.subr.mxu0 0.0
    %3137 = vmatpush2.msra.mxu0 0.0
    %3138 = vmatprep.subr.mxu0 0.0
    %3139 = vmatpush2.msra.mxu0 0.0
    %3140 = vmatprep.subr.mxu0 0.0
    %3141 = vmatpush2.msra.mxu0 0.0
    %3142 = vmatprep.subr.mxu0 0.0
    %3143 = vmatpush2.msra.mxu0 0.0
    %3144 = vmatprep.subr.mxu0 0.0
    %3145 = vmatpush2.msra.mxu0 0.0
    %3146 = vmatprep.subr.mxu0 0.0
    %3147 = vmatpush2.msra.mxu0 0.0
    %3148 = vmatprep.subr.mxu0 0.0
    %3149 = vmatpush2.msra.mxu0 0.0
    %3150 = vmatprep.subr.mxu0 0.0
    %3151 = vmatpush2.msra.mxu0 0.0
    %3152 = vmatprep.subr.mxu0 0.0
    %3153 = vmatpush2.msra.mxu0 0.0
    %3154 = vmatprep.subr.mxu0 0.0
    %3155 = vmatpush2.msra.mxu0 0.0
    %3156 = vmatprep.subr.mxu0 0.0
    %3157 = vmatpush2.msra.mxu0 0.0
    %3158 = vmatprep.subr.mxu0 0.0
    %3159 = vmatpush2.msra.mxu0 0.0
    %3160 = vmatprep.subr.mxu0 0.0
    %3161 = vmatpush2.msra.mxu0 0.0
    %3162 = vmatprep.subr.mxu0 0.0
    %3163 = vmatpush2.msra.mxu0 0.0
    %3164 = vmatprep.subr.mxu0 0.0
    %3165 = vmatpush2.msra.mxu0 0.0
    %3166 = vmatprep.mubr.f32.mxu0 0.0
    %3167 = vmatmul.mubr.f32.gmra.mxu0 %v2960
    %v3168 = vpop.f32.mrf.mxu0
    %v3169 = vadd.f32 %v744, %v3168
    %v3170 = vpop.f32.mrf.mxu0
    %3171 = vdwg.mxu0
    %v3173 = vrot.slane %v3029, 3
    %v3174 = vrot.slane %v3029, 4
    %v3175 = vrot.slane %v3029, 5
    %v3176 = vrot.slane %v3029, 6
    %v3177 = vrot.slane %v3029, 7
    %v3178 = vrot.slane %v3029, 1
    %v3179 = vrot.slane %v3029, 2
    %v3188 = vadd.f32 %v287, %v3173
    %v3189 = vadd.f32 %v292, %v3174
    %v3190 = vadd.f32 %v297, %v3175
    %v3191 = vadd.f32 %v302, %v3176
    %v3192 = vadd.f32 %v307, %v3177
    %v3193 = vadd.f32 %v312, %v3029
    %v3194 = vadd.f32 %v317, %v3178
    %v3195 = vadd.f32 %v322, %v3179
    %v3196 = vxor.u32 %v3188, 2147483648
    %v3197 = vxor.u32 %v3189, 2147483648
    %v3198 = vxor.u32 %v3190, 2147483648
    %v3199 = vxor.u32 %v3191, 2147483648
    %v3200 = vxor.u32 %v3192, 2147483648
    %v3201 = vxor.u32 %v3193, 2147483648
    %v3202 = vxor.u32 %v3194, 2147483648
    %v3203 = vxor.u32 %v3195, 2147483648
    %v3204 = vmul.f32 %v3196, 1.442695
    %v3205 = vpow.pop %v3204
    %v3206 = vmul.f32 %v3197, 1.442695
    %v3207 = vpow.pop %v3206
    %v3208 = vmul.f32 %v3198, 1.442695
    %v3209 = vpow.pop %v3208
    %v3210 = vmul.f32 %v3199, 1.442695
    %v3211 = vpow.pop %v3210
    %v3212 = vmul.f32 %v3200, 1.442695
    %v3213 = vpow.pop %v3212
    %v3214 = vmul.f32 %v3201, 1.442695
    %v3215 = vpow.pop %v3214
    %v3216 = vmul.f32 %v3202, 1.442695
    %v3217 = vpow.pop %v3216
    %v3218 = vmul.f32 %v3203, 1.442695
    %v3219 = vpow.pop %v3218
    %v3220 = vadd.f32 %v3205, 1.0
    %v3221 = vadd.f32 %v3207, 1.0
    %v3222 = vadd.f32 %v3209, 1.0
    %v3223 = vadd.f32 %v3211, 1.0
    %v3224 = vadd.f32 %v3213, 1.0
    %v3225 = vadd.f32 %v3215, 1.0
    %v3226 = vadd.f32 %v3217, 1.0
    %v3227 = vadd.f32 %v3219, 1.0
    %v3228 = vrcp.pop %v3220
    %v3229 = vmul.f32 1.0, %v3228
    %v3230 = vrcp.pop %v3221
    %v3231 = vmul.f32 1.0, %v3230
    %v3232 = vrcp.pop %v3222
    %v3233 = vmul.f32 1.0, %v3232
    %v3234 = vrcp.pop %v3223
    %v3235 = vmul.f32 1.0, %v3234
    %v3236 = vrcp.pop %v3224
    %v3237 = vmul.f32 1.0, %v3236
    %v3238 = vrcp.pop %v3225
    %v3239 = vmul.f32 1.0, %v3238
    %v3240 = vrcp.pop %v3226
    %v3241 = vmul.f32 1.0, %v3240
    %v3242 = vrcp.pop %v3227
    %v3243 = vmul.f32 1.0, %v3242
    %v3245 = vrot.slane %v3099, 3
    %v3246 = vrot.slane %v3099, 4
    %v3247 = vrot.slane %v3099, 5
    %v3248 = vrot.slane %v3099, 6
    %v3249 = vrot.slane %v3099, 7
    %v3250 = vrot.slane %v3099, 1
    %v3251 = vrot.slane %v3099, 2
    %v3260 = vadd.f32 %v405, %v3245
    %v3261 = vadd.f32 %v410, %v3246
    %v3262 = vadd.f32 %v415, %v3247
    %v3263 = vadd.f32 %v420, %v3248
    %v3264 = vadd.f32 %v425, %v3249
    %v3265 = vadd.f32 %v430, %v3099
    %v3266 = vadd.f32 %v435, %v3250
    %v3267 = vadd.f32 %v440, %v3251
    %v3268 = vxor.u32 %v3260, 2147483648
    %v3269 = vxor.u32 %v3261, 2147483648
    %v3270 = vxor.u32 %v3262, 2147483648
    %v3271 = vxor.u32 %v3263, 2147483648
    %v3272 = vxor.u32 %v3264, 2147483648
    %v3273 = vxor.u32 %v3265, 2147483648
    %v3274 = vxor.u32 %v3266, 2147483648
    %v3275 = vxor.u32 %v3267, 2147483648
    %v3276 = vmul.f32 %v3268, 1.442695
    %v3277 = vpow.pop %v3276
    %v3278 = vmul.f32 %v3269, 1.442695
    %v3279 = vpow.pop %v3278
    %v3280 = vmul.f32 %v3270, 1.442695
    %v3281 = vpow.pop %v3280
    %v3282 = vmul.f32 %v3271, 1.442695
    %v3283 = vpow.pop %v3282
    %v3284 = vmul.f32 %v3272, 1.442695
    %v3285 = vpow.pop %v3284
    %v3286 = vmul.f32 %v3273, 1.442695
    %v3287 = vpow.pop %v3286
    %v3288 = vmul.f32 %v3274, 1.442695
    %v3289 = vpow.pop %v3288
    %v3290 = vmul.f32 %v3275, 1.442695
    %v3291 = vpow.pop %v3290
    %v3292 = vadd.f32 %v3277, 1.0
    %v3293 = vadd.f32 %v3279, 1.0
    %v3294 = vadd.f32 %v3281, 1.0
    %v3295 = vadd.f32 %v3283, 1.0
    %v3296 = vadd.f32 %v3285, 1.0
    %v3297 = vadd.f32 %v3287, 1.0
    %v3298 = vadd.f32 %v3289, 1.0
    %v3299 = vadd.f32 %v3291, 1.0
    %v3300 = vrcp.pop %v3292
    %v3301 = vmul.f32 1.0, %v3300
    %v3302 = vrcp.pop %v3293
    %v3303 = vmul.f32 1.0, %v3302
    %v3304 = vrcp.pop %v3294
    %v3305 = vmul.f32 1.0, %v3304
    %v3306 = vrcp.pop %v3295
    %v3307 = vmul.f32 1.0, %v3306
    %v3308 = vrcp.pop %v3296
    %v3309 = vmul.f32 1.0, %v3308
    %v3310 = vrcp.pop %v3297
    %v3311 = vmul.f32 1.0, %v3310
    %v3312 = vrcp.pop %v3298
    %v3313 = vmul.f32 1.0, %v3312
    %v3314 = vrcp.pop %v3299
    %v3315 = vmul.f32 1.0, %v3314
    %v3317 = vrot.slane %v3169, 3
    %v3318 = vrot.slane %v3169, 4
    %v3319 = vrot.slane %v3169, 5
    %v3320 = vrot.slane %v3169, 6
    %v3321 = vrot.slane %v3169, 7
    %v3322 = vrot.slane %v3169, 1
    %v3323 = vrot.slane %v3169, 2
    %v3332 = vmul.f32 %v3229, %v3317
    %v3333 = vmul.f32 %v3231, %v3318
    %v3334 = vmul.f32 %v3233, %v3319
    %v3335 = vmul.f32 %v3235, %v3320
    %v3336 = vmul.f32 %v3237, %v3321
    %v3337 = vmul.f32 %v3239, %v3169
    %v3338 = vmul.f32 %v3241, %v3322
    %v3339 = vmul.f32 %v3243, %v3323
    %v3340 = vadd.f32 %v523, %v3332
    %v3341 = vadd.f32 %v528, %v3333
    %v3342 = vadd.f32 %v533, %v3334
    %v3343 = vadd.f32 %v538, %v3335
    %v3344 = vadd.f32 %v543, %v3336
    %v3345 = vadd.f32 %v548, %v3337
    %v3346 = vadd.f32 %v553, %v3338
    %v3347 = vadd.f32 %v558, %v3339
    %v3348 = vtanh.pop %v3340
    %v3349 = vtanh.pop %v3341
    %v3350 = vtanh.pop %v3342
    %v3351 = vtanh.pop %v3343
    %v3352 = vtanh.pop %v3344
    %v3353 = vtanh.pop %v3345
    %v3354 = vtanh.pop %v3346
    %v3355 = vtanh.pop %v3347
    %v3356 = vsub.f32 1.0, %v3301
    %v3357 = vsub.f32 1.0, %v3303
    %v3358 = vsub.f32 1.0, %v3305
    %v3359 = vsub.f32 1.0, %v3307
    %v3360 = vsub.f32 1.0, %v3309
    %v3361 = vsub.f32 1.0, %v3311
    %v3362 = vsub.f32 1.0, %v3313
    %v3363 = vsub.f32 1.0, %v3315
    %v3364 = vmul.f32 %v3356, %v3348
    %v3365 = vmul.f32 %v3357, %v3349
    %v3366 = vmul.f32 %v3358, %v3350
    %v3367 = vmul.f32 %v3359, %v3351
    %v3368 = vmul.f32 %v3360, %v3352
    %v3369 = vmul.f32 %v3361, %v3353
    %v3370 = vmul.f32 %v3362, %v3354
    %v3371 = vmul.f32 %v3363, %v3355
    %v3372 = vrot.slane %v2958, 3
    %v3373 = vrot.slane %v2958, 4
    %v3374 = vrot.slane %v2958, 5
    %v3375 = vrot.slane %v2958, 6
    %v3376 = vrot.slane %v2958, 7
    %v3377 = vrot.slane %v2958, 1
    %v3378 = vrot.slane %v2958, 2
    %v3387 = vmul.f32 %v3301, %v3372
    %v3388 = vmul.f32 %v3303, %v3373
    %v3389 = vmul.f32 %v3305, %v3374
    %v3390 = vmul.f32 %v3307, %v3375
    %v3391 = vmul.f32 %v3309, %v3376
    %v3392 = vmul.f32 %v3311, %v2958
    %v3393 = vmul.f32 %v3313, %v3377
    %v3394 = vmul.f32 %v3315, %v3378
    %v3395 = vadd.f32 %v3364, %v3387
    %v3396 = vadd.f32 %v3365, %v3388
    %v3397 = vadd.f32 %v3366, %v3389
    %v3398 = vadd.f32 %v3367, %v3390
    %v3399 = vadd.f32 %v3368, %v3391
    %v3400 = vadd.f32 %v3369, %v3392
    %v3401 = vadd.f32 %v3370, %v3393
    %v3402 = vadd.f32 %v3371, %v3394
    %vm3403 = vcmp.gt.s32.totalorder %v175, 5
    %v3404 = vsel %vm3403, 1, 0
    %3405 = vset.pattern.permute.xlu0 0
    %3406 = vperm.xlu0 %3405, %v3404
    %v3407 = vpop.permute.xlu0 %3406
    %vm3408 = vcmp.eq.s32.totalorder %v3407, 1
    %v3417 = vrot.slane %v3395, 5
    %v3418 = vrot.slane %v3396, 4
    %v3419 = vsel %vm584, %v3418, %v3417
    %v3420 = vrot.slane %v3397, 3
    %v3421 = vsel %vm586, %v3420, %v3419
    %v3422 = vrot.slane %v3398, 2
    %v3423 = vsel %vm588, %v3422, %v3421
    %v3424 = vrot.slane %v3399, 1
    %v3425 = vsel %vm590, %v3424, %v3423
    %v3426 = vsel %vm592, %v3400, %v3425
    %v3427 = vrot.slane %v3401, 7
    %v3428 = vsel %vm594, %v3427, %v3426
    %v3429 = vrot.slane %v3402, 6
    %v3430 = vsel %vm596, %v3429, %v3428
    %v3432 = vsel %vm3408, %v3430, %v2958
    %v3434 = vsel %vm195, %v3432, 0
    %3436 = vmatprep.subr.mxu0 0.0
    %3437 = vmatpush1.msra.mxu0 0.0
    %3438 = vmatprep.subr.mxu0 0.0
    %3439 = vmatpush1.msra.mxu0 0.0
    %3440 = vmatprep.subr.mxu0 0.0
    %3441 = vmatpush1.msra.mxu0 0.0
    %3442 = vmatprep.subr.mxu0 0.0
    %3443 = vmatpush1.msra.mxu0 0.0
    %3444 = vmatprep.subr.mxu0 0.0
    %3445 = vmatpush1.msra.mxu0 0.0
    %3446 = vmatprep.subr.mxu0 0.0
    %3447 = vmatpush1.msra.mxu0 0.0
    %3448 = vmatprep.subr.mxu0 0.0
    %3449 = vmatpush1.msra.mxu0 0.0
    %3450 = vmatprep.subr.mxu0 0.0
    %3451 = vmatpush1.msra.mxu0 0.0
    %3452 = vmatprep.subr.mxu0 0.0
    %3453 = vmatpush1.msra.mxu0 0.0
    %3454 = vmatprep.subr.mxu0 0.0
    %3455 = vmatpush1.msra.mxu0 0.0
    %3456 = vmatprep.subr.mxu0 0.0
    %3457 = vmatpush1.msra.mxu0 0.0
    %3458 = vmatprep.subr.mxu0 0.0
    %3459 = vmatpush1.msra.mxu0 0.0
    %3460 = vmatprep.subr.mxu0 0.0
    %3461 = vmatpush1.msra.mxu0 %v564
    %3462 = vmatprep.subr.mxu0 0.0
    %3463 = vmatpush1.msra.mxu0 %v563
    %3464 = vmatprep.subr.mxu0 0.0
    %3465 = vmatpush1.msra.mxu0 %v562
    %3466 = vmatprep.subr.mxu0 0.0
    %3467 = vmatpush1.msra.mxu0 %v561
    %3468 = vmatprep.subr.mxu0 0.0
    %3469 = vmatpush2.msra.mxu0 0.0
    %3470 = vmatprep.subr.mxu0 0.0
    %3471 = vmatpush2.msra.mxu0 0.0
    %3472 = vmatprep.subr.mxu0 0.0
    %3473 = vmatpush2.msra.mxu0 0.0
    %3474 = vmatprep.subr.mxu0 0.0
    %3475 = vmatpush2.msra.mxu0 0.0
    %3476 = vmatprep.subr.mxu0 0.0
    %3477 = vmatpush2.msra.mxu0 0.0
    %3478 = vmatprep.subr.mxu0 0.0
    %3479 = vmatpush2.msra.mxu0 0.0
    %3480 = vmatprep.subr.mxu0 0.0
    %3481 = vmatpush2.msra.mxu0 0.0
    %3482 = vmatprep.subr.mxu0 0.0
    %3483 = vmatpush2.msra.mxu0 0.0
    %3484 = vmatprep.subr.mxu0 0.0
    %3485 = vmatpush2.msra.mxu0 0.0
    %3486 = vmatprep.subr.mxu0 0.0
    %3487 = vmatpush2.msra.mxu0 0.0
    %3488 = vmatprep.subr.mxu0 0.0
    %3489 = vmatpush2.msra.mxu0 0.0
    %3490 = vmatprep.subr.mxu0 0.0
    %3491 = vmatpush2.msra.mxu0 0.0
    %3492 = vmatprep.subr.mxu0 0.0
    %3493 = vmatpush2.msra.mxu0 0.0
    %3494 = vmatprep.subr.mxu0 0.0
    %3495 = vmatpush2.msra.mxu0 0.0
    %3496 = vmatprep.subr.mxu0 0.0
    %3497 = vmatpush2.msra.mxu0 0.0
    %3498 = vmatprep.subr.mxu0 0.0
    %3499 = vmatpush2.msra.mxu0 0.0
    %3500 = vmatprep.mubr.f32.mxu0 0.0
    %3501 = vmatmul.mubr.f32.gmra.mxu0 %v3434
    %v3502 = vpop.f32.mrf.mxu0
    %v3503 = vadd.f32 0.0, %v3502
    %v3504 = vpop.f32.mrf.mxu0
    %3505 = vdwg.mxu0
    %3506 = vmatprep.subr.mxu0 0.0
    %3507 = vmatpush1.msra.mxu0 0.0
    %3508 = vmatprep.subr.mxu0 0.0
    %3509 = vmatpush1.msra.mxu0 0.0
    %3510 = vmatprep.subr.mxu0 0.0
    %3511 = vmatpush1.msra.mxu0 0.0
    %3512 = vmatprep.subr.mxu0 0.0
    %3513 = vmatpush1.msra.mxu0 0.0
    %3514 = vmatprep.subr.mxu0 0.0
    %3515 = vmatpush1.msra.mxu0 0.0
    %3516 = vmatprep.subr.mxu0 0.0
    %3517 = vmatpush1.msra.mxu0 0.0
    %3518 = vmatprep.subr.mxu0 0.0
    %3519 = vmatpush1.msra.mxu0 0.0
    %3520 = vmatprep.subr.mxu0 0.0
    %3521 = vmatpush1.msra.mxu0 0.0
    %3522 = vmatprep.subr.mxu0 0.0
    %3523 = vmatpush1.msra.mxu0 0.0
    %3524 = vmatprep.subr.mxu0 0.0
    %3525 = vmatpush1.msra.mxu0 0.0
    %3526 = vmatprep.subr.mxu0 0.0
    %3527 = vmatpush1.msra.mxu0 0.0
    %3528 = vmatprep.subr.mxu0 0.0
    %3529 = vmatpush1.msra.mxu0 0.0
    %3530 = vmatprep.subr.mxu0 0.0
    %3531 = vmatpush1.msra.mxu0 %v569
    %3532 = vmatprep.subr.mxu0 0.0
    %3533 = vmatpush1.msra.mxu0 %v568
    %3534 = vmatprep.subr.mxu0 0.0
    %3535 = vmatpush1.msra.mxu0 %v567
    %3536 = vmatprep.subr.mxu0 0.0
    %3537 = vmatpush1.msra.mxu0 %v566
    %3538 = vmatprep.subr.mxu0 0.0
    %3539 = vmatpush2.msra.mxu0 0.0
    %3540 = vmatprep.subr.mxu0 0.0
    %3541 = vmatpush2.msra.mxu0 0.0
    %3542 = vmatprep.subr.mxu0 0.0
    %3543 = vmatpush2.msra.mxu0 0.0
    %3544 = vmatprep.subr.mxu0 0.0
    %3545 = vmatpush2.msra.mxu0 0.0
    %3546 = vmatprep.subr.mxu0 0.0
    %3547 = vmatpush2.msra.mxu0 0.0
    %3548 = vmatprep.subr.mxu0 0.0
    %3549 = vmatpush2.msra.mxu0 0.0
    %3550 = vmatprep.subr.mxu0 0.0
    %3551 = vmatpush2.msra.mxu0 0.0
    %3552 = vmatprep.subr.mxu0 0.0
    %3553 = vmatpush2.msra.mxu0 0.0
    %3554 = vmatprep.subr.mxu0 0.0
    %3555 = vmatpush2.msra.mxu0 0.0
    %3556 = vmatprep.subr.mxu0 0.0
    %3557 = vmatpush2.msra.mxu0 0.0
    %3558 = vmatprep.subr.mxu0 0.0
    %3559 = vmatpush2.msra.mxu0 0.0
    %3560 = vmatprep.subr.mxu0 0.0
    %3561 = vmatpush2.msra.mxu0 0.0
    %3562 = vmatprep.subr.mxu0 0.0
    %3563 = vmatpush2.msra.mxu0 0.0
    %3564 = vmatprep.subr.mxu0 0.0
    %3565 = vmatpush2.msra.mxu0 0.0
    %3566 = vmatprep.subr.mxu0 0.0
    %3567 = vmatpush2.msra.mxu0 0.0
    %3568 = vmatprep.subr.mxu0 0.0
    %3569 = vmatpush2.msra.mxu0 0.0
    %3570 = vmatprep.mubr.f32.mxu0 0.0
    %3571 = vmatmul.mubr.f32.gmra.mxu0 %v3434
    %v3572 = vpop.f32.mrf.mxu0
    %v3573 = vadd.f32 0.0, %v3572
    %v3574 = vpop.f32.mrf.mxu0
    %3575 = vdwg.mxu0
    %3576 = vmatprep.subr.mxu0 0.0
    %3577 = vmatpush1.msra.mxu0 0.0
    %3578 = vmatprep.subr.mxu0 0.0
    %3579 = vmatpush1.msra.mxu0 0.0
    %3580 = vmatprep.subr.mxu0 0.0
    %3581 = vmatpush1.msra.mxu0 0.0
    %3582 = vmatprep.subr.mxu0 0.0
    %3583 = vmatpush1.msra.mxu0 0.0
    %3584 = vmatprep.subr.mxu0 0.0
    %3585 = vmatpush1.msra.mxu0 0.0
    %3586 = vmatprep.subr.mxu0 0.0
    %3587 = vmatpush1.msra.mxu0 0.0
    %3588 = vmatprep.subr.mxu0 0.0
    %3589 = vmatpush1.msra.mxu0 0.0
    %3590 = vmatprep.subr.mxu0 0.0
    %3591 = vmatpush1.msra.mxu0 0.0
    %3592 = vmatprep.subr.mxu0 0.0
    %3593 = vmatpush1.msra.mxu0 0.0
    %3594 = vmatprep.subr.mxu0 0.0
    %3595 = vmatpush1.msra.mxu0 0.0
    %3596 = vmatprep.subr.mxu0 0.0
    %3597 = vmatpush1.msra.mxu0 0.0
    %3598 = vmatprep.subr.mxu0 0.0
    %3599 = vmatpush1.msra.mxu0 0.0
    %3600 = vmatprep.subr.mxu0 0.0
    %3601 = vmatpush1.msra.mxu0 %v574
    %3602 = vmatprep.subr.mxu0 0.0
    %3603 = vmatpush1.msra.mxu0 %v573
    %3604 = vmatprep.subr.mxu0 0.0
    %3605 = vmatpush1.msra.mxu0 %v572
    %3606 = vmatprep.subr.mxu0 0.0
    %3607 = vmatpush1.msra.mxu0 %v571
    %3608 = vmatprep.subr.mxu0 0.0
    %3609 = vmatpush2.msra.mxu0 0.0
    %3610 = vmatprep.subr.mxu0 0.0
    %3611 = vmatpush2.msra.mxu0 0.0
    %3612 = vmatprep.subr.mxu0 0.0
    %3613 = vmatpush2.msra.mxu0 0.0
    %3614 = vmatprep.subr.mxu0 0.0
    %3615 = vmatpush2.msra.mxu0 0.0
    %3616 = vmatprep.subr.mxu0 0.0
    %3617 = vmatpush2.msra.mxu0 0.0
    %3618 = vmatprep.subr.mxu0 0.0
    %3619 = vmatpush2.msra.mxu0 0.0
    %3620 = vmatprep.subr.mxu0 0.0
    %3621 = vmatpush2.msra.mxu0 0.0
    %3622 = vmatprep.subr.mxu0 0.0
    %3623 = vmatpush2.msra.mxu0 0.0
    %3624 = vmatprep.subr.mxu0 0.0
    %3625 = vmatpush2.msra.mxu0 0.0
    %3626 = vmatprep.subr.mxu0 0.0
    %3627 = vmatpush2.msra.mxu0 0.0
    %3628 = vmatprep.subr.mxu0 0.0
    %3629 = vmatpush2.msra.mxu0 0.0
    %3630 = vmatprep.subr.mxu0 0.0
    %3631 = vmatpush2.msra.mxu0 0.0
    %3632 = vmatprep.subr.mxu0 0.0
    %3633 = vmatpush2.msra.mxu0 0.0
    %3634 = vmatprep.subr.mxu0 0.0
    %3635 = vmatpush2.msra.mxu0 0.0
    %3636 = vmatprep.subr.mxu0 0.0
    %3637 = vmatpush2.msra.mxu0 0.0
    %3638 = vmatprep.subr.mxu0 0.0
    %3639 = vmatpush2.msra.mxu0 0.0
    %3640 = vmatprep.mubr.f32.mxu0 0.0
    %3641 = vmatmul.mubr.f32.gmra.mxu0 %v3434
    %v3642 = vpop.f32.mrf.mxu0
    %v3643 = vadd.f32 %v744, %v3642
    %v3644 = vpop.f32.mrf.mxu0
    %3645 = vdwg.mxu0
    %v3647 = vrot.slane %v3503, 2
    %v3648 = vrot.slane %v3503, 3
    %v3649 = vrot.slane %v3503, 4
    %v3650 = vrot.slane %v3503, 5
    %v3651 = vrot.slane %v3503, 6
    %v3652 = vrot.slane %v3503, 7
    %v3653 = vrot.slane %v3503, 1
    %v3662 = vadd.f32 %v287, %v3647
    %v3663 = vadd.f32 %v292, %v3648
    %v3664 = vadd.f32 %v297, %v3649
    %v3665 = vadd.f32 %v302, %v3650
    %v3666 = vadd.f32 %v307, %v3651
    %v3667 = vadd.f32 %v312, %v3652
    %v3668 = vadd.f32 %v317, %v3503
    %v3669 = vadd.f32 %v322, %v3653
    %v3670 = vxor.u32 %v3662, 2147483648
    %v3671 = vxor.u32 %v3663, 2147483648
    %v3672 = vxor.u32 %v3664, 2147483648
    %v3673 = vxor.u32 %v3665, 2147483648
    %v3674 = vxor.u32 %v3666, 2147483648
    %v3675 = vxor.u32 %v3667, 2147483648
    %v3676 = vxor.u32 %v3668, 2147483648
    %v3677 = vxor.u32 %v3669, 2147483648
    %v3678 = vmul.f32 %v3670, 1.442695
    %v3679 = vpow.pop %v3678
    %v3680 = vmul.f32 %v3671, 1.442695
    %v3681 = vpow.pop %v3680
    %v3682 = vmul.f32 %v3672, 1.442695
    %v3683 = vpow.pop %v3682
    %v3684 = vmul.f32 %v3673, 1.442695
    %v3685 = vpow.pop %v3684
    %v3686 = vmul.f32 %v3674, 1.442695
    %v3687 = vpow.pop %v3686
    %v3688 = vmul.f32 %v3675, 1.442695
    %v3689 = vpow.pop %v3688
    %v3690 = vmul.f32 %v3676, 1.442695
    %v3691 = vpow.pop %v3690
    %v3692 = vmul.f32 %v3677, 1.442695
    %v3693 = vpow.pop %v3692
    %v3694 = vadd.f32 %v3679, 1.0
    %v3695 = vadd.f32 %v3681, 1.0
    %v3696 = vadd.f32 %v3683, 1.0
    %v3697 = vadd.f32 %v3685, 1.0
    %v3698 = vadd.f32 %v3687, 1.0
    %v3699 = vadd.f32 %v3689, 1.0
    %v3700 = vadd.f32 %v3691, 1.0
    %v3701 = vadd.f32 %v3693, 1.0
    %v3702 = vrcp.pop %v3694
    %v3703 = vmul.f32 1.0, %v3702
    %v3704 = vrcp.pop %v3695
    %v3705 = vmul.f32 1.0, %v3704
    %v3706 = vrcp.pop %v3696
    %v3707 = vmul.f32 1.0, %v3706
    %v3708 = vrcp.pop %v3697
    %v3709 = vmul.f32 1.0, %v3708
    %v3710 = vrcp.pop %v3698
    %v3711 = vmul.f32 1.0, %v3710
    %v3712 = vrcp.pop %v3699
    %v3713 = vmul.f32 1.0, %v3712
    %v3714 = vrcp.pop %v3700
    %v3715 = vmul.f32 1.0, %v3714
    %v3716 = vrcp.pop %v3701
    %v3717 = vmul.f32 1.0, %v3716
    %v3719 = vrot.slane %v3573, 2
    %v3720 = vrot.slane %v3573, 3
    %v3721 = vrot.slane %v3573, 4
    %v3722 = vrot.slane %v3573, 5
    %v3723 = vrot.slane %v3573, 6
    %v3724 = vrot.slane %v3573, 7
    %v3725 = vrot.slane %v3573, 1
    %v3734 = vadd.f32 %v405, %v3719
    %v3735 = vadd.f32 %v410, %v3720
    %v3736 = vadd.f32 %v415, %v3721
    %v3737 = vadd.f32 %v420, %v3722
    %v3738 = vadd.f32 %v425, %v3723
    %v3739 = vadd.f32 %v430, %v3724
    %v3740 = vadd.f32 %v435, %v3573
    %v3741 = vadd.f32 %v440, %v3725
    %v3742 = vxor.u32 %v3734, 2147483648
    %v3743 = vxor.u32 %v3735, 2147483648
    %v3744 = vxor.u32 %v3736, 2147483648
    %v3745 = vxor.u32 %v3737, 2147483648
    %v3746 = vxor.u32 %v3738, 2147483648
    %v3747 = vxor.u32 %v3739, 2147483648
    %v3748 = vxor.u32 %v3740, 2147483648
    %v3749 = vxor.u32 %v3741, 2147483648
    %v3750 = vmul.f32 %v3742, 1.442695
    %v3751 = vpow.pop %v3750
    %v3752 = vmul.f32 %v3743, 1.442695
    %v3753 = vpow.pop %v3752
    %v3754 = vmul.f32 %v3744, 1.442695
    %v3755 = vpow.pop %v3754
    %v3756 = vmul.f32 %v3745, 1.442695
    %v3757 = vpow.pop %v3756
    %v3758 = vmul.f32 %v3746, 1.442695
    %v3759 = vpow.pop %v3758
    %v3760 = vmul.f32 %v3747, 1.442695
    %v3761 = vpow.pop %v3760
    %v3762 = vmul.f32 %v3748, 1.442695
    %v3763 = vpow.pop %v3762
    %v3764 = vmul.f32 %v3749, 1.442695
    %v3765 = vpow.pop %v3764
    %v3766 = vadd.f32 %v3751, 1.0
    %v3767 = vadd.f32 %v3753, 1.0
    %v3768 = vadd.f32 %v3755, 1.0
    %v3769 = vadd.f32 %v3757, 1.0
    %v3770 = vadd.f32 %v3759, 1.0
    %v3771 = vadd.f32 %v3761, 1.0
    %v3772 = vadd.f32 %v3763, 1.0
    %v3773 = vadd.f32 %v3765, 1.0
    %v3774 = vrcp.pop %v3766
    %v3775 = vmul.f32 1.0, %v3774
    %v3776 = vrcp.pop %v3767
    %v3777 = vmul.f32 1.0, %v3776
    %v3778 = vrcp.pop %v3768
    %v3779 = vmul.f32 1.0, %v3778
    %v3780 = vrcp.pop %v3769
    %v3781 = vmul.f32 1.0, %v3780
    %v3782 = vrcp.pop %v3770
    %v3783 = vmul.f32 1.0, %v3782
    %v3784 = vrcp.pop %v3771
    %v3785 = vmul.f32 1.0, %v3784
    %v3786 = vrcp.pop %v3772
    %v3787 = vmul.f32 1.0, %v3786
    %v3788 = vrcp.pop %v3773
    %v3789 = vmul.f32 1.0, %v3788
    %v3791 = vrot.slane %v3643, 2
    %v3792 = vrot.slane %v3643, 3
    %v3793 = vrot.slane %v3643, 4
    %v3794 = vrot.slane %v3643, 5
    %v3795 = vrot.slane %v3643, 6
    %v3796 = vrot.slane %v3643, 7
    %v3797 = vrot.slane %v3643, 1
    %v3806 = vmul.f32 %v3703, %v3791
    %v3807 = vmul.f32 %v3705, %v3792
    %v3808 = vmul.f32 %v3707, %v3793
    %v3809 = vmul.f32 %v3709, %v3794
    %v3810 = vmul.f32 %v3711, %v3795
    %v3811 = vmul.f32 %v3713, %v3796
    %v3812 = vmul.f32 %v3715, %v3643
    %v3813 = vmul.f32 %v3717, %v3797
    %v3814 = vadd.f32 %v523, %v3806
    %v3815 = vadd.f32 %v528, %v3807
    %v3816 = vadd.f32 %v533, %v3808
    %v3817 = vadd.f32 %v538, %v3809
    %v3818 = vadd.f32 %v543, %v3810
    %v3819 = vadd.f32 %v548, %v3811
    %v3820 = vadd.f32 %v553, %v3812
    %v3821 = vadd.f32 %v558, %v3813
    %v3822 = vtanh.pop %v3814
    %v3823 = vtanh.pop %v3815
    %v3824 = vtanh.pop %v3816
    %v3825 = vtanh.pop %v3817
    %v3826 = vtanh.pop %v3818
    %v3827 = vtanh.pop %v3819
    %v3828 = vtanh.pop %v3820
    %v3829 = vtanh.pop %v3821
    %v3830 = vsub.f32 1.0, %v3775
    %v3831 = vsub.f32 1.0, %v3777
    %v3832 = vsub.f32 1.0, %v3779
    %v3833 = vsub.f32 1.0, %v3781
    %v3834 = vsub.f32 1.0, %v3783
    %v3835 = vsub.f32 1.0, %v3785
    %v3836 = vsub.f32 1.0, %v3787
    %v3837 = vsub.f32 1.0, %v3789
    %v3838 = vmul.f32 %v3830, %v3822
    %v3839 = vmul.f32 %v3831, %v3823
    %v3840 = vmul.f32 %v3832, %v3824
    %v3841 = vmul.f32 %v3833, %v3825
    %v3842 = vmul.f32 %v3834, %v3826
    %v3843 = vmul.f32 %v3835, %v3827
    %v3844 = vmul.f32 %v3836, %v3828
    %v3845 = vmul.f32 %v3837, %v3829
    %v3846 = vrot.slane %v3432, 2
    %v3847 = vrot.slane %v3432, 3
    %v3848 = vrot.slane %v3432, 4
    %v3849 = vrot.slane %v3432, 5
    %v3850 = vrot.slane %v3432, 6
    %v3851 = vrot.slane %v3432, 7
    %v3852 = vrot.slane %v3432, 1
    %v3861 = vmul.f32 %v3775, %v3846
    %v3862 = vmul.f32 %v3777, %v3847
    %v3863 = vmul.f32 %v3779, %v3848
    %v3864 = vmul.f32 %v3781, %v3849
    %v3865 = vmul.f32 %v3783, %v3850
    %v3866 = vmul.f32 %v3785, %v3851
    %v3867 = vmul.f32 %v3787, %v3432
    %v3868 = vmul.f32 %v3789, %v3852
    %v3869 = vadd.f32 %v3838, %v3861
    %v3870 = vadd.f32 %v3839, %v3862
    %v3871 = vadd.f32 %v3840, %v3863
    %v3872 = vadd.f32 %v3841, %v3864
    %v3873 = vadd.f32 %v3842, %v3865
    %v3874 = vadd.f32 %v3843, %v3866
    %v3875 = vadd.f32 %v3844, %v3867
    %v3876 = vadd.f32 %v3845, %v3868
    %vm3877 = vcmp.gt.s32.totalorder %v175, 6
    %v3878 = vsel %vm3877, 1, 0
    %3879 = vset.pattern.permute.xlu0 0
    %3880 = vperm.xlu0 %3879, %v3878
    %v3881 = vpop.permute.xlu0 %3880
    %vm3882 = vcmp.eq.s32.totalorder %v3881, 1
    %v3891 = vrot.slane %v3869, 6
    %v3892 = vrot.slane %v3870, 5
    %v3893 = vsel %vm584, %v3892, %v3891
    %v3894 = vrot.slane %v3871, 4
    %v3895 = vsel %vm586, %v3894, %v3893
    %v3896 = vrot.slane %v3872, 3
    %v3897 = vsel %vm588, %v3896, %v3895
    %v3898 = vrot.slane %v3873, 2
    %v3899 = vsel %vm590, %v3898, %v3897
    %v3900 = vrot.slane %v3874, 1
    %v3901 = vsel %vm592, %v3900, %v3899
    %v3902 = vsel %vm594, %v3875, %v3901
    %v3903 = vrot.slane %v3876, 7
    %v3904 = vsel %vm596, %v3903, %v3902
    %v3906 = vsel %vm3882, %v3904, %v3432
    %v3908 = vsel %vm195, %v3906, 0
    %3910 = vmatprep.subr.mxu0 0.0
    %3911 = vmatpush1.msra.mxu0 0.0
    %3912 = vmatprep.subr.mxu0 0.0
    %3913 = vmatpush1.msra.mxu0 0.0
    %3914 = vmatprep.subr.mxu0 0.0
    %3915 = vmatpush1.msra.mxu0 0.0
    %3916 = vmatprep.subr.mxu0 0.0
    %3917 = vmatpush1.msra.mxu0 0.0
    %3918 = vmatprep.subr.mxu0 0.0
    %3919 = vmatpush1.msra.mxu0 0.0
    %3920 = vmatprep.subr.mxu0 0.0
    %3921 = vmatpush1.msra.mxu0 0.0
    %3922 = vmatprep.subr.mxu0 0.0
    %3923 = vmatpush1.msra.mxu0 0.0
    %3924 = vmatprep.subr.mxu0 0.0
    %3925 = vmatpush1.msra.mxu0 0.0
    %3926 = vmatprep.subr.mxu0 0.0
    %3927 = vmatpush1.msra.mxu0 0.0
    %3928 = vmatprep.subr.mxu0 0.0
    %3929 = vmatpush1.msra.mxu0 0.0
    %3930 = vmatprep.subr.mxu0 0.0
    %3931 = vmatpush1.msra.mxu0 0.0
    %3932 = vmatprep.subr.mxu0 0.0
    %3933 = vmatpush1.msra.mxu0 0.0
    %3934 = vmatprep.subr.mxu0 0.0
    %3935 = vmatpush1.msra.mxu0 %v564
    %3936 = vmatprep.subr.mxu0 0.0
    %3937 = vmatpush1.msra.mxu0 %v563
    %3938 = vmatprep.subr.mxu0 0.0
    %3939 = vmatpush1.msra.mxu0 %v562
    %3940 = vmatprep.subr.mxu0 0.0
    %3941 = vmatpush1.msra.mxu0 %v561
    %3942 = vmatprep.subr.mxu0 0.0
    %3943 = vmatpush2.msra.mxu0 0.0
    %3944 = vmatprep.subr.mxu0 0.0
    %3945 = vmatpush2.msra.mxu0 0.0
    %3946 = vmatprep.subr.mxu0 0.0
    %3947 = vmatpush2.msra.mxu0 0.0
    %3948 = vmatprep.subr.mxu0 0.0
    %3949 = vmatpush2.msra.mxu0 0.0
    %3950 = vmatprep.subr.mxu0 0.0
    %3951 = vmatpush2.msra.mxu0 0.0
    %3952 = vmatprep.subr.mxu0 0.0
    %3953 = vmatpush2.msra.mxu0 0.0
    %3954 = vmatprep.subr.mxu0 0.0
    %3955 = vmatpush2.msra.mxu0 0.0
    %3956 = vmatprep.subr.mxu0 0.0
    %3957 = vmatpush2.msra.mxu0 0.0
    %3958 = vmatprep.subr.mxu0 0.0
    %3959 = vmatpush2.msra.mxu0 0.0
    %3960 = vmatprep.subr.mxu0 0.0
    %3961 = vmatpush2.msra.mxu0 0.0
    %3962 = vmatprep.subr.mxu0 0.0
    %3963 = vmatpush2.msra.mxu0 0.0
    %3964 = vmatprep.subr.mxu0 0.0
    %3965 = vmatpush2.msra.mxu0 0.0
    %3966 = vmatprep.subr.mxu0 0.0
    %3967 = vmatpush2.msra.mxu0 0.0
    %3968 = vmatprep.subr.mxu0 0.0
    %3969 = vmatpush2.msra.mxu0 0.0
    %3970 = vmatprep.subr.mxu0 0.0
    %3971 = vmatpush2.msra.mxu0 0.0
    %3972 = vmatprep.subr.mxu0 0.0
    %3973 = vmatpush2.msra.mxu0 0.0
    %3974 = vmatprep.mubr.f32.mxu0 0.0
    %3975 = vmatmul.mubr.f32.gmra.mxu0 %v3908
    %v3976 = vpop.f32.mrf.mxu0
    %v3977 = vadd.f32 0.0, %v3976
    %v3978 = vpop.f32.mrf.mxu0
    %3979 = vdwg.mxu0
    %3980 = vmatprep.subr.mxu0 0.0
    %3981 = vmatpush1.msra.mxu0 0.0
    %3982 = vmatprep.subr.mxu0 0.0
    %3983 = vmatpush1.msra.mxu0 0.0
    %3984 = vmatprep.subr.mxu0 0.0
    %3985 = vmatpush1.msra.mxu0 0.0
    %3986 = vmatprep.subr.mxu0 0.0
    %3987 = vmatpush1.msra.mxu0 0.0
    %3988 = vmatprep.subr.mxu0 0.0
    %3989 = vmatpush1.msra.mxu0 0.0
    %3990 = vmatprep.subr.mxu0 0.0
    %3991 = vmatpush1.msra.mxu0 0.0
    %3992 = vmatprep.subr.mxu0 0.0
    %3993 = vmatpush1.msra.mxu0 0.0
    %3994 = vmatprep.subr.mxu0 0.0
    %3995 = vmatpush1.msra.mxu0 0.0
    %3996 = vmatprep.subr.mxu0 0.0
    %3997 = vmatpush1.msra.mxu0 0.0
    %3998 = vmatprep.subr.mxu0 0.0
    %3999 = vmatpush1.msra.mxu0 0.0
    %4000 = vmatprep.subr.mxu0 0.0
    %4001 = vmatpush1.msra.mxu0 0.0
    %4002 = vmatprep.subr.mxu0 0.0
    %4003 = vmatpush1.msra.mxu0 0.0
    %4004 = vmatprep.subr.mxu0 0.0
    %4005 = vmatpush1.msra.mxu0 %v569
    %4006 = vmatprep.subr.mxu0 0.0
    %4007 = vmatpush1.msra.mxu0 %v568
    %4008 = vmatprep.subr.mxu0 0.0
    %4009 = vmatpush1.msra.mxu0 %v567
    %4010 = vmatprep.subr.mxu0 0.0
    %4011 = vmatpush1.msra.mxu0 %v566
    %4012 = vmatprep.subr.mxu0 0.0
    %4013 = vmatpush2.msra.mxu0 0.0
    %4014 = vmatprep.subr.mxu0 0.0
    %4015 = vmatpush2.msra.mxu0 0.0
    %4016 = vmatprep.subr.mxu0 0.0
    %4017 = vmatpush2.msra.mxu0 0.0
    %4018 = vmatprep.subr.mxu0 0.0
    %4019 = vmatpush2.msra.mxu0 0.0
    %4020 = vmatprep.subr.mxu0 0.0
    %4021 = vmatpush2.msra.mxu0 0.0
    %4022 = vmatprep.subr.mxu0 0.0
    %4023 = vmatpush2.msra.mxu0 0.0
    %4024 = vmatprep.subr.mxu0 0.0
    %4025 = vmatpush2.msra.mxu0 0.0
    %4026 = vmatprep.subr.mxu0 0.0
    %4027 = vmatpush2.msra.mxu0 0.0
    %4028 = vmatprep.subr.mxu0 0.0
    %4029 = vmatpush2.msra.mxu0 0.0
    %4030 = vmatprep.subr.mxu0 0.0
    %4031 = vmatpush2.msra.mxu0 0.0
    %4032 = vmatprep.subr.mxu0 0.0
    %4033 = vmatpush2.msra.mxu0 0.0
    %4034 = vmatprep.subr.mxu0 0.0
    %4035 = vmatpush2.msra.mxu0 0.0
    %4036 = vmatprep.subr.mxu0 0.0
    %4037 = vmatpush2.msra.mxu0 0.0
    %4038 = vmatprep.subr.mxu0 0.0
    %4039 = vmatpush2.msra.mxu0 0.0
    %4040 = vmatprep.subr.mxu0 0.0
    %4041 = vmatpush2.msra.mxu0 0.0
    %4042 = vmatprep.subr.mxu0 0.0
    %4043 = vmatpush2.msra.mxu0 0.0
    %4044 = vmatprep.mubr.f32.mxu0 0.0
    %4045 = vmatmul.mubr.f32.gmra.mxu0 %v3908
    %v4046 = vpop.f32.mrf.mxu0
    %v4047 = vadd.f32 0.0, %v4046
    %v4048 = vpop.f32.mrf.mxu0
    %4049 = vdwg.mxu0
    %4050 = vmatprep.subr.mxu0 0.0
    %4051 = vmatpush1.msra.mxu0 0.0
    %4052 = vmatprep.subr.mxu0 0.0
    %4053 = vmatpush1.msra.mxu0 0.0
    %4054 = vmatprep.subr.mxu0 0.0
    %4055 = vmatpush1.msra.mxu0 0.0
    %4056 = vmatprep.subr.mxu0 0.0
    %4057 = vmatpush1.msra.mxu0 0.0
    %4058 = vmatprep.subr.mxu0 0.0
    %4059 = vmatpush1.msra.mxu0 0.0
    %4060 = vmatprep.subr.mxu0 0.0
    %4061 = vmatpush1.msra.mxu0 0.0
    %4062 = vmatprep.subr.mxu0 0.0
    %4063 = vmatpush1.msra.mxu0 0.0
    %4064 = vmatprep.subr.mxu0 0.0
    %4065 = vmatpush1.msra.mxu0 0.0
    %4066 = vmatprep.subr.mxu0 0.0
    %4067 = vmatpush1.msra.mxu0 0.0
    %4068 = vmatprep.subr.mxu0 0.0
    %4069 = vmatpush1.msra.mxu0 0.0
    %4070 = vmatprep.subr.mxu0 0.0
    %4071 = vmatpush1.msra.mxu0 0.0
    %4072 = vmatprep.subr.mxu0 0.0
    %4073 = vmatpush1.msra.mxu0 0.0
    %4074 = vmatprep.subr.mxu0 0.0
    %4075 = vmatpush1.msra.mxu0 %v574
    %4076 = vmatprep.subr.mxu0 0.0
    %4077 = vmatpush1.msra.mxu0 %v573
    %4078 = vmatprep.subr.mxu0 0.0
    %4079 = vmatpush1.msra.mxu0 %v572
    %4080 = vmatprep.subr.mxu0 0.0
    %4081 = vmatpush1.msra.mxu0 %v571
    %4082 = vmatprep.subr.mxu0 0.0
    %4083 = vmatpush2.msra.mxu0 0.0
    %4084 = vmatprep.subr.mxu0 0.0
    %4085 = vmatpush2.msra.mxu0 0.0
    %4086 = vmatprep.subr.mxu0 0.0
    %4087 = vmatpush2.msra.mxu0 0.0
    %4088 = vmatprep.subr.mxu0 0.0
    %4089 = vmatpush2.msra.mxu0 0.0
    %4090 = vmatprep.subr.mxu0 0.0
    %4091 = vmatpush2.msra.mxu0 0.0
    %4092 = vmatprep.subr.mxu0 0.0
    %4093 = vmatpush2.msra.mxu0 0.0
    %4094 = vmatprep.subr.mxu0 0.0
    %4095 = vmatpush2.msra.mxu0 0.0
    %4096 = vmatprep.subr.mxu0 0.0
    %4097 = vmatpush2.msra.mxu0 0.0
    %4098 = vmatprep.subr.mxu0 0.0
    %4099 = vmatpush2.msra.mxu0 0.0
    %4100 = vmatprep.subr.mxu0 0.0
    %4101 = vmatpush2.msra.mxu0 0.0
    %4102 = vmatprep.subr.mxu0 0.0
    %4103 = vmatpush2.msra.mxu0 0.0
    %4104 = vmatprep.subr.mxu0 0.0
    %4105 = vmatpush2.msra.mxu0 0.0
    %4106 = vmatprep.subr.mxu0 0.0
    %4107 = vmatpush2.msra.mxu0 0.0
    %4108 = vmatprep.subr.mxu0 0.0
    %4109 = vmatpush2.msra.mxu0 0.0
    %4110 = vmatprep.subr.mxu0 0.0
    %4111 = vmatpush2.msra.mxu0 0.0
    %4112 = vmatprep.subr.mxu0 0.0
    %4113 = vmatpush2.msra.mxu0 0.0
    %4114 = vmatprep.mubr.f32.mxu0 0.0
    %4115 = vmatmul.mubr.f32.gmra.mxu0 %v3908
    %v4116 = vpop.f32.mrf.mxu0
    %v4117 = vadd.f32 %v744, %v4116
    %v4118 = vpop.f32.mrf.mxu0
    %4119 = vdwg.mxu0
    %v4121 = vrot.slane %v3977, 1
    %v4122 = vrot.slane %v3977, 2
    %v4123 = vrot.slane %v3977, 3
    %v4124 = vrot.slane %v3977, 4
    %v4125 = vrot.slane %v3977, 5
    %v4126 = vrot.slane %v3977, 6
    %v4127 = vrot.slane %v3977, 7
    %v4136 = vadd.f32 %v287, %v4121
    %v4137 = vadd.f32 %v292, %v4122
    %v4138 = vadd.f32 %v297, %v4123
    %v4139 = vadd.f32 %v302, %v4124
    %v4140 = vadd.f32 %v307, %v4125
    %v4141 = vadd.f32 %v312, %v4126
    %v4142 = vadd.f32 %v317, %v4127
    %v4143 = vadd.f32 %v322, %v3977
    %v4144 = vxor.u32 %v4136, 2147483648
    %v4145 = vxor.u32 %v4137, 2147483648
    %v4146 = vxor.u32 %v4138, 2147483648
    %v4147 = vxor.u32 %v4139, 2147483648
    %v4148 = vxor.u32 %v4140, 2147483648
    %v4149 = vxor.u32 %v4141, 2147483648
    %v4150 = vxor.u32 %v4142, 2147483648
    %v4151 = vxor.u32 %v4143, 2147483648
    %v4152 = vmul.f32 %v4144, 1.442695
    %v4153 = vpow.pop %v4152
    %v4154 = vmul.f32 %v4145, 1.442695
    %v4155 = vpow.pop %v4154
    %v4156 = vmul.f32 %v4146, 1.442695
    %v4157 = vpow.pop %v4156
    %v4158 = vmul.f32 %v4147, 1.442695
    %v4159 = vpow.pop %v4158
    %v4160 = vmul.f32 %v4148, 1.442695
    %v4161 = vpow.pop %v4160
    %v4162 = vmul.f32 %v4149, 1.442695
    %v4163 = vpow.pop %v4162
    %v4164 = vmul.f32 %v4150, 1.442695
    %v4165 = vpow.pop %v4164
    %v4166 = vmul.f32 %v4151, 1.442695
    %v4167 = vpow.pop %v4166
    %v4168 = vadd.f32 %v4153, 1.0
    %v4169 = vadd.f32 %v4155, 1.0
    %v4170 = vadd.f32 %v4157, 1.0
    %v4171 = vadd.f32 %v4159, 1.0
    %v4172 = vadd.f32 %v4161, 1.0
    %v4173 = vadd.f32 %v4163, 1.0
    %v4174 = vadd.f32 %v4165, 1.0
    %v4175 = vadd.f32 %v4167, 1.0
    %v4176 = vrcp.pop %v4168
    %v4177 = vmul.f32 1.0, %v4176
    %v4178 = vrcp.pop %v4169
    %v4179 = vmul.f32 1.0, %v4178
    %v4180 = vrcp.pop %v4170
    %v4181 = vmul.f32 1.0, %v4180
    %v4182 = vrcp.pop %v4171
    %v4183 = vmul.f32 1.0, %v4182
    %v4184 = vrcp.pop %v4172
    %v4185 = vmul.f32 1.0, %v4184
    %v4186 = vrcp.pop %v4173
    %v4187 = vmul.f32 1.0, %v4186
    %v4188 = vrcp.pop %v4174
    %v4189 = vmul.f32 1.0, %v4188
    %v4190 = vrcp.pop %v4175
    %v4191 = vmul.f32 1.0, %v4190
    %v4193 = vrot.slane %v4047, 1
    %v4194 = vrot.slane %v4047, 2
    %v4195 = vrot.slane %v4047, 3
    %v4196 = vrot.slane %v4047, 4
    %v4197 = vrot.slane %v4047, 5
    %v4198 = vrot.slane %v4047, 6
    %v4199 = vrot.slane %v4047, 7
    %v4208 = vadd.f32 %v405, %v4193
    %v4209 = vadd.f32 %v410, %v4194
    %v4210 = vadd.f32 %v415, %v4195
    %v4211 = vadd.f32 %v420, %v4196
    %v4212 = vadd.f32 %v425, %v4197
    %v4213 = vadd.f32 %v430, %v4198
    %v4214 = vadd.f32 %v435, %v4199
    %v4215 = vadd.f32 %v440, %v4047
    %v4216 = vxor.u32 %v4208, 2147483648
    %v4217 = vxor.u32 %v4209, 2147483648
    %v4218 = vxor.u32 %v4210, 2147483648
    %v4219 = vxor.u32 %v4211, 2147483648
    %v4220 = vxor.u32 %v4212, 2147483648
    %v4221 = vxor.u32 %v4213, 2147483648
    %v4222 = vxor.u32 %v4214, 2147483648
    %v4223 = vxor.u32 %v4215, 2147483648
    %v4224 = vmul.f32 %v4216, 1.442695
    %v4225 = vpow.pop %v4224
    %v4226 = vmul.f32 %v4217, 1.442695
    %v4227 = vpow.pop %v4226
    %v4228 = vmul.f32 %v4218, 1.442695
    %v4229 = vpow.pop %v4228
    %v4230 = vmul.f32 %v4219, 1.442695
    %v4231 = vpow.pop %v4230
    %v4232 = vmul.f32 %v4220, 1.442695
    %v4233 = vpow.pop %v4232
    %v4234 = vmul.f32 %v4221, 1.442695
    %v4235 = vpow.pop %v4234
    %v4236 = vmul.f32 %v4222, 1.442695
    %v4237 = vpow.pop %v4236
    %v4238 = vmul.f32 %v4223, 1.442695
    %v4239 = vpow.pop %v4238
    %v4240 = vadd.f32 %v4225, 1.0
    %v4241 = vadd.f32 %v4227, 1.0
    %v4242 = vadd.f32 %v4229, 1.0
    %v4243 = vadd.f32 %v4231, 1.0
    %v4244 = vadd.f32 %v4233, 1.0
    %v4245 = vadd.f32 %v4235, 1.0
    %v4246 = vadd.f32 %v4237, 1.0
    %v4247 = vadd.f32 %v4239, 1.0
    %v4248 = vrcp.pop %v4240
    %v4249 = vmul.f32 1.0, %v4248
    %v4250 = vrcp.pop %v4241
    %v4251 = vmul.f32 1.0, %v4250
    %v4252 = vrcp.pop %v4242
    %v4253 = vmul.f32 1.0, %v4252
    %v4254 = vrcp.pop %v4243
    %v4255 = vmul.f32 1.0, %v4254
    %v4256 = vrcp.pop %v4244
    %v4257 = vmul.f32 1.0, %v4256
    %v4258 = vrcp.pop %v4245
    %v4259 = vmul.f32 1.0, %v4258
    %v4260 = vrcp.pop %v4246
    %v4261 = vmul.f32 1.0, %v4260
    %v4262 = vrcp.pop %v4247
    %v4263 = vmul.f32 1.0, %v4262
    %v4265 = vrot.slane %v4117, 1
    %v4266 = vrot.slane %v4117, 2
    %v4267 = vrot.slane %v4117, 3
    %v4268 = vrot.slane %v4117, 4
    %v4269 = vrot.slane %v4117, 5
    %v4270 = vrot.slane %v4117, 6
    %v4271 = vrot.slane %v4117, 7
    %v4280 = vmul.f32 %v4177, %v4265
    %v4281 = vmul.f32 %v4179, %v4266
    %v4282 = vmul.f32 %v4181, %v4267
    %v4283 = vmul.f32 %v4183, %v4268
    %v4284 = vmul.f32 %v4185, %v4269
    %v4285 = vmul.f32 %v4187, %v4270
    %v4286 = vmul.f32 %v4189, %v4271
    %v4287 = vmul.f32 %v4191, %v4117
    %v4288 = vadd.f32 %v523, %v4280
    %v4289 = vadd.f32 %v528, %v4281
    %v4290 = vadd.f32 %v533, %v4282
    %v4291 = vadd.f32 %v538, %v4283
    %v4292 = vadd.f32 %v543, %v4284
    %v4293 = vadd.f32 %v548, %v4285
    %v4294 = vadd.f32 %v553, %v4286
    %v4295 = vadd.f32 %v558, %v4287
    %v4296 = vtanh.pop %v4288
    %v4297 = vtanh.pop %v4289
    %v4298 = vtanh.pop %v4290
    %v4299 = vtanh.pop %v4291
    %v4300 = vtanh.pop %v4292
    %v4301 = vtanh.pop %v4293
    %v4302 = vtanh.pop %v4294
    %v4303 = vtanh.pop %v4295
    %v4304 = vsub.f32 1.0, %v4249
    %v4305 = vsub.f32 1.0, %v4251
    %v4306 = vsub.f32 1.0, %v4253
    %v4307 = vsub.f32 1.0, %v4255
    %v4308 = vsub.f32 1.0, %v4257
    %v4309 = vsub.f32 1.0, %v4259
    %v4310 = vsub.f32 1.0, %v4261
    %v4311 = vsub.f32 1.0, %v4263
    %v4312 = vmul.f32 %v4304, %v4296
    %v4313 = vmul.f32 %v4305, %v4297
    %v4314 = vmul.f32 %v4306, %v4298
    %v4315 = vmul.f32 %v4307, %v4299
    %v4316 = vmul.f32 %v4308, %v4300
    %v4317 = vmul.f32 %v4309, %v4301
    %v4318 = vmul.f32 %v4310, %v4302
    %v4319 = vmul.f32 %v4311, %v4303
    %v4320 = vrot.slane %v3906, 1
    %v4321 = vrot.slane %v3906, 2
    %v4322 = vrot.slane %v3906, 3
    %v4323 = vrot.slane %v3906, 4
    %v4324 = vrot.slane %v3906, 5
    %v4325 = vrot.slane %v3906, 6
    %v4326 = vrot.slane %v3906, 7
    %v4335 = vmul.f32 %v4249, %v4320
    %v4336 = vmul.f32 %v4251, %v4321
    %v4337 = vmul.f32 %v4253, %v4322
    %v4338 = vmul.f32 %v4255, %v4323
    %v4339 = vmul.f32 %v4257, %v4324
    %v4340 = vmul.f32 %v4259, %v4325
    %v4341 = vmul.f32 %v4261, %v4326
    %v4342 = vmul.f32 %v4263, %v3906
    %v4343 = vadd.f32 %v4312, %v4335
    %v4344 = vadd.f32 %v4313, %v4336
    %v4345 = vadd.f32 %v4314, %v4337
    %v4346 = vadd.f32 %v4315, %v4338
    %v4347 = vadd.f32 %v4316, %v4339
    %v4348 = vadd.f32 %v4317, %v4340
    %v4349 = vadd.f32 %v4318, %v4341
    %v4350 = vadd.f32 %v4319, %v4342
    %vm4351 = vcmp.gt.s32.totalorder %v175, 7
    %v4352 = vsel %vm4351, 1, 0
    %4353 = vset.pattern.permute.xlu0 0
    %4354 = vperm.xlu0 %4353, %v4352
    %v4355 = vpop.permute.xlu0 %4354
    %vm4356 = vcmp.eq.s32.totalorder %v4355, 1
    %v4365 = vrot.slane %v4343, 7
    %v4366 = vrot.slane %v4344, 6
    %v4367 = vsel %vm584, %v4366, %v4365
    %v4368 = vrot.slane %v4345, 5
    %v4369 = vsel %vm586, %v4368, %v4367
    %v4370 = vrot.slane %v4346, 4
    %v4371 = vsel %vm588, %v4370, %v4369
    %v4372 = vrot.slane %v4347, 3
    %v4373 = vsel %vm590, %v4372, %v4371
    %v4374 = vrot.slane %v4348, 2
    %v4375 = vsel %vm592, %v4374, %v4373
    %v4376 = vrot.slane %v4349, 1
    %v4377 = vsel %vm594, %v4376, %v4375
    %v4378 = vsel %vm596, %v4350, %v4377
    %v4380 = vsel %vm4356, %v4378, %v3906
    %v4381 = vld [vmem:[#allocation10] sm:$0xff]
    %v4382 = vld [vmem:[#allocation10 + $0x8] sm:$0xff]
    %v4383 = vld [vmem:[#allocation10 + $0x10] sm:$0xff]
    %v4384 = vld [vmem:[#allocation10 + $0x18] sm:$0xff]
    %v4385 = vld [vmem:[%s8] sm:$0x1]
    %v4387 = vlaneseq
    %v4388 = vshrl.u32 %v4387, 7
    %v4389 = vsub.s32 0, %v4388
    %v4390 = vrot.slane %v4385, %v4389
    %v4393 = vsel %vm195, %v4380, 0
    %4395 = vmatprep.subr.mxu0 0.0
    %4396 = vmatpush1.msra.mxu0 0.0
    %4397 = vmatprep.subr.mxu0 0.0
    %4398 = vmatpush1.msra.mxu0 0.0
    %4399 = vmatprep.subr.mxu0 0.0
    %4400 = vmatpush1.msra.mxu0 0.0
    %4401 = vmatprep.subr.mxu0 0.0
    %4402 = vmatpush1.msra.mxu0 0.0
    %4403 = vmatprep.subr.mxu0 0.0
    %4404 = vmatpush1.msra.mxu0 0.0
    %4405 = vmatprep.subr.mxu0 0.0
    %4406 = vmatpush1.msra.mxu0 0.0
    %4407 = vmatprep.subr.mxu0 0.0
    %4408 = vmatpush1.msra.mxu0 0.0
    %4409 = vmatprep.subr.mxu0 0.0
    %4410 = vmatpush1.msra.mxu0 0.0
    %4411 = vmatprep.subr.mxu0 0.0
    %4412 = vmatpush1.msra.mxu0 0.0
    %4413 = vmatprep.subr.mxu0 0.0
    %4414 = vmatpush1.msra.mxu0 0.0
    %4415 = vmatprep.subr.mxu0 0.0
    %4416 = vmatpush1.msra.mxu0 0.0
    %4417 = vmatprep.subr.mxu0 0.0
    %4418 = vmatpush1.msra.mxu0 0.0
    %4419 = vmatprep.subr.mxu0 0.0
    %4420 = vmatpush1.msra.mxu0 %v4384
    %4421 = vmatprep.subr.mxu0 0.0
    %4422 = vmatpush1.msra.mxu0 %v4383
    %4423 = vmatprep.subr.mxu0 0.0
    %4424 = vmatpush1.msra.mxu0 %v4382
    %4425 = vmatprep.subr.mxu0 0.0
    %4426 = vmatpush1.msra.mxu0 %v4381
    %4427 = vmatprep.subr.mxu0 0.0
    %4428 = vmatpush2.msra.mxu0 0.0
    %4429 = vmatprep.subr.mxu0 0.0
    %4430 = vmatpush2.msra.mxu0 0.0
    %4431 = vmatprep.subr.mxu0 0.0
    %4432 = vmatpush2.msra.mxu0 0.0
    %4433 = vmatprep.subr.mxu0 0.0
    %4434 = vmatpush2.msra.mxu0 0.0
    %4435 = vmatprep.subr.mxu0 0.0
    %4436 = vmatpush2.msra.mxu0 0.0
    %4437 = vmatprep.subr.mxu0 0.0
    %4438 = vmatpush2.msra.mxu0 0.0
    %4439 = vmatprep.subr.mxu0 0.0
    %4440 = vmatpush2.msra.mxu0 0.0
    %4441 = vmatprep.subr.mxu0 0.0
    %4442 = vmatpush2.msra.mxu0 0.0
    %4443 = vmatprep.subr.mxu0 0.0
    %4444 = vmatpush2.msra.mxu0 0.0
    %4445 = vmatprep.subr.mxu0 0.0
    %4446 = vmatpush2.msra.mxu0 0.0
    %4447 = vmatprep.subr.mxu0 0.0
    %4448 = vmatpush2.msra.mxu0 0.0
    %4449 = vmatprep.subr.mxu0 0.0
    %4450 = vmatpush2.msra.mxu0 0.0
    %4451 = vmatprep.subr.mxu0 0.0
    %4452 = vmatpush2.msra.mxu0 0.0
    %4453 = vmatprep.subr.mxu0 0.0
    %4454 = vmatpush2.msra.mxu0 0.0
    %4455 = vmatprep.subr.mxu0 0.0
    %4456 = vmatpush2.msra.mxu0 0.0
    %4457 = vmatprep.subr.mxu0 0.0
    %4458 = vmatpush2.msra.mxu0 0.0
    %4459 = vmatprep.mubr.f32.mxu0 0.0
    %4460 = vmatmul.mubr.f32.gmra.mxu0 %v4393
    %v4461 = vpop.f32.mrf.mxu0
    %v4462 = vadd.f32 %v4390, %v4461
    %v4463 = vpop.f32.mrf.mxu0
    %4464 = vdwg.mxu0
    %4465 = vmax.xlane.f32.xlu0 %v4462
    %v4466 = vpop.xlane.xlu0 %4465
    %v4467 = vsub.f32 %v4462, %v4466
    %v4468 = vmul.f32 %v4467, 1.442695
    %v4469 = vpow.pop %v4468
    %4470 = vadd.xlane.f32.xlu0 %v4469
    %v4471 = vpop.xlane.xlu0 %4470
    %v4472 = vrcp.pop %v4471
    %v4473 = vmul.f32 %v4469, %v4472
    %4474 = vst [vmem:[#allocation11] sm:$0xff] %v4473
    // Predicated region
    $region58: #{tpu_custom_call.1} parent=1 // pred_check
      _
    $region59: #{tpu_custom_call.1} parent=1 // pred_check_branch
      %4476 = sbr.rel (0) target = $region61
    $region60: #{tpu_custom_call.1} parent=1 // pred_region
      %s4478 = ssub.s32 128, 128
      %4479 = vsyncadd [#allocation4], %s4478
      %s4481 = sshll.u32 [#allocation11], 4
      %s4482 = int_to_ptr.vmem [resolvable:$true] %s4481
      %4484 = dma.vmem_to_hbm [thread:$0]  %s4482, 128, %s9, [#allocation4]
    $region61: #{tpu_custom_call.1} parent=1 // pred_fallthru
      _
    // Predicated region
    $region62: #{tpu_custom_call.1} parent=1 // pred_check
      _
    $region63: #{tpu_custom_call.1} parent=1 // pred_check_branch
      %4486 = sbr.rel (0) target = $region65
    $region64: #{tpu_custom_call.1} parent=1 // pred_region
      %4487 = dma.done [#allocation4], 128
    $region65: #{tpu_custom_call.1} parent=1 // pred_fallthru
      _
    %4488 = vsyncpa [#allocation3], 1
    %4489 = vsyncpa [#allocation6], 1
    %4490 = vsyncpa [#allocation9], 1
    %4491 = vsyncpa [#allocation4], 1

</llo_original>
